<compile_context>
chip_gen: v6e
topology: v6e:2x2x1
jax: 0.10.0
libtpu: 0.0.40
codegen_flags: <defaults>
</compile_context>

<pallas_src>
import numpy as np
import jax
import jax.numpy as jnp
from jax.experimental import pallas as pl
from jax.experimental.pallas import tpu as pltpu

KERNEL_SIZE = 11
SIGMA = 1.5
K1, K2 = 0.01, 0.03
DATA_RANGE = 1.0
C1 = (K1 * DATA_RANGE) ** 2
C2 = (K2 * DATA_RANGE) ** 2
LAMBDA_SSIM = 0.5
LAMBDA_MSE = 0.5

MAX_TB = 16                 # bound on the per-tile static image unroll
VMEM_HEADROOM = 16 << 20    # explicit headroom for compiler scratch


def _gaussian_weights():
    # identical to torchmetrics _gaussian(): dist in [-(k-1)/2 .. (k-1)/2]
    dist = np.arange((1 - KERNEL_SIZE) / 2.0, (1 + KERNEL_SIZE) / 2.0, 1.0)
    g = np.exp(-0.5 * (dist / SIGMA) ** 2)
    return (g / g.sum()).astype(np.float32)


_GAUSS_W = _gaussian_weights()  # (11,)


def _band_matrix(n_in, n_out):
    """(n_in, n_out) band matrix: (x @ M)[..., q] = sum_k gauss[k]*x[..., q+k]."""
    m = np.zeros((n_in, n_out), np.float32)
    for q in range(n_out):
        m[q:q + KERNEL_SIZE, q] = _GAUSS_W
    return m


def _vmem_capacity_bytes():
    """Physical VMEM per core; 128 MiB fallback unless device looks like v7x."""
    try:
        info = pltpu.get_tpu_info()
        for attr in ("vmem_capacity_bytes", "vmem_size_bytes", "vmem_bytes"):
            v = getattr(info, attr, None)
            if v:
                return int(v)
    except Exception:
        pass
    try:
        kind = jax.devices()[0].device_kind.lower()
        if "v7" in kind:
            return 64 << 20
    except Exception:
        pass
    return 128 << 20


def _choose_tb(b, cap):
    """Prefer an exact divisor of b near cap; otherwise use cap + masked tail."""
    cap = max(1, min(b, cap))
    for d in range(cap, 0, -1):
        if b % d == 0:
            if 2 * d >= cap:          # divisor close enough to cap: no waste
                return d
            break
    return cap                        # remainder tile handled by in-kernel mask


def _make_kernel(tb, h, w, out_h, out_w, total_b, use_approx_recip):
    needs_mask = (total_b % tb) != 0

    def kernel(x_ref, y_ref, gh_ref, gv_ref, o_ref):
        b = pl.program_id(0)

        x = x_ref[...].astype(jnp.float32)   # (tb, h, w)
        y = y_ref[...].astype(jnp.float32)

        if needs_mask:
            # Zero padded (out-of-range) images so garbage/NaN data never
            # reaches the matmuls; their SSIM contribution is excluded below
            # and their MSE contribution is exactly zero.
            valid = total_b - b * tb
            img = jax.lax.broadcasted_iota(jnp.int32, (tb, 1, 1), 0)
            keep = img < valid
            x = jnp.where(keep, x, 0.0)
            y = jnp.where(keep, y, 0.0)

        diff = x - y
        mse_sum = jnp.sum(diff * diff)

        # Products computed exactly once per tile (feed the blurred 2nd moments).
        xx = x * x
        yy = y * y
        xy = x * y

        gh = gh_ref[...]                      # (w, out_w)  horizontal band matrix
        gv = gv_ref[...]                      # (out_h, h)  vertical   band matrix

        def hblur(t):
            # One large-M 2D MXU matmul per statistic (no broadcast band matrix,
            # no tiny batched matmuls).
            r = jnp.dot(t.reshape(tb * h, w), gh,
                        preferred_element_type=jnp.float32)
            return r.reshape(tb, h, out_w)

        hx = hblur(x)
        hy = hblur(y)
        hxx = hblur(xx)
        hyy = hblur(yy)
        hxy = hblur(xy)

        # Vertical blur on the MXU: per-image 2D band matmuls (static unroll).
        ssim_sum = jnp.float32(0.0)
        for i in range(tb):
            mu_x = jnp.dot(gv, hx[i], preferred_element_type=jnp.float32)
            mu_y = jnp.dot(gv, hy[i], preferred_element_type=jnp.float32)
            e_xx = jnp.dot(gv, hxx[i], preferred_element_type=jnp.float32)
            e_yy = jnp.dot(gv, hyy[i], preferred_element_type=jnp.float32)
            e_xy = jnp.dot(gv, hxy[i], preferred_element_type=jnp.float32)

            mu_x2 = mu_x * mu_x
            mu_y2 = mu_y * mu_y
            mu_xy = mu_x * mu_y
            sig_x = e_xx - mu_x2
            sig_y = e_yy - mu_y2
            sig_xy = e_xy - mu_xy

            num = (2.0 * mu_xy + C1) * (2.0 * sig_xy + C2)
            den = (mu_x2 + mu_y2 + C1) * (sig_x + sig_y + C2)
            if use_approx_recip:
                smap = num * pl.reciprocal(den, approx=True)
            else:
                smap = num / den

            s_i = jnp.sum(smap)
            if needs_mask:
                s_i = jnp.where(i < valid, s_i, jnp.float32(0.0))
            ssim_sum = ssim_sum + s_i

        # Per-grid-step partials; reduced in the wrapper.
        o_ref[0, 0] = ssim_sum
        o_ref[0, 1] = mse_sum

    return kernel


def ssim_mse_loss(img1, img2, *, use_approx_reciprocal=False):
    """img1, img2: NCHW arrays with values in [0, 1] (data_range=1.0)."""
    assert img1.shape == img2.shape and img1.ndim == 4
    n, c, h, w = img1.shape
    assert h >= KERNEL_SIZE and w >= KERNEL_SIZE, "spatial dims must be >= 11"
    b = n * c
    out_h = h - KERNEL_SIZE + 1
    out_w = w - KERNEL_SIZE + 1

    # Native dtype on the wire; f32 cast happens in-kernel.
    x = img1.reshape(b, h, w)
    y = img2.reshape(b, h, w)
    gh = jnp.asarray(_band_matrix(w, out_w))        # (w, out_w)
    gv = jnp.asarray(_band_matrix(h, out_h).T)      # (out_h, h)

    in_bytes = jnp.dtype(img1.dtype).itemsize
    vmem_cap = _vmem_capacity_bytes()

    # Live set per image per grid step: ~12 f32 working slabs (x, y, xx, yy,
    # xy, 5 h-blurred stats, transients) + 2 inputs x 2 pipeline buffers in
    # the native dtype.
    per_image = (12 * 4 + 2 * 2 * in_bytes) * h * w
    budget = max(per_image, vmem_cap - VMEM_HEADROOM)
    tb_cap = max(1, min(budget // per_image, MAX_TB, b))
    tb = _choose_tb(b, tb_cap)
    num_tiles = pl.cdiv(b, tb)

    vmem_limit = int(min(vmem_cap,
                         max(32 << 20, tb * per_image + VMEM_HEADROOM)))

    kernel = _make_kernel(tb, h, w, out_h, out_w, b, use_approx_reciprocal)

    partials = pl.pallas_call(
        kernel,
        out_shape=jax.ShapeDtypeStruct((num_tiles, 2), jnp.float32),
        grid=(num_tiles,),
        in_specs=[
            pl.BlockSpec((tb, h, w), lambda i: (i, 0, 0)),
            pl.BlockSpec((tb, h, w), lambda i: (i, 0, 0)),
            pl.BlockSpec((w, out_w), lambda i: (0, 0)),
            pl.BlockSpec((out_h, h), lambda i: (0, 0)),
        ],
        out_specs=pl.BlockSpec((1, 2), lambda i: (i, 0),
                               memory_space=pltpu.MemorySpace.SMEM),
        compiler_params=pltpu.CompilerParams(
            dimension_semantics=("parallel",),   # disjoint per-step outputs
            vmem_limit_bytes=vmem_limit,
        ),
    )(x, y, gh, gv)

    ssim_mean = jnp.sum(partials[:, 0]) / jnp.float32(b * out_h * out_w)
    mse_mean = jnp.sum(partials[:, 1]) / jnp.float32(b * h * w)
    return LAMBDA_SSIM * (1.0 - ssim_mean) + LAMBDA_MSE * mse_mean


if __name__ == "__main__":
    key = jax.random.PRNGKey(0)
    k1, k2 = jax.random.split(key)
    # small shapes consistent with the module: batch=2, channels=4, 16x16 images
    img1 = jax.random.uniform(k1, (2, 4, 16, 16), dtype=jnp.float32)
    img2 = jax.random.uniform(k2, (2, 4, 16, 16), dtype=jnp.float32)

    loss = ssim_mse_loss(img1, img2)
    jax.block_until_ready(loss)
    print("KERNEL_OK")
</pallas_src>

<mosaic_0001>
module attributes {stable_mosaic.version = 11 : i64} {
  func.func @kernel(%arg0: i32, %arg1: memref<8x16x16xf32, #tpu.memory_space<vmem>>, %arg2: memref<8x16x16xf32, #tpu.memory_space<vmem>>, %arg3: memref<16x6xf32, #tpu.memory_space<vmem>>, %arg4: memref<6x16xf32, #tpu.memory_space<vmem>>, %arg5: memref<1x2xf32, #tpu.memory_space<smem>>) attributes {dimension_semantics = [#tpu.dimension_semantics<parallel>], iteration_bounds = array<i64: 1>, scalar_prefetch = 0 : i64, scratch_operands = 0 : i64, tpu.core_type = #tpu.core_type<tc>, window_params = [{transform_indices = @transform_0, window_bounds = array<i64: 8, 16, 16>}, {transform_indices = @transform_1, window_bounds = array<i64: 8, 16, 16>}, {pipeline_mode = #tpu.pipeline_mode<synchronous>, transform_indices = @transform_2, window_bounds = array<i64: 16, 6>}, {pipeline_mode = #tpu.pipeline_mode<synchronous>, transform_indices = @transform_3, window_bounds = array<i64: 6, 16>}, {transform_indices = @transform_4, window_bounds = array<i64: 1, 2>}]} {
    %c0 = arith.constant 0 : index
    %c0_0 = arith.constant 0 : index
    %c0_1 = arith.constant 0 : index
    %0 = vector.load %arg1[%c0, %c0_0, %c0_1] : memref<8x16x16xf32, #tpu.memory_space<vmem>>, vector<8x16x16xf32>
    %c0_2 = arith.constant 0 : index
    %c0_3 = arith.constant 0 : index
    %c0_4 = arith.constant 0 : index
    %1 = vector.load %arg2[%c0_2, %c0_3, %c0_4] : memref<8x16x16xf32, #tpu.memory_space<vmem>>, vector<8x16x16xf32>
    %2 = arith.subf %0, %1 : vector<8x16x16xf32>
    %3 = arith.mulf %2, %2 : vector<8x16x16xf32>
    %4 = vector.shape_cast %3 : vector<8x16x16xf32> to vector<1x8x16x16xf32>
    %cst = arith.constant dense<0.000000e+00> : vector<1xf32>
    %5 = vector.multi_reduction <add>, %4, %cst [1, 2, 3] : vector<1x8x16x16xf32> to vector<1xf32>
    %6 = vector.shape_cast %5 : vector<1xf32> to vector<1x1x1x1xf32>
    %7 = vector.extract %6[0, 0, 0, 0] : f32 from vector<1x1x1x1xf32>
    %8 = arith.mulf %0, %0 : vector<8x16x16xf32>
    %9 = arith.mulf %1, %1 : vector<8x16x16xf32>
    %10 = arith.mulf %0, %1 : vector<8x16x16xf32>
    %c0_5 = arith.constant 0 : index
    %c0_6 = arith.constant 0 : index
    %11 = vector.load %arg3[%c0_5, %c0_6] : memref<16x6xf32, #tpu.memory_space<vmem>>, vector<16x6xf32>
    %c0_7 = arith.constant 0 : index
    %c0_8 = arith.constant 0 : index
    %12 = vector.load %arg4[%c0_7, %c0_8] : memref<6x16xf32, #tpu.memory_space<vmem>>, vector<6x16xf32>
    %13 = vector.shape_cast %0 : vector<8x16x16xf32> to vector<128x16xf32>
    %cst_9 = arith.constant dense<0.000000e+00> : vector<128x6xf32>
    %14 = tpu.matmul %13, %11, %cst_9 {dimension_numbers = #tpu.dot_dimension_numbers<[1], [0], [0], [1], [0, 0, 1, 1], [], []>} : vector<128x16xf32>, vector<16x6xf32>, vector<128x6xf32> -> vector<128x6xf32>
    %15 = vector.shape_cast %14 : vector<128x6xf32> to vector<8x16x6xf32>
    %16 = vector.shape_cast %1 : vector<8x16x16xf32> to vector<128x16xf32>
    %cst_10 = arith.constant dense<0.000000e+00> : vector<128x6xf32>
    %17 = tpu.matmul %16, %11, %cst_10 {dimension_numbers = #tpu.dot_dimension_numbers<[1], [0], [0], [1], [0, 0, 1, 1], [], []>} : vector<128x16xf32>, vector<16x6xf32>, vector<128x6xf32> -> vector<128x6xf32>
    %18 = vector.shape_cast %17 : vector<128x6xf32> to vector<8x16x6xf32>
    %19 = vector.shape_cast %8 : vector<8x16x16xf32> to vector<128x16xf32>
    %cst_11 = arith.constant dense<0.000000e+00> : vector<128x6xf32>
    %20 = tpu.matmul %19, %11, %cst_11 {dimension_numbers = #tpu.dot_dimension_numbers<[1], [0], [0], [1], [0, 0, 1, 1], [], []>} : vector<128x16xf32>, vector<16x6xf32>, vector<128x6xf32> -> vector<128x6xf32>
    %21 = vector.shape_cast %20 : vector<128x6xf32> to vector<8x16x6xf32>
    %22 = vector.shape_cast %9 : vector<8x16x16xf32> to vector<128x16xf32>
    %cst_12 = arith.constant dense<0.000000e+00> : vector<128x6xf32>
    %23 = tpu.matmul %22, %11, %cst_12 {dimension_numbers = #tpu.dot_dimension_numbers<[1], [0], [0], [1], [0, 0, 1, 1], [], []>} : vector<128x16xf32>, vector<16x6xf32>, vector<128x6xf32> -> vector<128x6xf32>
    %24 = vector.shape_cast %23 : vector<128x6xf32> to vector<8x16x6xf32>
    %25 = vector.shape_cast %10 : vector<8x16x16xf32> to vector<128x16xf32>
    %cst_13 = arith.constant dense<0.000000e+00> : vector<128x6xf32>
    %26 = tpu.matmul %25, %11, %cst_13 {dimension_numbers = #tpu.dot_dimension_numbers<[1], [0], [0], [1], [0, 0, 1, 1], [], []>} : vector<128x16xf32>, vector<16x6xf32>, vector<128x6xf32> -> vector<128x6xf32>
    %27 = vector.shape_cast %26 : vector<128x6xf32> to vector<8x16x6xf32>
    %28 = vector.extract_strided_slice %15 {offsets = [0, 0, 0], sizes = [1, 16, 6], strides = [1, 1, 1]} : vector<8x16x6xf32> to vector<1x16x6xf32>
    %29 = vector.shape_cast %28 : vector<1x16x6xf32> to vector<16x6xf32>
    %cst_14 = arith.constant dense<0.000000e+00> : vector<6x6xf32>
    %30 = tpu.matmul %12, %29, %cst_14 {dimension_numbers = #tpu.dot_dimension_numbers<[1], [0], [0], [1], [0, 0, 1, 1], [], []>} : vector<6x16xf32>, vector<16x6xf32>, vector<6x6xf32> -> vector<6x6xf32>
    %31 = vector.extract_strided_slice %18 {offsets = [0, 0, 0], sizes = [1, 16, 6], strides = [1, 1, 1]} : vector<8x16x6xf32> to vector<1x16x6xf32>
    %32 = vector.shape_cast %31 : vector<1x16x6xf32> to vector<16x6xf32>
    %cst_15 = arith.constant dense<0.000000e+00> : vector<6x6xf32>
    %33 = tpu.matmul %12, %32, %cst_15 {dimension_numbers = #tpu.dot_dimension_numbers<[1], [0], [0], [1], [0, 0, 1, 1], [], []>} : vector<6x16xf32>, vector<16x6xf32>, vector<6x6xf32> -> vector<6x6xf32>
    %34 = vector.extract_strided_slice %21 {offsets = [0, 0, 0], sizes = [1, 16, 6], strides = [1, 1, 1]} : vector<8x16x6xf32> to vector<1x16x6xf32>
    %35 = vector.shape_cast %34 : vector<1x16x6xf32> to vector<16x6xf32>
    %cst_16 = arith.constant dense<0.000000e+00> : vector<6x6xf32>
    %36 = tpu.matmul %12, %35, %cst_16 {dimension_numbers = #tpu.dot_dimension_numbers<[1], [0], [0], [1], [0, 0, 1, 1], [], []>} : vector<6x16xf32>, vector<16x6xf32>, vector<6x6xf32> -> vector<6x6xf32>
    %37 = vector.extract_strided_slice %24 {offsets = [0, 0, 0], sizes = [1, 16, 6], strides = [1, 1, 1]} : vector<8x16x6xf32> to vector<1x16x6xf32>
    %38 = vector.shape_cast %37 : vector<1x16x6xf32> to vector<16x6xf32>
    %cst_17 = arith.constant dense<0.000000e+00> : vector<6x6xf32>
    %39 = tpu.matmul %12, %38, %cst_17 {dimension_numbers = #tpu.dot_dimension_numbers<[1], [0], [0], [1], [0, 0, 1, 1], [], []>} : vector<6x16xf32>, vector<16x6xf32>, vector<6x6xf32> -> vector<6x6xf32>
    %40 = vector.extract_strided_slice %27 {offsets = [0, 0, 0], sizes = [1, 16, 6], strides = [1, 1, 1]} : vector<8x16x6xf32> to vector<1x16x6xf32>
    %41 = vector.shape_cast %40 : vector<1x16x6xf32> to vector<16x6xf32>
    %cst_18 = arith.constant dense<0.000000e+00> : vector<6x6xf32>
    %42 = tpu.matmul %12, %41, %cst_18 {dimension_numbers = #tpu.dot_dimension_numbers<[1], [0], [0], [1], [0, 0, 1, 1], [], []>} : vector<6x16xf32>, vector<16x6xf32>, vector<6x6xf32> -> vector<6x6xf32>
    %43 = arith.mulf %30, %30 : vector<6x6xf32>
    %44 = arith.mulf %33, %33 : vector<6x6xf32>
    %45 = arith.mulf %30, %33 : vector<6x6xf32>
    %46 = arith.subf %36, %43 : vector<6x6xf32>
    %47 = arith.subf %39, %44 : vector<6x6xf32>
    %48 = arith.subf %42, %45 : vector<6x6xf32>
    %cst_19 = arith.constant 2.000000e+00 : f32
    %49 = vector.broadcast %cst_19 : f32 to vector<6x6xf32>
    %50 = arith.mulf %49, %45 : vector<6x6xf32>
    %cst_20 = arith.constant 9.99999974E-5 : f32
    %51 = vector.broadcast %cst_20 : f32 to vector<6x6xf32>
    %52 = arith.addf %50, %51 : vector<6x6xf32>
    %cst_21 = arith.constant 2.000000e+00 : f32
    %53 = vector.broadcast %cst_21 : f32 to vector<6x6xf32>
    %54 = arith.mulf %53, %48 : vector<6x6xf32>
    %cst_22 = arith.constant 8.99999984E-4 : f32
    %55 = vector.broadcast %cst_22 : f32 to vector<6x6xf32>
    %56 = arith.addf %54, %55 : vector<6x6xf32>
    %57 = arith.mulf %52, %56 : vector<6x6xf32>
    %58 = arith.addf %43, %44 : vector<6x6xf32>
    %cst_23 = arith.constant 9.99999974E-5 : f32
    %59 = vector.broadcast %cst_23 : f32 to vector<6x6xf32>
    %60 = arith.addf %58, %59 : vector<6x6xf32>
    %61 = arith.addf %46, %47 : vector<6x6xf32>
    %cst_24 = arith.constant 8.99999984E-4 : f32
    %62 = vector.broadcast %cst_24 : f32 to vector<6x6xf32>
    %63 = arith.addf %61, %62 : vector<6x6xf32>
    %64 = arith.mulf %60, %63 : vector<6x6xf32>
    %65 = arith.divf %57, %64 : vector<6x6xf32>
    %66 = vector.shape_cast %65 : vector<6x6xf32> to vector<1x6x6xf32>
    %cst_25 = arith.constant dense<0.000000e+00> : vector<1xf32>
    %67 = vector.multi_reduction <add>, %66, %cst_25 [1, 2] : vector<1x6x6xf32> to vector<1xf32>
    %68 = vector.shape_cast %67 : vector<1xf32> to vector<1x1x1xf32>
    %69 = vector.extract %68[0, 0, 0] : f32 from vector<1x1x1xf32>
    %cst_26 = arith.constant 0.000000e+00 : f32
    %70 = arith.addf %cst_26, %69 : f32
    %71 = vector.extract_strided_slice %15 {offsets = [1, 0, 0], sizes = [1, 16, 6], strides = [1, 1, 1]} : vector<8x16x6xf32> to vector<1x16x6xf32>
    %72 = vector.shape_cast %71 : vector<1x16x6xf32> to vector<16x6xf32>
    %cst_27 = arith.constant dense<0.000000e+00> : vector<6x6xf32>
    %73 = tpu.matmul %12, %72, %cst_27 {dimension_numbers = #tpu.dot_dimension_numbers<[1], [0], [0], [1], [0, 0, 1, 1], [], []>} : vector<6x16xf32>, vector<16x6xf32>, vector<6x6xf32> -> vector<6x6xf32>
    %74 = vector.extract_strided_slice %18 {offsets = [1, 0, 0], sizes = [1, 16, 6], strides = [1, 1, 1]} : vector<8x16x6xf32> to vector<1x16x6xf32>
    %75 = vector.shape_cast %74 : vector<1x16x6xf32> to vector<16x6xf32>
    %cst_28 = arith.constant dense<0.000000e+00> : vector<6x6xf32>
    %76 = tpu.matmul %12, %75, %cst_28 {dimension_numbers = #tpu.dot_dimension_numbers<[1], [0], [0], [1], [0, 0, 1, 1], [], []>} : vector<6x16xf32>, vector<16x6xf32>, vector<6x6xf32> -> vector<6x6xf32>
    %77 = vector.extract_strided_slice %21 {offsets = [1, 0, 0], sizes = [1, 16, 6], strides = [1, 1, 1]} : vector<8x16x6xf32> to vector<1x16x6xf32>
    %78 = vector.shape_cast %77 : vector<1x16x6xf32> to vector<16x6xf32>
    %cst_29 = arith.constant dense<0.000000e+00> : vector<6x6xf32>
    %79 = tpu.matmul %12, %78, %cst_29 {dimension_numbers = #tpu.dot_dimension_numbers<[1], [0], [0], [1], [0, 0, 1, 1], [], []>} : vector<6x16xf32>, vector<16x6xf32>, vector<6x6xf32> -> vector<6x6xf32>
    %80 = vector.extract_strided_slice %24 {offsets = [1, 0, 0], sizes = [1, 16, 6], strides = [1, 1, 1]} : vector<8x16x6xf32> to vector<1x16x6xf32>
    %81 = vector.shape_cast %80 : vector<1x16x6xf32> to vector<16x6xf32>
    %cst_30 = arith.constant dense<0.000000e+00> : vector<6x6xf32>
    %82 = tpu.matmul %12, %81, %cst_30 {dimension_numbers = #tpu.dot_dimension_numbers<[1], [0], [0], [1], [0, 0, 1, 1], [], []>} : vector<6x16xf32>, vector<16x6xf32>, vector<6x6xf32> -> vector<6x6xf32>
    %83 = vector.extract_strided_slice %27 {offsets = [1, 0, 0], sizes = [1, 16, 6], strides = [1, 1, 1]} : vector<8x16x6xf32> to vector<1x16x6xf32>
    %84 = vector.shape_cast %83 : vector<1x16x6xf32> to vector<16x6xf32>
    %cst_31 = arith.constant dense<0.000000e+00> : vector<6x6xf32>
    %85 = tpu.matmul %12, %84, %cst_31 {dimension_numbers = #tpu.dot_dimension_numbers<[1], [0], [0], [1], [0, 0, 1, 1], [], []>} : vector<6x16xf32>, vector<16x6xf32>, vector<6x6xf32> -> vector<6x6xf32>
    %86 = arith.mulf %73, %73 : vector<6x6xf32>
    %87 = arith.mulf %76, %76 : vector<6x6xf32>
    %88 = arith.mulf %73, %76 : vector<6x6xf32>
    %89 = arith.subf %79, %86 : vector<6x6xf32>
    %90 = arith.subf %82, %87 : vector<6x6xf32>
    %91 = arith.subf %85, %88 : vector<6x6xf32>
    %cst_32 = arith.constant 2.000000e+00 : f32
    %92 = vector.broadcast %cst_32 : f32 to vector<6x6xf32>
    %93 = arith.mulf %92, %88 : vector<6x6xf32>
    %cst_33 = arith.constant 9.99999974E-5 : f32
    %94 = vector.broadcast %cst_33 : f32 to vector<6x6xf32>
    %95 = arith.addf %93, %94 : vector<6x6xf32>
    %cst_34 = arith.constant 2.000000e+00 : f32
    %96 = vector.broadcast %cst_34 : f32 to vector<6x6xf32>
    %97 = arith.mulf %96, %91 : vector<6x6xf32>
    %cst_35 = arith.constant 8.99999984E-4 : f32
    %98 = vector.broadcast %cst_35 : f32 to vector<6x6xf32>
    %99 = arith.addf %97, %98 : vector<6x6xf32>
    %100 = arith.mulf %95, %99 : vector<6x6xf32>
    %101 = arith.addf %86, %87 : vector<6x6xf32>
    %cst_36 = arith.constant 9.99999974E-5 : f32
    %102 = vector.broadcast %cst_36 : f32 to vector<6x6xf32>
    %103 = arith.addf %101, %102 : vector<6x6xf32>
    %104 = arith.addf %89, %90 : vector<6x6xf32>
    %cst_37 = arith.constant 8.99999984E-4 : f32
    %105 = vector.broadcast %cst_37 : f32 to vector<6x6xf32>
    %106 = arith.addf %104, %105 : vector<6x6xf32>
    %107 = arith.mulf %103, %106 : vector<6x6xf32>
    %108 = arith.divf %100, %107 : vector<6x6xf32>
    %109 = vector.shape_cast %108 : vector<6x6xf32> to vector<1x6x6xf32>
    %cst_38 = arith.constant dense<0.000000e+00> : vector<1xf32>
    %110 = vector.multi_reduction <add>, %109, %cst_38 [1, 2] : vector<1x6x6xf32> to vector<1xf32>
    %111 = vector.shape_cast %110 : vector<1xf32> to vector<1x1x1xf32>
    %112 = vector.extract %111[0, 0, 0] : f32 from vector<1x1x1xf32>
    %113 = arith.addf %70, %112 : f32
    %114 = vector.extract_strided_slice %15 {offsets = [2, 0, 0], sizes = [1, 16, 6], strides = [1, 1, 1]} : vector<8x16x6xf32> to vector<1x16x6xf32>
    %115 = vector.shape_cast %114 : vector<1x16x6xf32> to vector<16x6xf32>
    %cst_39 = arith.constant dense<0.000000e+00> : vector<6x6xf32>
    %116 = tpu.matmul %12, %115, %cst_39 {dimension_numbers = #tpu.dot_dimension_numbers<[1], [0], [0], [1], [0, 0, 1, 1], [], []>} : vector<6x16xf32>, vector<16x6xf32>, vector<6x6xf32> -> vector<6x6xf32>
    %117 = vector.extract_strided_slice %18 {offsets = [2, 0, 0], sizes = [1, 16, 6], strides = [1, 1, 1]} : vector<8x16x6xf32> to vector<1x16x6xf32>
    %118 = vector.shape_cast %117 : vector<1x16x6xf32> to vector<16x6xf32>
    %cst_40 = arith.constant dense<0.000000e+00> : vector<6x6xf32>
    %119 = tpu.matmul %12, %118, %cst_40 {dimension_numbers = #tpu.dot_dimension_numbers<[1], [0], [0], [1], [0, 0, 1, 1], [], []>} : vector<6x16xf32>, vector<16x6xf32>, vector<6x6xf32> -> vector<6x6xf32>
    %120 = vector.extract_strided_slice %21 {offsets = [2, 0, 0], sizes = [1, 16, 6], strides = [1, 1, 1]} : vector<8x16x6xf32> to vector<1x16x6xf32>
    %121 = vector.shape_cast %120 : vector<1x16x6xf32> to vector<16x6xf32>
    %cst_41 = arith.constant dense<0.000000e+00> : vector<6x6xf32>
    %122 = tpu.matmul %12, %121, %cst_41 {dimension_numbers = #tpu.dot_dimension_numbers<[1], [0], [0], [1], [0, 0, 1, 1], [], []>} : vector<6x16xf32>, vector<16x6xf32>, vector<6x6xf32> -> vector<6x6xf32>
    %123 = vector.extract_strided_slice %24 {offsets = [2, 0, 0], sizes = [1, 16, 6], strides = [1, 1, 1]} : vector<8x16x6xf32> to vector<1x16x6xf32>
    %124 = vector.shape_cast %123 : vector<1x16x6xf32> to vector<16x6xf32>
    %cst_42 = arith.constant dense<0.000000e+00> : vector<6x6xf32>
    %125 = tpu.matmul %12, %124, %cst_42 {dimension_numbers = #tpu.dot_dimension_numbers<[1], [0], [0], [1], [0, 0, 1, 1], [], []>} : vector<6x16xf32>, vector<16x6xf32>, vector<6x6xf32> -> vector<6x6xf32>
    %126 = vector.extract_strided_slice %27 {offsets = [2, 0, 0], sizes = [1, 16, 6], strides = [1, 1, 1]} : vector<8x16x6xf32> to vector<1x16x6xf32>
    %127 = vector.shape_cast %126 : vector<1x16x6xf32> to vector<16x6xf32>
    %cst_43 = arith.constant dense<0.000000e+00> : vector<6x6xf32>
    %128 = tpu.matmul %12, %127, %cst_43 {dimension_numbers = #tpu.dot_dimension_numbers<[1], [0], [0], [1], [0, 0, 1, 1], [], []>} : vector<6x16xf32>, vector<16x6xf32>, vector<6x6xf32> -> vector<6x6xf32>
    %129 = arith.mulf %116, %116 : vector<6x6xf32>
    %130 = arith.mulf %119, %119 : vector<6x6xf32>
    %131 = arith.mulf %116, %119 : vector<6x6xf32>
    %132 = arith.subf %122, %129 : vector<6x6xf32>
    %133 = arith.subf %125, %130 : vector<6x6xf32>
    %134 = arith.subf %128, %131 : vector<6x6xf32>
    %cst_44 = arith.constant 2.000000e+00 : f32
    %135 = vector.broadcast %cst_44 : f32 to vector<6x6xf32>
    %136 = arith.mulf %135, %131 : vector<6x6xf32>
    %cst_45 = arith.constant 9.99999974E-5 : f32
    %137 = vector.broadcast %cst_45 : f32 to vector<6x6xf32>
    %138 = arith.addf %136, %137 : vector<6x6xf32>
    %cst_46 = arith.constant 2.000000e+00 : f32
    %139 = vector.broadcast %cst_46 : f32 to vector<6x6xf32>
    %140 = arith.mulf %139, %134 : vector<6x6xf32>
    %cst_47 = arith.constant 8.99999984E-4 : f32
    %141 = vector.broadcast %cst_47 : f32 to vector<6x6xf32>
    %142 = arith.addf %140, %141 : vector<6x6xf32>
    %143 = arith.mulf %138, %142 : vector<6x6xf32>
    %144 = arith.addf %129, %130 : vector<6x6xf32>
    %cst_48 = arith.constant 9.99999974E-5 : f32
    %145 = vector.broadcast %cst_48 : f32 to vector<6x6xf32>
    %146 = arith.addf %144, %145 : vector<6x6xf32>
    %147 = arith.addf %132, %133 : vector<6x6xf32>
    %cst_49 = arith.constant 8.99999984E-4 : f32
    %148 = vector.broadcast %cst_49 : f32 to vector<6x6xf32>
    %149 = arith.addf %147, %148 : vector<6x6xf32>
    %150 = arith.mulf %146, %149 : vector<6x6xf32>
    %151 = arith.divf %143, %150 : vector<6x6xf32>
    %152 = vector.shape_cast %151 : vector<6x6xf32> to vector<1x6x6xf32>
    %cst_50 = arith.constant dense<0.000000e+00> : vector<1xf32>
    %153 = vector.multi_reduction <add>, %152, %cst_50 [1, 2] : vector<1x6x6xf32> to vector<1xf32>
    %154 = vector.shape_cast %153 : vector<1xf32> to vector<1x1x1xf32>
    %155 = vector.extract %154[0, 0, 0] : f32 from vector<1x1x1xf32>
    %156 = arith.addf %113, %155 : f32
    %157 = vector.extract_strided_slice %15 {offsets = [3, 0, 0], sizes = [1, 16, 6], strides = [1, 1, 1]} : vector<8x16x6xf32> to vector<1x16x6xf32>
    %158 = vector.shape_cast %157 : vector<1x16x6xf32> to vector<16x6xf32>
    %cst_51 = arith.constant dense<0.000000e+00> : vector<6x6xf32>
    %159 = tpu.matmul %12, %158, %cst_51 {dimension_numbers = #tpu.dot_dimension_numbers<[1], [0], [0], [1], [0, 0, 1, 1], [], []>} : vector<6x16xf32>, vector<16x6xf32>, vector<6x6xf32> -> vector<6x6xf32>
    %160 = vector.extract_strided_slice %18 {offsets = [3, 0, 0], sizes = [1, 16, 6], strides = [1, 1, 1]} : vector<8x16x6xf32> to vector<1x16x6xf32>
    %161 = vector.shape_cast %160 : vector<1x16x6xf32> to vector<16x6xf32>
    %cst_52 = arith.constant dense<0.000000e+00> : vector<6x6xf32>
    %162 = tpu.matmul %12, %161, %cst_52 {dimension_numbers = #tpu.dot_dimension_numbers<[1], [0], [0], [1], [0, 0, 1, 1], [], []>} : vector<6x16xf32>, vector<16x6xf32>, vector<6x6xf32> -> vector<6x6xf32>
    %163 = vector.extract_strided_slice %21 {offsets = [3, 0, 0], sizes = [1, 16, 6], strides = [1, 1, 1]} : vector<8x16x6xf32> to vector<1x16x6xf32>
    %164 = vector.shape_cast %163 : vector<1x16x6xf32> to vector<16x6xf32>
    %cst_53 = arith.constant dense<0.000000e+00> : vector<6x6xf32>
    %165 = tpu.matmul %12, %164, %cst_53 {dimension_numbers = #tpu.dot_dimension_numbers<[1], [0], [0], [1], [0, 0, 1, 1], [], []>} : vector<6x16xf32>, vector<16x6xf32>, vector<6x6xf32> -> vector<6x6xf32>
    %166 = vector.extract_strided_slice %24 {offsets = [3, 0, 0], sizes = [1, 16, 6], strides = [1, 1, 1]} : vector<8x16x6xf32> to vector<1x16x6xf32>
    %167 = vector.shape_cast %166 : vector<1x16x6xf32> to vector<16x6xf32>
    %cst_54 = arith.constant dense<0.000000e+00> : vector<6x6xf32>
    %168 = tpu.matmul %12, %167, %cst_54 {dimension_numbers = #tpu.dot_dimension_numbers<[1], [0], [0], [1], [0, 0, 1, 1], [], []>} : vector<6x16xf32>, vector<16x6xf32>, vector<6x6xf32> -> vector<6x6xf32>
    %169 = vector.extract_strided_slice %27 {offsets = [3, 0, 0], sizes = [1, 16, 6], strides = [1, 1, 1]} : vector<8x16x6xf32> to vector<1x16x6xf32>
    %170 = vector.shape_cast %169 : vector<1x16x6xf32> to vector<16x6xf32>
    %cst_55 = arith.constant dense<0.000000e+00> : vector<6x6xf32>
    %171 = tpu.matmul %12, %170, %cst_55 {dimension_numbers = #tpu.dot_dimension_numbers<[1], [0], [0], [1], [0, 0, 1, 1], [], []>} : vector<6x16xf32>, vector<16x6xf32>, vector<6x6xf32> -> vector<6x6xf32>
    %172 = arith.mulf %159, %159 : vector<6x6xf32>
    %173 = arith.mulf %162, %162 : vector<6x6xf32>
    %174 = arith.mulf %159, %162 : vector<6x6xf32>
    %175 = arith.subf %165, %172 : vector<6x6xf32>
    %176 = arith.subf %168, %173 : vector<6x6xf32>
    %177 = arith.subf %171, %174 : vector<6x6xf32>
    %cst_56 = arith.constant 2.000000e+00 : f32
    %178 = vector.broadcast %cst_56 : f32 to vector<6x6xf32>
    %179 = arith.mulf %178, %174 : vector<6x6xf32>
    %cst_57 = arith.constant 9.99999974E-5 : f32
    %180 = vector.broadcast %cst_57 : f32 to vector<6x6xf32>
    %181 = arith.addf %179, %180 : vector<6x6xf32>
    %cst_58 = arith.constant 2.000000e+00 : f32
    %182 = vector.broadcast %cst_58 : f32 to vector<6x6xf32>
    %183 = arith.mulf %182, %177 : vector<6x6xf32>
    %cst_59 = arith.constant 8.99999984E-4 : f32
    %184 = vector.broadcast %cst_59 : f32 to vector<6x6xf32>
    %185 = arith.addf %183, %184 : vector<6x6xf32>
    %186 = arith.mulf %181, %185 : vector<6x6xf32>
    %187 = arith.addf %172, %173 : vector<6x6xf32>
    %cst_60 = arith.constant 9.99999974E-5 : f32
    %188 = vector.broadcast %cst_60 : f32 to vector<6x6xf32>
    %189 = arith.addf %187, %188 : vector<6x6xf32>
    %190 = arith.addf %175, %176 : vector<6x6xf32>
    %cst_61 = arith.constant 8.99999984E-4 : f32
    %191 = vector.broadcast %cst_61 : f32 to vector<6x6xf32>
    %192 = arith.addf %190, %191 : vector<6x6xf32>
    %193 = arith.mulf %189, %192 : vector<6x6xf32>
    %194 = arith.divf %186, %193 : vector<6x6xf32>
    %195 = vector.shape_cast %194 : vector<6x6xf32> to vector<1x6x6xf32>
    %cst_62 = arith.constant dense<0.000000e+00> : vector<1xf32>
    %196 = vector.multi_reduction <add>, %195, %cst_62 [1, 2] : vector<1x6x6xf32> to vector<1xf32>
    %197 = vector.shape_cast %196 : vector<1xf32> to vector<1x1x1xf32>
    %198 = vector.extract %197[0, 0, 0] : f32 from vector<1x1x1xf32>
    %199 = arith.addf %156, %198 : f32
    %200 = vector.extract_strided_slice %15 {offsets = [4, 0, 0], sizes = [1, 16, 6], strides = [1, 1, 1]} : vector<8x16x6xf32> to vector<1x16x6xf32>
    %201 = vector.shape_cast %200 : vector<1x16x6xf32> to vector<16x6xf32>
    %cst_63 = arith.constant dense<0.000000e+00> : vector<6x6xf32>
    %202 = tpu.matmul %12, %201, %cst_63 {dimension_numbers = #tpu.dot_dimension_numbers<[1], [0], [0], [1], [0, 0, 1, 1], [], []>} : vector<6x16xf32>, vector<16x6xf32>, vector<6x6xf32> -> vector<6x6xf32>
    %203 = vector.extract_strided_slice %18 {offsets = [4, 0, 0], sizes = [1, 16, 6], strides = [1, 1, 1]} : vector<8x16x6xf32> to vector<1x16x6xf32>
    %204 = vector.shape_cast %203 : vector<1x16x6xf32> to vector<16x6xf32>
    %cst_64 = arith.constant dense<0.000000e+00> : vector<6x6xf32>
    %205 = tpu.matmul %12, %204, %cst_64 {dimension_numbers = #tpu.dot_dimension_numbers<[1], [0], [0], [1], [0, 0, 1, 1], [], []>} : vector<6x16xf32>, vector<16x6xf32>, vector<6x6xf32> -> vector<6x6xf32>
    %206 = vector.extract_strided_slice %21 {offsets = [4, 0, 0], sizes = [1, 16, 6], strides = [1, 1, 1]} : vector<8x16x6xf32> to vector<1x16x6xf32>
    %207 = vector.shape_cast %206 : vector<1x16x6xf32> to vector<16x6xf32>
    %cst_65 = arith.constant dense<0.000000e+00> : vector<6x6xf32>
    %208 = tpu.matmul %12, %207, %cst_65 {dimension_numbers = #tpu.dot_dimension_numbers<[1], [0], [0], [1], [0, 0, 1, 1], [], []>} : vector<6x16xf32>, vector<16x6xf32>, vector<6x6xf32> -> vector<6x6xf32>
    %209 = vector.extract_strided_slice %24 {offsets = [4, 0, 0], sizes = [1, 16, 6], strides = [1, 1, 1]} : vector<8x16x6xf32> to vector<1x16x6xf32>
    %210 = vector.shape_cast %209 : vector<1x16x6xf32> to vector<16x6xf32>
    %cst_66 = arith.constant dense<0.000000e+00> : vector<6x6xf32>
    %211 = tpu.matmul %12, %210, %cst_66 {dimension_numbers = #tpu.dot_dimension_numbers<[1], [0], [0], [1], [0, 0, 1, 1], [], []>} : vector<6x16xf32>, vector<16x6xf32>, vector<6x6xf32> -> vector<6x6xf32>
    %212 = vector.extract_strided_slice %27 {offsets = [4, 0, 0], sizes = [1, 16, 6], strides = [1, 1, 1]} : vector<8x16x6xf32> to vector<1x16x6xf32>
    %213 = vector.shape_cast %212 : vector<1x16x6xf32> to vector<16x6xf32>
    %cst_67 = arith.constant dense<0.000000e+00> : vector<6x6xf32>
    %214 = tpu.matmul %12, %213, %cst_67 {dimension_numbers = #tpu.dot_dimension_numbers<[1], [0], [0], [1], [0, 0, 1, 1], [], []>} : vector<6x16xf32>, vector<16x6xf32>, vector<6x6xf32> -> vector<6x6xf32>
    %215 = arith.mulf %202, %202 : vector<6x6xf32>
    %216 = arith.mulf %205, %205 : vector<6x6xf32>
    %217 = arith.mulf %202, %205 : vector<6x6xf32>
    %218 = arith.subf %208, %215 : vector<6x6xf32>
    %219 = arith.subf %211, %216 : vector<6x6xf32>
    %220 = arith.subf %214, %217 : vector<6x6xf32>
    %cst_68 = arith.constant 2.000000e+00 : f32
    %221 = vector.broadcast %cst_68 : f32 to vector<6x6xf32>
    %222 = arith.mulf %221, %217 : vector<6x6xf32>
    %cst_69 = arith.constant 9.99999974E-5 : f32
    %223 = vector.broadcast %cst_69 : f32 to vector<6x6xf32>
    %224 = arith.addf %222, %223 : vector<6x6xf32>
    %cst_70 = arith.constant 2.000000e+00 : f32
    %225 = vector.broadcast %cst_70 : f32 to vector<6x6xf32>
    %226 = arith.mulf %225, %220 : vector<6x6xf32>
    %cst_71 = arith.constant 8.99999984E-4 : f32
    %227 = vector.broadcast %cst_71 : f32 to vector<6x6xf32>
    %228 = arith.addf %226, %227 : vector<6x6xf32>
    %229 = arith.mulf %224, %228 : vector<6x6xf32>
    %230 = arith.addf %215, %216 : vector<6x6xf32>
    %cst_72 = arith.constant 9.99999974E-5 : f32
    %231 = vector.broadcast %cst_72 : f32 to vector<6x6xf32>
    %232 = arith.addf %230, %231 : vector<6x6xf32>
    %233 = arith.addf %218, %219 : vector<6x6xf32>
    %cst_73 = arith.constant 8.99999984E-4 : f32
    %234 = vector.broadcast %cst_73 : f32 to vector<6x6xf32>
    %235 = arith.addf %233, %234 : vector<6x6xf32>
    %236 = arith.mulf %232, %235 : vector<6x6xf32>
    %237 = arith.divf %229, %236 : vector<6x6xf32>
    %238 = vector.shape_cast %237 : vector<6x6xf32> to vector<1x6x6xf32>
    %cst_74 = arith.constant dense<0.000000e+00> : vector<1xf32>
    %239 = vector.multi_reduction <add>, %238, %cst_74 [1, 2] : vector<1x6x6xf32> to vector<1xf32>
    %240 = vector.shape_cast %239 : vector<1xf32> to vector<1x1x1xf32>
    %241 = vector.extract %240[0, 0, 0] : f32 from vector<1x1x1xf32>
    %242 = arith.addf %199, %241 : f32
    %243 = vector.extract_strided_slice %15 {offsets = [5, 0, 0], sizes = [1, 16, 6], strides = [1, 1, 1]} : vector<8x16x6xf32> to vector<1x16x6xf32>
    %244 = vector.shape_cast %243 : vector<1x16x6xf32> to vector<16x6xf32>
    %cst_75 = arith.constant dense<0.000000e+00> : vector<6x6xf32>
    %245 = tpu.matmul %12, %244, %cst_75 {dimension_numbers = #tpu.dot_dimension_numbers<[1], [0], [0], [1], [0, 0, 1, 1], [], []>} : vector<6x16xf32>, vector<16x6xf32>, vector<6x6xf32> -> vector<6x6xf32>
    %246 = vector.extract_strided_slice %18 {offsets = [5, 0, 0], sizes = [1, 16, 6], strides = [1, 1, 1]} : vector<8x16x6xf32> to vector<1x16x6xf32>
    %247 = vector.shape_cast %246 : vector<1x16x6xf32> to vector<16x6xf32>
    %cst_76 = arith.constant dense<0.000000e+00> : vector<6x6xf32>
    %248 = tpu.matmul %12, %247, %cst_76 {dimension_numbers = #tpu.dot_dimension_numbers<[1], [0], [0], [1], [0, 0, 1, 1], [], []>} : vector<6x16xf32>, vector<16x6xf32>, vector<6x6xf32> -> vector<6x6xf32>
    %249 = vector.extract_strided_slice %21 {offsets = [5, 0, 0], sizes = [1, 16, 6], strides = [1, 1, 1]} : vector<8x16x6xf32> to vector<1x16x6xf32>
    %250 = vector.shape_cast %249 : vector<1x16x6xf32> to vector<16x6xf32>
    %cst_77 = arith.constant dense<0.000000e+00> : vector<6x6xf32>
    %251 = tpu.matmul %12, %250, %cst_77 {dimension_numbers = #tpu.dot_dimension_numbers<[1], [0], [0], [1], [0, 0, 1, 1], [], []>} : vector<6x16xf32>, vector<16x6xf32>, vector<6x6xf32> -> vector<6x6xf32>
    %252 = vector.extract_strided_slice %24 {offsets = [5, 0, 0], sizes = [1, 16, 6], strides = [1, 1, 1]} : vector<8x16x6xf32> to vector<1x16x6xf32>
    %253 = vector.shape_cast %252 : vector<1x16x6xf32> to vector<16x6xf32>
    %cst_78 = arith.constant dense<0.000000e+00> : vector<6x6xf32>
    %254 = tpu.matmul %12, %253, %cst_78 {dimension_numbers = #tpu.dot_dimension_numbers<[1], [0], [0], [1], [0, 0, 1, 1], [], []>} : vector<6x16xf32>, vector<16x6xf32>, vector<6x6xf32> -> vector<6x6xf32>
    %255 = vector.extract_strided_slice %27 {offsets = [5, 0, 0], sizes = [1, 16, 6], strides = [1, 1, 1]} : vector<8x16x6xf32> to vector<1x16x6xf32>
    %256 = vector.shape_cast %255 : vector<1x16x6xf32> to vector<16x6xf32>
    %cst_79 = arith.constant dense<0.000000e+00> : vector<6x6xf32>
    %257 = tpu.matmul %12, %256, %cst_79 {dimension_numbers = #tpu.dot_dimension_numbers<[1], [0], [0], [1], [0, 0, 1, 1], [], []>} : vector<6x16xf32>, vector<16x6xf32>, vector<6x6xf32> -> vector<6x6xf32>
    %258 = arith.mulf %245, %245 : vector<6x6xf32>
    %259 = arith.mulf %248, %248 : vector<6x6xf32>
    %260 = arith.mulf %245, %248 : vector<6x6xf32>
    %261 = arith.subf %251, %258 : vector<6x6xf32>
    %262 = arith.subf %254, %259 : vector<6x6xf32>
    %263 = arith.subf %257, %260 : vector<6x6xf32>
    %cst_80 = arith.constant 2.000000e+00 : f32
    %264 = vector.broadcast %cst_80 : f32 to vector<6x6xf32>
    %265 = arith.mulf %264, %260 : vector<6x6xf32>
    %cst_81 = arith.constant 9.99999974E-5 : f32
    %266 = vector.broadcast %cst_81 : f32 to vector<6x6xf32>
    %267 = arith.addf %265, %266 : vector<6x6xf32>
    %cst_82 = arith.constant 2.000000e+00 : f32
    %268 = vector.broadcast %cst_82 : f32 to vector<6x6xf32>
    %269 = arith.mulf %268, %263 : vector<6x6xf32>
    %cst_83 = arith.constant 8.99999984E-4 : f32
    %270 = vector.broadcast %cst_83 : f32 to vector<6x6xf32>
    %271 = arith.addf %269, %270 : vector<6x6xf32>
    %272 = arith.mulf %267, %271 : vector<6x6xf32>
    %273 = arith.addf %258, %259 : vector<6x6xf32>
    %cst_84 = arith.constant 9.99999974E-5 : f32
    %274 = vector.broadcast %cst_84 : f32 to vector<6x6xf32>
    %275 = arith.addf %273, %274 : vector<6x6xf32>
    %276 = arith.addf %261, %262 : vector<6x6xf32>
    %cst_85 = arith.constant 8.99999984E-4 : f32
    %277 = vector.broadcast %cst_85 : f32 to vector<6x6xf32>
    %278 = arith.addf %276, %277 : vector<6x6xf32>
    %279 = arith.mulf %275, %278 : vector<6x6xf32>
    %280 = arith.divf %272, %279 : vector<6x6xf32>
    %281 = vector.shape_cast %280 : vector<6x6xf32> to vector<1x6x6xf32>
    %cst_86 = arith.constant dense<0.000000e+00> : vector<1xf32>
    %282 = vector.multi_reduction <add>, %281, %cst_86 [1, 2] : vector<1x6x6xf32> to vector<1xf32>
    %283 = vector.shape_cast %282 : vector<1xf32> to vector<1x1x1xf32>
    %284 = vector.extract %283[0, 0, 0] : f32 from vector<1x1x1xf32>
    %285 = arith.addf %242, %284 : f32
    %286 = vector.extract_strided_slice %15 {offsets = [6, 0, 0], sizes = [1, 16, 6], strides = [1, 1, 1]} : vector<8x16x6xf32> to vector<1x16x6xf32>
    %287 = vector.shape_cast %286 : vector<1x16x6xf32> to vector<16x6xf32>
    %cst_87 = arith.constant dense<0.000000e+00> : vector<6x6xf32>
    %288 = tpu.matmul %12, %287, %cst_87 {dimension_numbers = #tpu.dot_dimension_numbers<[1], [0], [0], [1], [0, 0, 1, 1], [], []>} : vector<6x16xf32>, vector<16x6xf32>, vector<6x6xf32> -> vector<6x6xf32>
    %289 = vector.extract_strided_slice %18 {offsets = [6, 0, 0], sizes = [1, 16, 6], strides = [1, 1, 1]} : vector<8x16x6xf32> to vector<1x16x6xf32>
    %290 = vector.shape_cast %289 : vector<1x16x6xf32> to vector<16x6xf32>
    %cst_88 = arith.constant dense<0.000000e+00> : vector<6x6xf32>
    %291 = tpu.matmul %12, %290, %cst_88 {dimension_numbers = #tpu.dot_dimension_numbers<[1], [0], [0], [1], [0, 0, 1, 1], [], []>} : vector<6x16xf32>, vector<16x6xf32>, vector<6x6xf32> -> vector<6x6xf32>
    %292 = vector.extract_strided_slice %21 {offsets = [6, 0, 0], sizes = [1, 16, 6], strides = [1, 1, 1]} : vector<8x16x6xf32> to vector<1x16x6xf32>
    %293 = vector.shape_cast %292 : vector<1x16x6xf32> to vector<16x6xf32>
    %cst_89 = arith.constant dense<0.000000e+00> : vector<6x6xf32>
    %294 = tpu.matmul %12, %293, %cst_89 {dimension_numbers = #tpu.dot_dimension_numbers<[1], [0], [0], [1], [0, 0, 1, 1], [], []>} : vector<6x16xf32>, vector<16x6xf32>, vector<6x6xf32> -> vector<6x6xf32>
    %295 = vector.extract_strided_slice %24 {offsets = [6, 0, 0], sizes = [1, 16, 6], strides = [1, 1, 1]} : vector<8x16x6xf32> to vector<1x16x6xf32>
    %296 = vector.shape_cast %295 : vector<1x16x6xf32> to vector<16x6xf32>
    %cst_90 = arith.constant dense<0.000000e+00> : vector<6x6xf32>
    %297 = tpu.matmul %12, %296, %cst_90 {dimension_numbers = #tpu.dot_dimension_numbers<[1], [0], [0], [1], [0, 0, 1, 1], [], []>} : vector<6x16xf32>, vector<16x6xf32>, vector<6x6xf32> -> vector<6x6xf32>
    %298 = vector.extract_strided_slice %27 {offsets = [6, 0, 0], sizes = [1, 16, 6], strides = [1, 1, 1]} : vector<8x16x6xf32> to vector<1x16x6xf32>
    %299 = vector.shape_cast %298 : vector<1x16x6xf32> to vector<16x6xf32>
    %cst_91 = arith.constant dense<0.000000e+00> : vector<6x6xf32>
    %300 = tpu.matmul %12, %299, %cst_91 {dimension_numbers = #tpu.dot_dimension_numbers<[1], [0], [0], [1], [0, 0, 1, 1], [], []>} : vector<6x16xf32>, vector<16x6xf32>, vector<6x6xf32> -> vector<6x6xf32>
    %301 = arith.mulf %288, %288 : vector<6x6xf32>
    %302 = arith.mulf %291, %291 : vector<6x6xf32>
    %303 = arith.mulf %288, %291 : vector<6x6xf32>
    %304 = arith.subf %294, %301 : vector<6x6xf32>
    %305 = arith.subf %297, %302 : vector<6x6xf32>
    %306 = arith.subf %300, %303 : vector<6x6xf32>
    %cst_92 = arith.constant 2.000000e+00 : f32
    %307 = vector.broadcast %cst_92 : f32 to vector<6x6xf32>
    %308 = arith.mulf %307, %303 : vector<6x6xf32>
    %cst_93 = arith.constant 9.99999974E-5 : f32
    %309 = vector.broadcast %cst_93 : f32 to vector<6x6xf32>
    %310 = arith.addf %308, %309 : vector<6x6xf32>
    %cst_94 = arith.constant 2.000000e+00 : f32
    %311 = vector.broadcast %cst_94 : f32 to vector<6x6xf32>
    %312 = arith.mulf %311, %306 : vector<6x6xf32>
    %cst_95 = arith.constant 8.99999984E-4 : f32
    %313 = vector.broadcast %cst_95 : f32 to vector<6x6xf32>
    %314 = arith.addf %312, %313 : vector<6x6xf32>
    %315 = arith.mulf %310, %314 : vector<6x6xf32>
    %316 = arith.addf %301, %302 : vector<6x6xf32>
    %cst_96 = arith.constant 9.99999974E-5 : f32
    %317 = vector.broadcast %cst_96 : f32 to vector<6x6xf32>
    %318 = arith.addf %316, %317 : vector<6x6xf32>
    %319 = arith.addf %304, %305 : vector<6x6xf32>
    %cst_97 = arith.constant 8.99999984E-4 : f32
    %320 = vector.broadcast %cst_97 : f32 to vector<6x6xf32>
    %321 = arith.addf %319, %320 : vector<6x6xf32>
    %322 = arith.mulf %318, %321 : vector<6x6xf32>
    %323 = arith.divf %315, %322 : vector<6x6xf32>
    %324 = vector.shape_cast %323 : vector<6x6xf32> to vector<1x6x6xf32>
    %cst_98 = arith.constant dense<0.000000e+00> : vector<1xf32>
    %325 = vector.multi_reduction <add>, %324, %cst_98 [1, 2] : vector<1x6x6xf32> to vector<1xf32>
    %326 = vector.shape_cast %325 : vector<1xf32> to vector<1x1x1xf32>
    %327 = vector.extract %326[0, 0, 0] : f32 from vector<1x1x1xf32>
    %328 = arith.addf %285, %327 : f32
    %329 = vector.extract_strided_slice %15 {offsets = [7, 0, 0], sizes = [1, 16, 6], strides = [1, 1, 1]} : vector<8x16x6xf32> to vector<1x16x6xf32>
    %330 = vector.shape_cast %329 : vector<1x16x6xf32> to vector<16x6xf32>
    %cst_99 = arith.constant dense<0.000000e+00> : vector<6x6xf32>
    %331 = tpu.matmul %12, %330, %cst_99 {dimension_numbers = #tpu.dot_dimension_numbers<[1], [0], [0], [1], [0, 0, 1, 1], [], []>} : vector<6x16xf32>, vector<16x6xf32>, vector<6x6xf32> -> vector<6x6xf32>
    %332 = vector.extract_strided_slice %18 {offsets = [7, 0, 0], sizes = [1, 16, 6], strides = [1, 1, 1]} : vector<8x16x6xf32> to vector<1x16x6xf32>
    %333 = vector.shape_cast %332 : vector<1x16x6xf32> to vector<16x6xf32>
    %cst_100 = arith.constant dense<0.000000e+00> : vector<6x6xf32>
    %334 = tpu.matmul %12, %333, %cst_100 {dimension_numbers = #tpu.dot_dimension_numbers<[1], [0], [0], [1], [0, 0, 1, 1], [], []>} : vector<6x16xf32>, vector<16x6xf32>, vector<6x6xf32> -> vector<6x6xf32>
    %335 = vector.extract_strided_slice %21 {offsets = [7, 0, 0], sizes = [1, 16, 6], strides = [1, 1, 1]} : vector<8x16x6xf32> to vector<1x16x6xf32>
    %336 = vector.shape_cast %335 : vector<1x16x6xf32> to vector<16x6xf32>
    %cst_101 = arith.constant dense<0.000000e+00> : vector<6x6xf32>
    %337 = tpu.matmul %12, %336, %cst_101 {dimension_numbers = #tpu.dot_dimension_numbers<[1], [0], [0], [1], [0, 0, 1, 1], [], []>} : vector<6x16xf32>, vector<16x6xf32>, vector<6x6xf32> -> vector<6x6xf32>
    %338 = vector.extract_strided_slice %24 {offsets = [7, 0, 0], sizes = [1, 16, 6], strides = [1, 1, 1]} : vector<8x16x6xf32> to vector<1x16x6xf32>
    %339 = vector.shape_cast %338 : vector<1x16x6xf32> to vector<16x6xf32>
    %cst_102 = arith.constant dense<0.000000e+00> : vector<6x6xf32>
    %340 = tpu.matmul %12, %339, %cst_102 {dimension_numbers = #tpu.dot_dimension_numbers<[1], [0], [0], [1], [0, 0, 1, 1], [], []>} : vector<6x16xf32>, vector<16x6xf32>, vector<6x6xf32> -> vector<6x6xf32>
    %341 = vector.extract_strided_slice %27 {offsets = [7, 0, 0], sizes = [1, 16, 6], strides = [1, 1, 1]} : vector<8x16x6xf32> to vector<1x16x6xf32>
    %342 = vector.shape_cast %341 : vector<1x16x6xf32> to vector<16x6xf32>
    %cst_103 = arith.constant dense<0.000000e+00> : vector<6x6xf32>
    %343 = tpu.matmul %12, %342, %cst_103 {dimension_numbers = #tpu.dot_dimension_numbers<[1], [0], [0], [1], [0, 0, 1, 1], [], []>} : vector<6x16xf32>, vector<16x6xf32>, vector<6x6xf32> -> vector<6x6xf32>
    %344 = arith.mulf %331, %331 : vector<6x6xf32>
    %345 = arith.mulf %334, %334 : vector<6x6xf32>
    %346 = arith.mulf %331, %334 : vector<6x6xf32>
    %347 = arith.subf %337, %344 : vector<6x6xf32>
    %348 = arith.subf %340, %345 : vector<6x6xf32>
    %349 = arith.subf %343, %346 : vector<6x6xf32>
    %cst_104 = arith.constant 2.000000e+00 : f32
    %350 = vector.broadcast %cst_104 : f32 to vector<6x6xf32>
    %351 = arith.mulf %350, %346 : vector<6x6xf32>
    %cst_105 = arith.constant 9.99999974E-5 : f32
    %352 = vector.broadcast %cst_105 : f32 to vector<6x6xf32>
    %353 = arith.addf %351, %352 : vector<6x6xf32>
    %cst_106 = arith.constant 2.000000e+00 : f32
    %354 = vector.broadcast %cst_106 : f32 to vector<6x6xf32>
    %355 = arith.mulf %354, %349 : vector<6x6xf32>
    %cst_107 = arith.constant 8.99999984E-4 : f32
    %356 = vector.broadcast %cst_107 : f32 to vector<6x6xf32>
    %357 = arith.addf %355, %356 : vector<6x6xf32>
    %358 = arith.mulf %353, %357 : vector<6x6xf32>
    %359 = arith.addf %344, %345 : vector<6x6xf32>
    %cst_108 = arith.constant 9.99999974E-5 : f32
    %360 = vector.broadcast %cst_108 : f32 to vector<6x6xf32>
    %361 = arith.addf %359, %360 : vector<6x6xf32>
    %362 = arith.addf %347, %348 : vector<6x6xf32>
    %cst_109 = arith.constant 8.99999984E-4 : f32
    %363 = vector.broadcast %cst_109 : f32 to vector<6x6xf32>
    %364 = arith.addf %362, %363 : vector<6x6xf32>
    %365 = arith.mulf %361, %364 : vector<6x6xf32>
    %366 = arith.divf %358, %365 : vector<6x6xf32>
    %367 = vector.shape_cast %366 : vector<6x6xf32> to vector<1x6x6xf32>
    %cst_110 = arith.constant dense<0.000000e+00> : vector<1xf32>
    %368 = vector.multi_reduction <add>, %367, %cst_110 [1, 2] : vector<1x6x6xf32> to vector<1xf32>
    %369 = vector.shape_cast %368 : vector<1xf32> to vector<1x1x1xf32>
    %370 = vector.extract %369[0, 0, 0] : f32 from vector<1x1x1xf32>
    %371 = arith.addf %328, %370 : f32
    %c0_111 = arith.constant 0 : index
    %c0_112 = arith.constant 0 : index
    %372 = memref.load %arg5[%c0_111, %c0_112] : memref<1x2xf32, #tpu.memory_space<smem>>
    memref.store %371, %arg5[%c0_111, %c0_112] : memref<1x2xf32, #tpu.memory_space<smem>>
    %c0_113 = arith.constant 0 : index
    %c1 = arith.constant 1 : index
    %373 = memref.load %arg5[%c0_113, %c1] : memref<1x2xf32, #tpu.memory_space<smem>>
    memref.store %7, %arg5[%c0_113, %c1] : memref<1x2xf32, #tpu.memory_space<smem>>
    return
  }
  func.func @transform_0(%arg0: i32) -> (i32, i32, i32) {
    %c0_i32 = arith.constant 0 : i32
    %c0_i32_0 = arith.constant 0 : i32
    %c0_i32_1 = arith.constant 0 : i32
    return %arg0, %c0_i32, %c0_i32_0 : i32, i32, i32
  }
  func.func @transform_1(%arg0: i32) -> (i32, i32, i32) {
    %c0_i32 = arith.constant 0 : i32
    %c0_i32_0 = arith.constant 0 : i32
    %c0_i32_1 = arith.constant 0 : i32
    return %arg0, %c0_i32, %c0_i32_0 : i32, i32, i32
  }
  func.func @transform_2(%arg0: i32) -> (i32, i32) {
    %c0_i32 = arith.constant 0 : i32
    %c0_i32_0 = arith.constant 0 : i32
    %c0_i32_1 = arith.constant 0 : i32
    return %c0_i32, %c0_i32_0 : i32, i32
  }
  func.func @transform_3(%arg0: i32) -> (i32, i32) {
    %c0_i32 = arith.constant 0 : i32
    %c0_i32_0 = arith.constant 0 : i32
    %c0_i32_1 = arith.constant 0 : i32
    return %c0_i32, %c0_i32_0 : i32, i32
  }
  func.func @transform_4(%arg0: i32) -> (i32, i32) {
    %c0_i32 = arith.constant 0 : i32
    %c0_i32_0 = arith.constant 0 : i32
    return %arg0, %c0_i32 : i32, i32
  }
}

</mosaic_0001>

<llo_original>
// kernel: tpu_custom_call.1
$region0: #{tpu_custom_call.1}
  #allocation0 [shape = 'u32[]', space=smem, size = 0x4, offset = 0x4, fixed_abs, tag = 'smem constant byte address 0x4 - core index']
  #allocation1 [shape = 'u32[144,128]{1,0:T(1,128)}', space=vmem, size = 0x12000, scoped, tag = 'internal scratch']
  %s0 = inlined_call_operand.hbm [shape: f32[8,16,16], index: 0, kind: input, shape index: {}]
  %s1 = inlined_call_operand.hbm [shape: f32[8,16,16], index: 1, kind: input, shape index: {}]
  %s2 = inlined_call_operand.vmem [shape: f32[16,6], index: 2, kind: input, shape index: {}]
  %s3 = inlined_call_operand.vmem [shape: f32[6,16], index: 3, kind: input, shape index: {}]
  %s4 = inlined_call_operand.hbm [shape: f32[1,2], index: 4, kind: output, shape index: {}]
  %s5 = sld [smem:[#allocation0]]
  $region34: #{tpu_custom_call.1} parent=0
    _
  %s7 = ssub.s32 1, %s5
  %s8 = scalar_select 0, %s7, %s5
  $region1: #{tpu_custom_call.1} parent=0
    #allocation2 [shape = 'u8[65536]{0}', space=vmem, size = 0x10000, scoped, tag = 'input window, operand 0, single buffered']
    #allocation3 [shape = 's32[1]{0}', space=sflag, size = 0x4, scoped, tag = 'scoped memory for tpu_custom_call.1']
    #allocation4 [shape = 's32[1]{0}', space=sflag, size = 0x4, scoped, tag = 'scoped memory for tpu_custom_call.1']
    #allocation5 [shape = 'u8[65536]{0}', space=vmem, size = 0x10000, scoped, tag = 'input window, operand 1, single buffered']
    #allocation6 [shape = 's32[1]{0}', space=sflag, size = 0x4, scoped, tag = 'scoped memory for tpu_custom_call.1']
    #allocation7 [shape = 'u8[512]{0}', space=smem, size = 0x200, scoped, tag = 'output window, operand 0, single buffered']
    %9 = vsyncpa [#allocation3], 0
    %10 = vsyncpa [#allocation6], 0
    %11 = vsyncpa [#allocation4], 0
    // Predicated region
    $region2: #{tpu_custom_call.1} parent=1 // pred_check
      _
    $region3: #{tpu_custom_call.1} parent=1 // pred_check_branch
      %13 = sbr.rel (0) target = $region5
    $region4: #{tpu_custom_call.1} parent=1 // pred_region
      %s15 = ssub.s32 2048, 2048
      %16 = vsyncadd [#allocation3], %s15
      %s17 = sshll.u32 [#allocation2], 4
      %s18 = int_to_ptr.vmem [resolvable:$true] %s17
      %23 = dma.hbm_to_vmem [thread:$0]  %s0, 2048, %s18, [#allocation3], 128, 128, 8
    $region5: #{tpu_custom_call.1} parent=1 // pred_fallthru
      _
    // Predicated region
    $region6: #{tpu_custom_call.1} parent=1 // pred_check
      _
    $region7: #{tpu_custom_call.1} parent=1 // pred_check_branch
      %25 = sbr.rel (0) target = $region9
    $region8: #{tpu_custom_call.1} parent=1 // pred_region
      %s27 = ssub.s32 2048, 2048
      %28 = vsyncadd [#allocation6], %s27
      %s29 = sshll.u32 [#allocation5], 4
      %s30 = int_to_ptr.vmem [resolvable:$true] %s29
      %35 = dma.hbm_to_vmem [thread:$0]  %s1, 2048, %s30, [#allocation6], 128, 128, 8
    $region9: #{tpu_custom_call.1} parent=1 // pred_fallthru
      _
    // Predicated region
    $region10: #{tpu_custom_call.1} parent=1 // pred_check
      _
    $region11: #{tpu_custom_call.1} parent=1 // pred_check_branch
      %37 = sbr.rel (0) target = $region13
    $region12: #{tpu_custom_call.1} parent=1 // pred_region
      _
    $region13: #{tpu_custom_call.1} parent=1 // pred_fallthru
      _
    // Predicated region
    $region14: #{tpu_custom_call.1} parent=1 // pred_check
      _
    $region15: #{tpu_custom_call.1} parent=1 // pred_check_branch
      %39 = sbr.rel (0) target = $region17
    $region16: #{tpu_custom_call.1} parent=1 // pred_region
      _
    $region17: #{tpu_custom_call.1} parent=1 // pred_fallthru
      _
    // Predicated region
    $region18: #{tpu_custom_call.1} parent=1 // pred_check
      _
    $region19: #{tpu_custom_call.1} parent=1 // pred_check_branch
      %41 = sbr.rel (0) target = $region21
    $region20: #{tpu_custom_call.1} parent=1 // pred_region
      %42 = dma.done [#allocation3], 2048
    $region21: #{tpu_custom_call.1} parent=1 // pred_fallthru
      _
    // Predicated region
    $region22: #{tpu_custom_call.1} parent=1 // pred_check
      _
    $region23: #{tpu_custom_call.1} parent=1 // pred_check_branch
      %44 = sbr.rel (0) target = $region25
    $region24: #{tpu_custom_call.1} parent=1 // pred_region
      %45 = dma.done [#allocation6], 2048
    $region25: #{tpu_custom_call.1} parent=1 // pred_fallthru
      _
    %v46 = vld [vmem:[#allocation2] sm:$0xff]
    %v47 = vld [vmem:[#allocation2 + $0x8] sm:$0xff]
    %v48 = vld [vmem:[#allocation2 + $0x10] sm:$0xff]
    %v49 = vld [vmem:[#allocation2 + $0x18] sm:$0xff]
    %v50 = vld [vmem:[#allocation2 + $0x20] sm:$0xff]
    %v51 = vld [vmem:[#allocation2 + $0x28] sm:$0xff]
    %v52 = vld [vmem:[#allocation2 + $0x30] sm:$0xff]
    %v53 = vld [vmem:[#allocation2 + $0x38] sm:$0xff]
    %v54 = vld [vmem:[#allocation2 + $0x40] sm:$0xff]
    %v55 = vld [vmem:[#allocation2 + $0x48] sm:$0xff]
    %v56 = vld [vmem:[#allocation2 + $0x50] sm:$0xff]
    %v57 = vld [vmem:[#allocation2 + $0x58] sm:$0xff]
    %v58 = vld [vmem:[#allocation2 + $0x60] sm:$0xff]
    %v59 = vld [vmem:[#allocation2 + $0x68] sm:$0xff]
    %v60 = vld [vmem:[#allocation2 + $0x70] sm:$0xff]
    %v61 = vld [vmem:[#allocation2 + $0x78] sm:$0xff]
    %v62 = vld [vmem:[#allocation5] sm:$0xff]
    %v63 = vld [vmem:[#allocation5 + $0x8] sm:$0xff]
    %v64 = vld [vmem:[#allocation5 + $0x10] sm:$0xff]
    %v65 = vld [vmem:[#allocation5 + $0x18] sm:$0xff]
    %v66 = vld [vmem:[#allocation5 + $0x20] sm:$0xff]
    %v67 = vld [vmem:[#allocation5 + $0x28] sm:$0xff]
    %v68 = vld [vmem:[#allocation5 + $0x30] sm:$0xff]
    %v69 = vld [vmem:[#allocation5 + $0x38] sm:$0xff]
    %v70 = vld [vmem:[#allocation5 + $0x40] sm:$0xff]
    %v71 = vld [vmem:[#allocation5 + $0x48] sm:$0xff]
    %v72 = vld [vmem:[#allocation5 + $0x50] sm:$0xff]
    %v73 = vld [vmem:[#allocation5 + $0x58] sm:$0xff]
    %v74 = vld [vmem:[#allocation5 + $0x60] sm:$0xff]
    %v75 = vld [vmem:[#allocation5 + $0x68] sm:$0xff]
    %v76 = vld [vmem:[#allocation5 + $0x70] sm:$0xff]
    %v77 = vld [vmem:[#allocation5 + $0x78] sm:$0xff]
    %v78 = vsub.f32 %v46, %v62
    %v79 = vsub.f32 %v47, %v63
    %v80 = vsub.f32 %v48, %v64
    %v81 = vsub.f32 %v49, %v65
    %v82 = vsub.f32 %v50, %v66
    %v83 = vsub.f32 %v51, %v67
    %v84 = vsub.f32 %v52, %v68
    %v85 = vsub.f32 %v53, %v69
    %v86 = vsub.f32 %v54, %v70
    %v87 = vsub.f32 %v55, %v71
    %v88 = vsub.f32 %v56, %v72
    %v89 = vsub.f32 %v57, %v73
    %v90 = vsub.f32 %v58, %v74
    %v91 = vsub.f32 %v59, %v75
    %v92 = vsub.f32 %v60, %v76
    %v93 = vsub.f32 %v61, %v77
    %v94 = vmul.f32 %v78, %v78
    %v95 = vmul.f32 %v79, %v79
    %v96 = vmul.f32 %v80, %v80
    %v97 = vmul.f32 %v81, %v81
    %v98 = vmul.f32 %v82, %v82
    %v99 = vmul.f32 %v83, %v83
    %v100 = vmul.f32 %v84, %v84
    %v101 = vmul.f32 %v85, %v85
    %v102 = vmul.f32 %v86, %v86
    %v103 = vmul.f32 %v87, %v87
    %v104 = vmul.f32 %v88, %v88
    %v105 = vmul.f32 %v89, %v89
    %v106 = vmul.f32 %v90, %v90
    %v107 = vmul.f32 %v91, %v91
    %v108 = vmul.f32 %v92, %v92
    %v109 = vmul.f32 %v93, %v93
    %vm110 = vcmask 130048
    %v111 = vsel %vm110, %v94, 0.0
    %v112 = vsel %vm110, %v95, 0.0
    %v113 = vadd.f32 %v111, %v112
    %v114 = vsel %vm110, %v96, 0.0
    %v115 = vadd.f32 %v113, %v114
    %v116 = vsel %vm110, %v97, 0.0
    %v117 = vadd.f32 %v115, %v116
    %v118 = vsel %vm110, %v98, 0.0
    %v119 = vadd.f32 %v117, %v118
    %v120 = vsel %vm110, %v99, 0.0
    %v121 = vadd.f32 %v119, %v120
    %v122 = vsel %vm110, %v100, 0.0
    %v123 = vadd.f32 %v121, %v122
    %v124 = vsel %vm110, %v101, 0.0
    %v125 = vadd.f32 %v123, %v124
    %v126 = vsel %vm110, %v102, 0.0
    %v127 = vadd.f32 %v125, %v126
    %v128 = vsel %vm110, %v103, 0.0
    %v129 = vadd.f32 %v127, %v128
    %v130 = vsel %vm110, %v104, 0.0
    %v131 = vadd.f32 %v129, %v130
    %v132 = vsel %vm110, %v105, 0.0
    %v133 = vadd.f32 %v131, %v132
    %v134 = vsel %vm110, %v106, 0.0
    %v135 = vadd.f32 %v133, %v134
    %v136 = vsel %vm110, %v107, 0.0
    %v137 = vadd.f32 %v135, %v136
    %v138 = vsel %vm110, %v108, 0.0
    %v139 = vadd.f32 %v137, %v138
    %v140 = vsel %vm110, %v109, 0.0
    %v141 = vadd.f32 %v139, %v140
    %142 = vadd.xlane.f32.xlu0 %v141
    %v143 = vpop.xlane.xlu0 %142
    %v144 = vrot.slane %v143, 4
    %v145 = vadd.f32 %v143, %v144
    %v146 = vrot.slane %v145, 2
    %v147 = vadd.f32 %v145, %v146
    %v148 = vrot.slane %v147, 1
    %v149 = vadd.f32 %v147, %v148
    %s150 = vtos %v149
    %v151 = vmul.f32 %v46, %v46
    %v152 = vmul.f32 %v47, %v47
    %v153 = vmul.f32 %v48, %v48
    %v154 = vmul.f32 %v49, %v49
    %v155 = vmul.f32 %v50, %v50
    %v156 = vmul.f32 %v51, %v51
    %v157 = vmul.f32 %v52, %v52
    %v158 = vmul.f32 %v53, %v53
    %v159 = vmul.f32 %v54, %v54
    %v160 = vmul.f32 %v55, %v55
    %v161 = vmul.f32 %v56, %v56
    %v162 = vmul.f32 %v57, %v57
    %v163 = vmul.f32 %v58, %v58
    %v164 = vmul.f32 %v59, %v59
    %v165 = vmul.f32 %v60, %v60
    %v166 = vmul.f32 %v61, %v61
    %v167 = vmul.f32 %v62, %v62
    %v168 = vmul.f32 %v63, %v63
    %v169 = vmul.f32 %v64, %v64
    %v170 = vmul.f32 %v65, %v65
    %v171 = vmul.f32 %v66, %v66
    %v172 = vmul.f32 %v67, %v67
    %v173 = vmul.f32 %v68, %v68
    %v174 = vmul.f32 %v69, %v69
    %v175 = vmul.f32 %v70, %v70
    %v176 = vmul.f32 %v71, %v71
    %v177 = vmul.f32 %v72, %v72
    %v178 = vmul.f32 %v73, %v73
    %v179 = vmul.f32 %v74, %v74
    %v180 = vmul.f32 %v75, %v75
    %v181 = vmul.f32 %v76, %v76
    %v182 = vmul.f32 %v77, %v77
    %v183 = vmul.f32 %v46, %v62
    %v184 = vmul.f32 %v47, %v63
    %v185 = vmul.f32 %v48, %v64
    %v186 = vmul.f32 %v49, %v65
    %v187 = vmul.f32 %v50, %v66
    %v188 = vmul.f32 %v51, %v67
    %v189 = vmul.f32 %v52, %v68
    %v190 = vmul.f32 %v53, %v69
    %v191 = vmul.f32 %v54, %v70
    %v192 = vmul.f32 %v55, %v71
    %v193 = vmul.f32 %v56, %v72
    %v194 = vmul.f32 %v57, %v73
    %v195 = vmul.f32 %v58, %v74
    %v196 = vmul.f32 %v59, %v75
    %v197 = vmul.f32 %v60, %v76
    %v198 = vmul.f32 %v61, %v77
    %v199 = vld [vmem:[%s2] sm:$0xff]
    %v200 = vld [vmem:[%s2 + $0x8] sm:$0xff]
    %v201 = vld [vmem:[%s3] sm:$0x3f]
    %v203 = vsel %vm110, %v46, 0
    %v206 = vsel %vm110, %v47, 0
    %v209 = vsel %vm110, %v48, 0
    %v212 = vsel %vm110, %v49, 0
    %v215 = vsel %vm110, %v50, 0
    %v218 = vsel %vm110, %v51, 0
    %v221 = vsel %vm110, %v52, 0
    %v224 = vsel %vm110, %v53, 0
    %v227 = vsel %vm110, %v54, 0
    %v230 = vsel %vm110, %v55, 0
    %v233 = vsel %vm110, %v56, 0
    %v236 = vsel %vm110, %v57, 0
    %v239 = vsel %vm110, %v58, 0
    %v242 = vsel %vm110, %v59, 0
    %v245 = vsel %vm110, %v60, 0
    %v248 = vsel %vm110, %v61, 0
    %250 = vmatprep.subr.mxu0 0.0
    %251 = vmatpush1.msra.mxu0 0.0
    %252 = vmatprep.subr.mxu0 0.0
    %253 = vmatpush1.msra.mxu0 0.0
    %254 = vmatprep.subr.mxu0 0.0
    %255 = vmatpush1.msra.mxu0 0.0
    %256 = vmatprep.subr.mxu0 0.0
    %257 = vmatpush1.msra.mxu0 0.0
    %258 = vmatprep.subr.mxu0 0.0
    %259 = vmatpush1.msra.mxu0 0.0
    %260 = vmatprep.subr.mxu0 0.0
    %261 = vmatpush1.msra.mxu0 0.0
    %262 = vmatprep.subr.mxu0 0.0
    %263 = vmatpush1.msra.mxu0 0.0
    %264 = vmatprep.subr.mxu0 0.0
    %265 = vmatpush1.msra.mxu0 0.0
    %266 = vmatprep.subr.mxu0 0.0
    %267 = vmatpush1.msra.mxu0 0.0
    %268 = vmatprep.subr.mxu0 0.0
    %269 = vmatpush1.msra.mxu0 0.0
    %270 = vmatprep.subr.mxu0 0.0
    %271 = vmatpush1.msra.mxu0 0.0
    %272 = vmatprep.subr.mxu0 0.0
    %273 = vmatpush1.msra.mxu0 0.0
    %274 = vmatprep.subr.mxu0 0.0
    %275 = vmatpush1.msra.mxu0 0.0
    %276 = vmatprep.subr.mxu0 0.0
    %277 = vmatpush1.msra.mxu0 0.0
    %278 = vmatprep.subr.mxu0 0.0
    %279 = vmatpush1.msra.mxu0 %v200
    %280 = vmatprep.subr.mxu0 0.0
    %281 = vmatpush1.msra.mxu0 %v199
    %282 = vmatprep.subr.mxu0 0.0
    %283 = vmatpush2.msra.mxu0 0.0
    %284 = vmatprep.subr.mxu0 0.0
    %285 = vmatpush2.msra.mxu0 0.0
    %286 = vmatprep.subr.mxu0 0.0
    %287 = vmatpush2.msra.mxu0 0.0
    %288 = vmatprep.subr.mxu0 0.0
    %289 = vmatpush2.msra.mxu0 0.0
    %290 = vmatprep.subr.mxu0 0.0
    %291 = vmatpush2.msra.mxu0 0.0
    %292 = vmatprep.subr.mxu0 0.0
    %293 = vmatpush2.msra.mxu0 0.0
    %294 = vmatprep.subr.mxu0 0.0
    %295 = vmatpush2.msra.mxu0 0.0
    %296 = vmatprep.subr.mxu0 0.0
    %297 = vmatpush2.msra.mxu0 0.0
    %298 = vmatprep.subr.mxu0 0.0
    %299 = vmatpush2.msra.mxu0 0.0
    %300 = vmatprep.subr.mxu0 0.0
    %301 = vmatpush2.msra.mxu0 0.0
    %302 = vmatprep.subr.mxu0 0.0
    %303 = vmatpush2.msra.mxu0 0.0
    %304 = vmatprep.subr.mxu0 0.0
    %305 = vmatpush2.msra.mxu0 0.0
    %306 = vmatprep.subr.mxu0 0.0
    %307 = vmatpush2.msra.mxu0 0.0
    %308 = vmatprep.subr.mxu0 0.0
    %309 = vmatpush2.msra.mxu0 0.0
    %310 = vmatprep.subr.mxu0 0.0
    %311 = vmatpush2.msra.mxu0 0.0
    %312 = vmatprep.subr.mxu0 0.0
    %313 = vmatpush2.msra.mxu0 0.0
    %314 = vmatprep.mubr.f32.mxu0 0.0
    %315 = vmatmul.mubr.f32.gmra.mxu0 %v203
    %v316 = vpop.f32.mrf.mxu0
    %v317 = vadd.f32 0.0, %v316
    %v318 = vpop.f32.mrf.mxu0
    %319 = vmatprep.mubr.f32.mxu0 0.0
    %320 = vmatmul.mubr.f32.gmra.mxu0 %v206
    %v321 = vpop.f32.mrf.mxu0
    %v322 = vadd.f32 0.0, %v321
    %v323 = vpop.f32.mrf.mxu0
    %324 = vmatprep.mubr.f32.mxu0 0.0
    %325 = vmatmul.mubr.f32.gmra.mxu0 %v209
    %v326 = vpop.f32.mrf.mxu0
    %v327 = vadd.f32 0.0, %v326
    %v328 = vpop.f32.mrf.mxu0
    %329 = vmatprep.mubr.f32.mxu0 0.0
    %330 = vmatmul.mubr.f32.gmra.mxu0 %v212
    %v331 = vpop.f32.mrf.mxu0
    %v332 = vadd.f32 0.0, %v331
    %v333 = vpop.f32.mrf.mxu0
    %334 = vmatprep.mubr.f32.mxu0 0.0
    %335 = vmatmul.mubr.f32.gmra.mxu0 %v215
    %v336 = vpop.f32.mrf.mxu0
    %v337 = vadd.f32 0.0, %v336
    %v338 = vpop.f32.mrf.mxu0
    %339 = vmatprep.mubr.f32.mxu0 0.0
    %340 = vmatmul.mubr.f32.gmra.mxu0 %v218
    %v341 = vpop.f32.mrf.mxu0
    %v342 = vadd.f32 0.0, %v341
    %v343 = vpop.f32.mrf.mxu0
    %344 = vmatprep.mubr.f32.mxu0 0.0
    %345 = vmatmul.mubr.f32.gmra.mxu0 %v221
    %v346 = vpop.f32.mrf.mxu0
    %v347 = vadd.f32 0.0, %v346
    %v348 = vpop.f32.mrf.mxu0
    %349 = vmatprep.mubr.f32.mxu0 0.0
    %350 = vmatmul.mubr.f32.gmra.mxu0 %v224
    %v351 = vpop.f32.mrf.mxu0
    %v352 = vadd.f32 0.0, %v351
    %v353 = vpop.f32.mrf.mxu0
    %354 = vmatprep.mubr.f32.mxu0 0.0
    %355 = vmatmul.mubr.f32.gmra.mxu0 %v227
    %v356 = vpop.f32.mrf.mxu0
    %v357 = vadd.f32 0.0, %v356
    %v358 = vpop.f32.mrf.mxu0
    %359 = vmatprep.mubr.f32.mxu0 0.0
    %360 = vmatmul.mubr.f32.gmra.mxu0 %v230
    %v361 = vpop.f32.mrf.mxu0
    %v362 = vadd.f32 0.0, %v361
    %v363 = vpop.f32.mrf.mxu0
    %364 = vmatprep.mubr.f32.mxu0 0.0
    %365 = vmatmul.mubr.f32.gmra.mxu0 %v233
    %v366 = vpop.f32.mrf.mxu0
    %v367 = vadd.f32 0.0, %v366
    %v368 = vpop.f32.mrf.mxu0
    %369 = vmatprep.mubr.f32.mxu0 0.0
    %370 = vmatmul.mubr.f32.gmra.mxu0 %v236
    %v371 = vpop.f32.mrf.mxu0
    %v372 = vadd.f32 0.0, %v371
    %v373 = vpop.f32.mrf.mxu0
    %374 = vmatprep.mubr.f32.mxu0 0.0
    %375 = vmatmul.mubr.f32.gmra.mxu0 %v239
    %v376 = vpop.f32.mrf.mxu0
    %v377 = vadd.f32 0.0, %v376
    %v378 = vpop.f32.mrf.mxu0
    %379 = vmatprep.mubr.f32.mxu0 0.0
    %380 = vmatmul.mubr.f32.gmra.mxu0 %v242
    %v381 = vpop.f32.mrf.mxu0
    %v382 = vadd.f32 0.0, %v381
    %v383 = vpop.f32.mrf.mxu0
    %384 = vmatprep.mubr.f32.mxu0 0.0
    %385 = vmatmul.mubr.f32.gmra.mxu0 %v245
    %v386 = vpop.f32.mrf.mxu0
    %v387 = vadd.f32 0.0, %v386
    %v388 = vpop.f32.mrf.mxu0
    %389 = vmatprep.mubr.f32.mxu0 0.0
    %390 = vmatmul.mubr.f32.gmra.mxu0 %v248
    %v391 = vpop.f32.mrf.mxu0
    %v392 = vadd.f32 0.0, %v391
    %v393 = vpop.f32.mrf.mxu0
    %394 = vdwg.mxu0
    %v396 = vsel %vm110, %v62, 0
    %v399 = vsel %vm110, %v63, 0
    %v402 = vsel %vm110, %v64, 0
    %v405 = vsel %vm110, %v65, 0
    %v408 = vsel %vm110, %v66, 0
    %v411 = vsel %vm110, %v67, 0
    %v414 = vsel %vm110, %v68, 0
    %v417 = vsel %vm110, %v69, 0
    %v420 = vsel %vm110, %v70, 0
    %v423 = vsel %vm110, %v71, 0
    %v426 = vsel %vm110, %v72, 0
    %v429 = vsel %vm110, %v73, 0
    %v432 = vsel %vm110, %v74, 0
    %v435 = vsel %vm110, %v75, 0
    %v438 = vsel %vm110, %v76, 0
    %v441 = vsel %vm110, %v77, 0
    %443 = vmatprep.subr.mxu0 0.0
    %444 = vmatpush1.msra.mxu0 0.0
    %445 = vmatprep.subr.mxu0 0.0
    %446 = vmatpush1.msra.mxu0 0.0
    %447 = vmatprep.subr.mxu0 0.0
    %448 = vmatpush1.msra.mxu0 0.0
    %449 = vmatprep.subr.mxu0 0.0
    %450 = vmatpush1.msra.mxu0 0.0
    %451 = vmatprep.subr.mxu0 0.0
    %452 = vmatpush1.msra.mxu0 0.0
    %453 = vmatprep.subr.mxu0 0.0
    %454 = vmatpush1.msra.mxu0 0.0
    %455 = vmatprep.subr.mxu0 0.0
    %456 = vmatpush1.msra.mxu0 0.0
    %457 = vmatprep.subr.mxu0 0.0
    %458 = vmatpush1.msra.mxu0 0.0
    %459 = vmatprep.subr.mxu0 0.0
    %460 = vmatpush1.msra.mxu0 0.0
    %461 = vmatprep.subr.mxu0 0.0
    %462 = vmatpush1.msra.mxu0 0.0
    %463 = vmatprep.subr.mxu0 0.0
    %464 = vmatpush1.msra.mxu0 0.0
    %465 = vmatprep.subr.mxu0 0.0
    %466 = vmatpush1.msra.mxu0 0.0
    %467 = vmatprep.subr.mxu0 0.0
    %468 = vmatpush1.msra.mxu0 0.0
    %469 = vmatprep.subr.mxu0 0.0
    %470 = vmatpush1.msra.mxu0 0.0
    %471 = vmatprep.subr.mxu0 0.0
    %472 = vmatpush1.msra.mxu0 %v200
    %473 = vmatprep.subr.mxu0 0.0
    %474 = vmatpush1.msra.mxu0 %v199
    %475 = vmatprep.subr.mxu0 0.0
    %476 = vmatpush2.msra.mxu0 0.0
    %477 = vmatprep.subr.mxu0 0.0
    %478 = vmatpush2.msra.mxu0 0.0
    %479 = vmatprep.subr.mxu0 0.0
    %480 = vmatpush2.msra.mxu0 0.0
    %481 = vmatprep.subr.mxu0 0.0
    %482 = vmatpush2.msra.mxu0 0.0
    %483 = vmatprep.subr.mxu0 0.0
    %484 = vmatpush2.msra.mxu0 0.0
    %485 = vmatprep.subr.mxu0 0.0
    %486 = vmatpush2.msra.mxu0 0.0
    %487 = vmatprep.subr.mxu0 0.0
    %488 = vmatpush2.msra.mxu0 0.0
    %489 = vmatprep.subr.mxu0 0.0
    %490 = vmatpush2.msra.mxu0 0.0
    %491 = vmatprep.subr.mxu0 0.0
    %492 = vmatpush2.msra.mxu0 0.0
    %493 = vmatprep.subr.mxu0 0.0
    %494 = vmatpush2.msra.mxu0 0.0
    %495 = vmatprep.subr.mxu0 0.0
    %496 = vmatpush2.msra.mxu0 0.0
    %497 = vmatprep.subr.mxu0 0.0
    %498 = vmatpush2.msra.mxu0 0.0
    %499 = vmatprep.subr.mxu0 0.0
    %500 = vmatpush2.msra.mxu0 0.0
    %501 = vmatprep.subr.mxu0 0.0
    %502 = vmatpush2.msra.mxu0 0.0
    %503 = vmatprep.subr.mxu0 0.0
    %504 = vmatpush2.msra.mxu0 0.0
    %505 = vmatprep.subr.mxu0 0.0
    %506 = vmatpush2.msra.mxu0 0.0
    %507 = vmatprep.mubr.f32.mxu0 0.0
    %508 = vmatmul.mubr.f32.gmra.mxu0 %v396
    %v509 = vpop.f32.mrf.mxu0
    %v510 = vadd.f32 0.0, %v509
    %v511 = vpop.f32.mrf.mxu0
    %512 = vmatprep.mubr.f32.mxu0 0.0
    %513 = vmatmul.mubr.f32.gmra.mxu0 %v399
    %v514 = vpop.f32.mrf.mxu0
    %v515 = vadd.f32 0.0, %v514
    %v516 = vpop.f32.mrf.mxu0
    %517 = vmatprep.mubr.f32.mxu0 0.0
    %518 = vmatmul.mubr.f32.gmra.mxu0 %v402
    %v519 = vpop.f32.mrf.mxu0
    %v520 = vadd.f32 0.0, %v519
    %v521 = vpop.f32.mrf.mxu0
    %522 = vmatprep.mubr.f32.mxu0 0.0
    %523 = vmatmul.mubr.f32.gmra.mxu0 %v405
    %v524 = vpop.f32.mrf.mxu0
    %v525 = vadd.f32 0.0, %v524
    %v526 = vpop.f32.mrf.mxu0
    %527 = vmatprep.mubr.f32.mxu0 0.0
    %528 = vmatmul.mubr.f32.gmra.mxu0 %v408
    %v529 = vpop.f32.mrf.mxu0
    %v530 = vadd.f32 0.0, %v529
    %v531 = vpop.f32.mrf.mxu0
    %532 = vmatprep.mubr.f32.mxu0 0.0
    %533 = vmatmul.mubr.f32.gmra.mxu0 %v411
    %v534 = vpop.f32.mrf.mxu0
    %v535 = vadd.f32 0.0, %v534
    %v536 = vpop.f32.mrf.mxu0
    %537 = vmatprep.mubr.f32.mxu0 0.0
    %538 = vmatmul.mubr.f32.gmra.mxu0 %v414
    %v539 = vpop.f32.mrf.mxu0
    %v540 = vadd.f32 0.0, %v539
    %v541 = vpop.f32.mrf.mxu0
    %542 = vmatprep.mubr.f32.mxu0 0.0
    %543 = vmatmul.mubr.f32.gmra.mxu0 %v417
    %v544 = vpop.f32.mrf.mxu0
    %v545 = vadd.f32 0.0, %v544
    %v546 = vpop.f32.mrf.mxu0
    %547 = vmatprep.mubr.f32.mxu0 0.0
    %548 = vmatmul.mubr.f32.gmra.mxu0 %v420
    %v549 = vpop.f32.mrf.mxu0
    %v550 = vadd.f32 0.0, %v549
    %v551 = vpop.f32.mrf.mxu0
    %552 = vmatprep.mubr.f32.mxu0 0.0
    %553 = vmatmul.mubr.f32.gmra.mxu0 %v423
    %v554 = vpop.f32.mrf.mxu0
    %v555 = vadd.f32 0.0, %v554
    %v556 = vpop.f32.mrf.mxu0
    %557 = vmatprep.mubr.f32.mxu0 0.0
    %558 = vmatmul.mubr.f32.gmra.mxu0 %v426
    %v559 = vpop.f32.mrf.mxu0
    %v560 = vadd.f32 0.0, %v559
    %v561 = vpop.f32.mrf.mxu0
    %562 = vmatprep.mubr.f32.mxu0 0.0
    %563 = vmatmul.mubr.f32.gmra.mxu0 %v429
    %v564 = vpop.f32.mrf.mxu0
    %v565 = vadd.f32 0.0, %v564
    %v566 = vpop.f32.mrf.mxu0
    %567 = vmatprep.mubr.f32.mxu0 0.0
    %568 = vmatmul.mubr.f32.gmra.mxu0 %v432
    %v569 = vpop.f32.mrf.mxu0
    %v570 = vadd.f32 0.0, %v569
    %v571 = vpop.f32.mrf.mxu0
    %572 = vmatprep.mubr.f32.mxu0 0.0
    %573 = vmatmul.mubr.f32.gmra.mxu0 %v435
    %v574 = vpop.f32.mrf.mxu0
    %v575 = vadd.f32 0.0, %v574
    %v576 = vpop.f32.mrf.mxu0
    %577 = vmatprep.mubr.f32.mxu0 0.0
    %578 = vmatmul.mubr.f32.gmra.mxu0 %v438
    %v579 = vpop.f32.mrf.mxu0
    %v580 = vadd.f32 0.0, %v579
    %v581 = vpop.f32.mrf.mxu0
    %582 = vmatprep.mubr.f32.mxu0 0.0
    %583 = vmatmul.mubr.f32.gmra.mxu0 %v441
    %v584 = vpop.f32.mrf.mxu0
    %v585 = vadd.f32 0.0, %v584
    %v586 = vpop.f32.mrf.mxu0
    %587 = vdwg.mxu0
    %v589 = vsel %vm110, %v151, 0
    %v592 = vsel %vm110, %v152, 0
    %v595 = vsel %vm110, %v153, 0
    %v598 = vsel %vm110, %v154, 0
    %v601 = vsel %vm110, %v155, 0
    %v604 = vsel %vm110, %v156, 0
    %v607 = vsel %vm110, %v157, 0
    %v610 = vsel %vm110, %v158, 0
    %v613 = vsel %vm110, %v159, 0
    %v616 = vsel %vm110, %v160, 0
    %v619 = vsel %vm110, %v161, 0
    %v622 = vsel %vm110, %v162, 0
    %v625 = vsel %vm110, %v163, 0
    %v628 = vsel %vm110, %v164, 0
    %v631 = vsel %vm110, %v165, 0
    %v634 = vsel %vm110, %v166, 0
    %636 = vmatprep.subr.mxu0 0.0
    %637 = vmatpush1.msra.mxu0 0.0
    %638 = vmatprep.subr.mxu0 0.0
    %639 = vmatpush1.msra.mxu0 0.0
    %640 = vmatprep.subr.mxu0 0.0
    %641 = vmatpush1.msra.mxu0 0.0
    %642 = vmatprep.subr.mxu0 0.0
    %643 = vmatpush1.msra.mxu0 0.0
    %644 = vmatprep.subr.mxu0 0.0
    %645 = vmatpush1.msra.mxu0 0.0
    %646 = vmatprep.subr.mxu0 0.0
    %647 = vmatpush1.msra.mxu0 0.0
    %648 = vmatprep.subr.mxu0 0.0
    %649 = vmatpush1.msra.mxu0 0.0
    %650 = vmatprep.subr.mxu0 0.0
    %651 = vmatpush1.msra.mxu0 0.0
    %652 = vmatprep.subr.mxu0 0.0
    %653 = vmatpush1.msra.mxu0 0.0
    %654 = vmatprep.subr.mxu0 0.0
    %655 = vmatpush1.msra.mxu0 0.0
    %656 = vmatprep.subr.mxu0 0.0
    %657 = vmatpush1.msra.mxu0 0.0
    %658 = vmatprep.subr.mxu0 0.0
    %659 = vmatpush1.msra.mxu0 0.0
    %660 = vmatprep.subr.mxu0 0.0
    %661 = vmatpush1.msra.mxu0 0.0
    %662 = vmatprep.subr.mxu0 0.0
    %663 = vmatpush1.msra.mxu0 0.0
    %664 = vmatprep.subr.mxu0 0.0
    %665 = vmatpush1.msra.mxu0 %v200
    %666 = vmatprep.subr.mxu0 0.0
    %667 = vmatpush1.msra.mxu0 %v199
    %668 = vmatprep.subr.mxu0 0.0
    %669 = vmatpush2.msra.mxu0 0.0
    %670 = vmatprep.subr.mxu0 0.0
    %671 = vmatpush2.msra.mxu0 0.0
    %672 = vmatprep.subr.mxu0 0.0
    %673 = vmatpush2.msra.mxu0 0.0
    %674 = vmatprep.subr.mxu0 0.0
    %675 = vmatpush2.msra.mxu0 0.0
    %676 = vmatprep.subr.mxu0 0.0
    %677 = vmatpush2.msra.mxu0 0.0
    %678 = vmatprep.subr.mxu0 0.0
    %679 = vmatpush2.msra.mxu0 0.0
    %680 = vmatprep.subr.mxu0 0.0
    %681 = vmatpush2.msra.mxu0 0.0
    %682 = vmatprep.subr.mxu0 0.0
    %683 = vmatpush2.msra.mxu0 0.0
    %684 = vmatprep.subr.mxu0 0.0
    %685 = vmatpush2.msra.mxu0 0.0
    %686 = vmatprep.subr.mxu0 0.0
    %687 = vmatpush2.msra.mxu0 0.0
    %688 = vmatprep.subr.mxu0 0.0
    %689 = vmatpush2.msra.mxu0 0.0
    %690 = vmatprep.subr.mxu0 0.0
    %691 = vmatpush2.msra.mxu0 0.0
    %692 = vmatprep.subr.mxu0 0.0
    %693 = vmatpush2.msra.mxu0 0.0
    %694 = vmatprep.subr.mxu0 0.0
    %695 = vmatpush2.msra.mxu0 0.0
    %696 = vmatprep.subr.mxu0 0.0
    %697 = vmatpush2.msra.mxu0 0.0
    %698 = vmatprep.subr.mxu0 0.0
    %699 = vmatpush2.msra.mxu0 0.0
    %700 = vmatprep.mubr.f32.mxu0 0.0
    %701 = vmatmul.mubr.f32.gmra.mxu0 %v589
    %v702 = vpop.f32.mrf.mxu0
    %v703 = vadd.f32 0.0, %v702
    %v704 = vpop.f32.mrf.mxu0
    %705 = vmatprep.mubr.f32.mxu0 0.0
    %706 = vmatmul.mubr.f32.gmra.mxu0 %v592
    %v707 = vpop.f32.mrf.mxu0
    %v708 = vadd.f32 0.0, %v707
    %v709 = vpop.f32.mrf.mxu0
    %710 = vmatprep.mubr.f32.mxu0 0.0
    %711 = vmatmul.mubr.f32.gmra.mxu0 %v595
    %v712 = vpop.f32.mrf.mxu0
    %v713 = vadd.f32 0.0, %v712
    %v714 = vpop.f32.mrf.mxu0
    %715 = vmatprep.mubr.f32.mxu0 0.0
    %716 = vmatmul.mubr.f32.gmra.mxu0 %v598
    %v717 = vpop.f32.mrf.mxu0
    %v718 = vadd.f32 0.0, %v717
    %v719 = vpop.f32.mrf.mxu0
    %720 = vmatprep.mubr.f32.mxu0 0.0
    %721 = vmatmul.mubr.f32.gmra.mxu0 %v601
    %v722 = vpop.f32.mrf.mxu0
    %v723 = vadd.f32 0.0, %v722
    %v724 = vpop.f32.mrf.mxu0
    %725 = vmatprep.mubr.f32.mxu0 0.0
    %726 = vmatmul.mubr.f32.gmra.mxu0 %v604
    %v727 = vpop.f32.mrf.mxu0
    %v728 = vadd.f32 0.0, %v727
    %v729 = vpop.f32.mrf.mxu0
    %730 = vmatprep.mubr.f32.mxu0 0.0
    %731 = vmatmul.mubr.f32.gmra.mxu0 %v607
    %v732 = vpop.f32.mrf.mxu0
    %v733 = vadd.f32 0.0, %v732
    %v734 = vpop.f32.mrf.mxu0
    %735 = vmatprep.mubr.f32.mxu0 0.0
    %736 = vmatmul.mubr.f32.gmra.mxu0 %v610
    %v737 = vpop.f32.mrf.mxu0
    %v738 = vadd.f32 0.0, %v737
    %v739 = vpop.f32.mrf.mxu0
    %740 = vmatprep.mubr.f32.mxu0 0.0
    %741 = vmatmul.mubr.f32.gmra.mxu0 %v613
    %v742 = vpop.f32.mrf.mxu0
    %v743 = vadd.f32 0.0, %v742
    %v744 = vpop.f32.mrf.mxu0
    %745 = vmatprep.mubr.f32.mxu0 0.0
    %746 = vmatmul.mubr.f32.gmra.mxu0 %v616
    %v747 = vpop.f32.mrf.mxu0
    %v748 = vadd.f32 0.0, %v747
    %v749 = vpop.f32.mrf.mxu0
    %750 = vmatprep.mubr.f32.mxu0 0.0
    %751 = vmatmul.mubr.f32.gmra.mxu0 %v619
    %v752 = vpop.f32.mrf.mxu0
    %v753 = vadd.f32 0.0, %v752
    %v754 = vpop.f32.mrf.mxu0
    %755 = vmatprep.mubr.f32.mxu0 0.0
    %756 = vmatmul.mubr.f32.gmra.mxu0 %v622
    %v757 = vpop.f32.mrf.mxu0
    %v758 = vadd.f32 0.0, %v757
    %v759 = vpop.f32.mrf.mxu0
    %760 = vmatprep.mubr.f32.mxu0 0.0
    %761 = vmatmul.mubr.f32.gmra.mxu0 %v625
    %v762 = vpop.f32.mrf.mxu0
    %v763 = vadd.f32 0.0, %v762
    %v764 = vpop.f32.mrf.mxu0
    %765 = vmatprep.mubr.f32.mxu0 0.0
    %766 = vmatmul.mubr.f32.gmra.mxu0 %v628
    %v767 = vpop.f32.mrf.mxu0
    %v768 = vadd.f32 0.0, %v767
    %v769 = vpop.f32.mrf.mxu0
    %770 = vmatprep.mubr.f32.mxu0 0.0
    %771 = vmatmul.mubr.f32.gmra.mxu0 %v631
    %v772 = vpop.f32.mrf.mxu0
    %v773 = vadd.f32 0.0, %v772
    %v774 = vpop.f32.mrf.mxu0
    %775 = vmatprep.mubr.f32.mxu0 0.0
    %776 = vmatmul.mubr.f32.gmra.mxu0 %v634
    %v777 = vpop.f32.mrf.mxu0
    %v778 = vadd.f32 0.0, %v777
    %v779 = vpop.f32.mrf.mxu0
    %780 = vdwg.mxu0
    %v782 = vsel %vm110, %v167, 0
    %v785 = vsel %vm110, %v168, 0
    %v788 = vsel %vm110, %v169, 0
    %v791 = vsel %vm110, %v170, 0
    %v794 = vsel %vm110, %v171, 0
    %v797 = vsel %vm110, %v172, 0
    %v800 = vsel %vm110, %v173, 0
    %v803 = vsel %vm110, %v174, 0
    %v806 = vsel %vm110, %v175, 0
    %v809 = vsel %vm110, %v176, 0
    %v812 = vsel %vm110, %v177, 0
    %v815 = vsel %vm110, %v178, 0
    %v818 = vsel %vm110, %v179, 0
    %v821 = vsel %vm110, %v180, 0
    %v824 = vsel %vm110, %v181, 0
    %v827 = vsel %vm110, %v182, 0
    %829 = vmatprep.subr.mxu0 0.0
    %830 = vmatpush1.msra.mxu0 0.0
    %831 = vmatprep.subr.mxu0 0.0
    %832 = vmatpush1.msra.mxu0 0.0
    %833 = vmatprep.subr.mxu0 0.0
    %834 = vmatpush1.msra.mxu0 0.0
    %835 = vmatprep.subr.mxu0 0.0
    %836 = vmatpush1.msra.mxu0 0.0
    %837 = vmatprep.subr.mxu0 0.0
    %838 = vmatpush1.msra.mxu0 0.0
    %839 = vmatprep.subr.mxu0 0.0
    %840 = vmatpush1.msra.mxu0 0.0
    %841 = vmatprep.subr.mxu0 0.0
    %842 = vmatpush1.msra.mxu0 0.0
    %843 = vmatprep.subr.mxu0 0.0
    %844 = vmatpush1.msra.mxu0 0.0
    %845 = vmatprep.subr.mxu0 0.0
    %846 = vmatpush1.msra.mxu0 0.0
    %847 = vmatprep.subr.mxu0 0.0
    %848 = vmatpush1.msra.mxu0 0.0
    %849 = vmatprep.subr.mxu0 0.0
    %850 = vmatpush1.msra.mxu0 0.0
    %851 = vmatprep.subr.mxu0 0.0
    %852 = vmatpush1.msra.mxu0 0.0
    %853 = vmatprep.subr.mxu0 0.0
    %854 = vmatpush1.msra.mxu0 0.0
    %855 = vmatprep.subr.mxu0 0.0
    %856 = vmatpush1.msra.mxu0 0.0
    %857 = vmatprep.subr.mxu0 0.0
    %858 = vmatpush1.msra.mxu0 %v200
    %859 = vmatprep.subr.mxu0 0.0
    %860 = vmatpush1.msra.mxu0 %v199
    %861 = vmatprep.subr.mxu0 0.0
    %862 = vmatpush2.msra.mxu0 0.0
    %863 = vmatprep.subr.mxu0 0.0
    %864 = vmatpush2.msra.mxu0 0.0
    %865 = vmatprep.subr.mxu0 0.0
    %866 = vmatpush2.msra.mxu0 0.0
    %867 = vmatprep.subr.mxu0 0.0
    %868 = vmatpush2.msra.mxu0 0.0
    %869 = vmatprep.subr.mxu0 0.0
    %870 = vmatpush2.msra.mxu0 0.0
    %871 = vmatprep.subr.mxu0 0.0
    %872 = vmatpush2.msra.mxu0 0.0
    %873 = vmatprep.subr.mxu0 0.0
    %874 = vmatpush2.msra.mxu0 0.0
    %875 = vmatprep.subr.mxu0 0.0
    %876 = vmatpush2.msra.mxu0 0.0
    %877 = vmatprep.subr.mxu0 0.0
    %878 = vmatpush2.msra.mxu0 0.0
    %879 = vmatprep.subr.mxu0 0.0
    %880 = vmatpush2.msra.mxu0 0.0
    %881 = vmatprep.subr.mxu0 0.0
    %882 = vmatpush2.msra.mxu0 0.0
    %883 = vmatprep.subr.mxu0 0.0
    %884 = vmatpush2.msra.mxu0 0.0
    %885 = vmatprep.subr.mxu0 0.0
    %886 = vmatpush2.msra.mxu0 0.0
    %887 = vmatprep.subr.mxu0 0.0
    %888 = vmatpush2.msra.mxu0 0.0
    %889 = vmatprep.subr.mxu0 0.0
    %890 = vmatpush2.msra.mxu0 0.0
    %891 = vmatprep.subr.mxu0 0.0
    %892 = vmatpush2.msra.mxu0 0.0
    %893 = vmatprep.mubr.f32.mxu0 0.0
    %894 = vmatmul.mubr.f32.gmra.mxu0 %v782
    %v895 = vpop.f32.mrf.mxu0
    %v896 = vadd.f32 0.0, %v895
    %v897 = vpop.f32.mrf.mxu0
    %898 = vmatprep.mubr.f32.mxu0 0.0
    %899 = vmatmul.mubr.f32.gmra.mxu0 %v785
    %v900 = vpop.f32.mrf.mxu0
    %v901 = vadd.f32 0.0, %v900
    %v902 = vpop.f32.mrf.mxu0
    %903 = vmatprep.mubr.f32.mxu0 0.0
    %904 = vmatmul.mubr.f32.gmra.mxu0 %v788
    %v905 = vpop.f32.mrf.mxu0
    %v906 = vadd.f32 0.0, %v905
    %v907 = vpop.f32.mrf.mxu0
    %908 = vmatprep.mubr.f32.mxu0 0.0
    %909 = vmatmul.mubr.f32.gmra.mxu0 %v791
    %v910 = vpop.f32.mrf.mxu0
    %v911 = vadd.f32 0.0, %v910
    %v912 = vpop.f32.mrf.mxu0
    %913 = vmatprep.mubr.f32.mxu0 0.0
    %914 = vmatmul.mubr.f32.gmra.mxu0 %v794
    %v915 = vpop.f32.mrf.mxu0
    %v916 = vadd.f32 0.0, %v915
    %v917 = vpop.f32.mrf.mxu0
    %918 = vmatprep.mubr.f32.mxu0 0.0
    %919 = vmatmul.mubr.f32.gmra.mxu0 %v797
    %v920 = vpop.f32.mrf.mxu0
    %v921 = vadd.f32 0.0, %v920
    %v922 = vpop.f32.mrf.mxu0
    %923 = vmatprep.mubr.f32.mxu0 0.0
    %924 = vmatmul.mubr.f32.gmra.mxu0 %v800
    %v925 = vpop.f32.mrf.mxu0
    %v926 = vadd.f32 0.0, %v925
    %v927 = vpop.f32.mrf.mxu0
    %928 = vmatprep.mubr.f32.mxu0 0.0
    %929 = vmatmul.mubr.f32.gmra.mxu0 %v803
    %v930 = vpop.f32.mrf.mxu0
    %v931 = vadd.f32 0.0, %v930
    %v932 = vpop.f32.mrf.mxu0
    %933 = vmatprep.mubr.f32.mxu0 0.0
    %934 = vmatmul.mubr.f32.gmra.mxu0 %v806
    %v935 = vpop.f32.mrf.mxu0
    %v936 = vadd.f32 0.0, %v935
    %v937 = vpop.f32.mrf.mxu0
    %938 = vmatprep.mubr.f32.mxu0 0.0
    %939 = vmatmul.mubr.f32.gmra.mxu0 %v809
    %v940 = vpop.f32.mrf.mxu0
    %v941 = vadd.f32 0.0, %v940
    %v942 = vpop.f32.mrf.mxu0
    %943 = vmatprep.mubr.f32.mxu0 0.0
    %944 = vmatmul.mubr.f32.gmra.mxu0 %v812
    %v945 = vpop.f32.mrf.mxu0
    %v946 = vadd.f32 0.0, %v945
    %v947 = vpop.f32.mrf.mxu0
    %948 = vmatprep.mubr.f32.mxu0 0.0
    %949 = vmatmul.mubr.f32.gmra.mxu0 %v815
    %v950 = vpop.f32.mrf.mxu0
    %v951 = vadd.f32 0.0, %v950
    %v952 = vpop.f32.mrf.mxu0
    %953 = vmatprep.mubr.f32.mxu0 0.0
    %954 = vmatmul.mubr.f32.gmra.mxu0 %v818
    %v955 = vpop.f32.mrf.mxu0
    %v956 = vadd.f32 0.0, %v955
    %v957 = vpop.f32.mrf.mxu0
    %958 = vmatprep.mubr.f32.mxu0 0.0
    %959 = vmatmul.mubr.f32.gmra.mxu0 %v821
    %v960 = vpop.f32.mrf.mxu0
    %v961 = vadd.f32 0.0, %v960
    %v962 = vpop.f32.mrf.mxu0
    %963 = vmatprep.mubr.f32.mxu0 0.0
    %964 = vmatmul.mubr.f32.gmra.mxu0 %v824
    %v965 = vpop.f32.mrf.mxu0
    %v966 = vadd.f32 0.0, %v965
    %v967 = vpop.f32.mrf.mxu0
    %968 = vmatprep.mubr.f32.mxu0 0.0
    %969 = vmatmul.mubr.f32.gmra.mxu0 %v827
    %v970 = vpop.f32.mrf.mxu0
    %v971 = vadd.f32 0.0, %v970
    %v972 = vpop.f32.mrf.mxu0
    %973 = vdwg.mxu0
    %v975 = vsel %vm110, %v183, 0
    %v978 = vsel %vm110, %v184, 0
    %v981 = vsel %vm110, %v185, 0
    %v984 = vsel %vm110, %v186, 0
    %v987 = vsel %vm110, %v187, 0
    %v990 = vsel %vm110, %v188, 0
    %v993 = vsel %vm110, %v189, 0
    %v996 = vsel %vm110, %v190, 0
    %v999 = vsel %vm110, %v191, 0
    %v1002 = vsel %vm110, %v192, 0
    %v1005 = vsel %vm110, %v193, 0
    %v1008 = vsel %vm110, %v194, 0
    %v1011 = vsel %vm110, %v195, 0
    %v1014 = vsel %vm110, %v196, 0
    %v1017 = vsel %vm110, %v197, 0
    %v1020 = vsel %vm110, %v198, 0
    %1022 = vmatprep.subr.mxu0 0.0
    %1023 = vmatpush1.msra.mxu0 0.0
    %1024 = vmatprep.subr.mxu0 0.0
    %1025 = vmatpush1.msra.mxu0 0.0
    %1026 = vmatprep.subr.mxu0 0.0
    %1027 = vmatpush1.msra.mxu0 0.0
    %1028 = vmatprep.subr.mxu0 0.0
    %1029 = vmatpush1.msra.mxu0 0.0
    %1030 = vmatprep.subr.mxu0 0.0
    %1031 = vmatpush1.msra.mxu0 0.0
    %1032 = vmatprep.subr.mxu0 0.0
    %1033 = vmatpush1.msra.mxu0 0.0
    %1034 = vmatprep.subr.mxu0 0.0
    %1035 = vmatpush1.msra.mxu0 0.0
    %1036 = vmatprep.subr.mxu0 0.0
    %1037 = vmatpush1.msra.mxu0 0.0
    %1038 = vmatprep.subr.mxu0 0.0
    %1039 = vmatpush1.msra.mxu0 0.0
    %1040 = vmatprep.subr.mxu0 0.0
    %1041 = vmatpush1.msra.mxu0 0.0
    %1042 = vmatprep.subr.mxu0 0.0
    %1043 = vmatpush1.msra.mxu0 0.0
    %1044 = vmatprep.subr.mxu0 0.0
    %1045 = vmatpush1.msra.mxu0 0.0
    %1046 = vmatprep.subr.mxu0 0.0
    %1047 = vmatpush1.msra.mxu0 0.0
    %1048 = vmatprep.subr.mxu0 0.0
    %1049 = vmatpush1.msra.mxu0 0.0
    %1050 = vmatprep.subr.mxu0 0.0
    %1051 = vmatpush1.msra.mxu0 %v200
    %1052 = vmatprep.subr.mxu0 0.0
    %1053 = vmatpush1.msra.mxu0 %v199
    %1054 = vmatprep.subr.mxu0 0.0
    %1055 = vmatpush2.msra.mxu0 0.0
    %1056 = vmatprep.subr.mxu0 0.0
    %1057 = vmatpush2.msra.mxu0 0.0
    %1058 = vmatprep.subr.mxu0 0.0
    %1059 = vmatpush2.msra.mxu0 0.0
    %1060 = vmatprep.subr.mxu0 0.0
    %1061 = vmatpush2.msra.mxu0 0.0
    %1062 = vmatprep.subr.mxu0 0.0
    %1063 = vmatpush2.msra.mxu0 0.0
    %1064 = vmatprep.subr.mxu0 0.0
    %1065 = vmatpush2.msra.mxu0 0.0
    %1066 = vmatprep.subr.mxu0 0.0
    %1067 = vmatpush2.msra.mxu0 0.0
    %1068 = vmatprep.subr.mxu0 0.0
    %1069 = vmatpush2.msra.mxu0 0.0
    %1070 = vmatprep.subr.mxu0 0.0
    %1071 = vmatpush2.msra.mxu0 0.0
    %1072 = vmatprep.subr.mxu0 0.0
    %1073 = vmatpush2.msra.mxu0 0.0
    %1074 = vmatprep.subr.mxu0 0.0
    %1075 = vmatpush2.msra.mxu0 0.0
    %1076 = vmatprep.subr.mxu0 0.0
    %1077 = vmatpush2.msra.mxu0 0.0
    %1078 = vmatprep.subr.mxu0 0.0
    %1079 = vmatpush2.msra.mxu0 0.0
    %1080 = vmatprep.subr.mxu0 0.0
    %1081 = vmatpush2.msra.mxu0 0.0
    %1082 = vmatprep.subr.mxu0 0.0
    %1083 = vmatpush2.msra.mxu0 0.0
    %1084 = vmatprep.subr.mxu0 0.0
    %1085 = vmatpush2.msra.mxu0 0.0
    %1086 = vmatprep.mubr.f32.mxu0 0.0
    %1087 = vmatmul.mubr.f32.gmra.mxu0 %v975
    %v1088 = vpop.f32.mrf.mxu0
    %v1089 = vadd.f32 0.0, %v1088
    %v1090 = vpop.f32.mrf.mxu0
    %1091 = vmatprep.mubr.f32.mxu0 0.0
    %1092 = vmatmul.mubr.f32.gmra.mxu0 %v978
    %v1093 = vpop.f32.mrf.mxu0
    %v1094 = vadd.f32 0.0, %v1093
    %v1095 = vpop.f32.mrf.mxu0
    %1096 = vmatprep.mubr.f32.mxu0 0.0
    %1097 = vmatmul.mubr.f32.gmra.mxu0 %v981
    %v1098 = vpop.f32.mrf.mxu0
    %v1099 = vadd.f32 0.0, %v1098
    %v1100 = vpop.f32.mrf.mxu0
    %1101 = vmatprep.mubr.f32.mxu0 0.0
    %1102 = vmatmul.mubr.f32.gmra.mxu0 %v984
    %v1103 = vpop.f32.mrf.mxu0
    %v1104 = vadd.f32 0.0, %v1103
    %v1105 = vpop.f32.mrf.mxu0
    %1106 = vmatprep.mubr.f32.mxu0 0.0
    %1107 = vmatmul.mubr.f32.gmra.mxu0 %v987
    %v1108 = vpop.f32.mrf.mxu0
    %v1109 = vadd.f32 0.0, %v1108
    %v1110 = vpop.f32.mrf.mxu0
    %1111 = vmatprep.mubr.f32.mxu0 0.0
    %1112 = vmatmul.mubr.f32.gmra.mxu0 %v990
    %v1113 = vpop.f32.mrf.mxu0
    %v1114 = vadd.f32 0.0, %v1113
    %v1115 = vpop.f32.mrf.mxu0
    %1116 = vmatprep.mubr.f32.mxu0 0.0
    %1117 = vmatmul.mubr.f32.gmra.mxu0 %v993
    %v1118 = vpop.f32.mrf.mxu0
    %v1119 = vadd.f32 0.0, %v1118
    %v1120 = vpop.f32.mrf.mxu0
    %1121 = vmatprep.mubr.f32.mxu0 0.0
    %1122 = vmatmul.mubr.f32.gmra.mxu0 %v996
    %v1123 = vpop.f32.mrf.mxu0
    %v1124 = vadd.f32 0.0, %v1123
    %v1125 = vpop.f32.mrf.mxu0
    %1126 = vmatprep.mubr.f32.mxu0 0.0
    %1127 = vmatmul.mubr.f32.gmra.mxu0 %v999
    %v1128 = vpop.f32.mrf.mxu0
    %v1129 = vadd.f32 0.0, %v1128
    %v1130 = vpop.f32.mrf.mxu0
    %1131 = vmatprep.mubr.f32.mxu0 0.0
    %1132 = vmatmul.mubr.f32.gmra.mxu0 %v1002
    %v1133 = vpop.f32.mrf.mxu0
    %v1134 = vadd.f32 0.0, %v1133
    %v1135 = vpop.f32.mrf.mxu0
    %1136 = vmatprep.mubr.f32.mxu0 0.0
    %1137 = vmatmul.mubr.f32.gmra.mxu0 %v1005
    %v1138 = vpop.f32.mrf.mxu0
    %v1139 = vadd.f32 0.0, %v1138
    %v1140 = vpop.f32.mrf.mxu0
    %1141 = vmatprep.mubr.f32.mxu0 0.0
    %1142 = vmatmul.mubr.f32.gmra.mxu0 %v1008
    %v1143 = vpop.f32.mrf.mxu0
    %v1144 = vadd.f32 0.0, %v1143
    %v1145 = vpop.f32.mrf.mxu0
    %1146 = vmatprep.mubr.f32.mxu0 0.0
    %1147 = vmatmul.mubr.f32.gmra.mxu0 %v1011
    %v1148 = vpop.f32.mrf.mxu0
    %v1149 = vadd.f32 0.0, %v1148
    %v1150 = vpop.f32.mrf.mxu0
    %1151 = vmatprep.mubr.f32.mxu0 0.0
    %1152 = vmatmul.mubr.f32.gmra.mxu0 %v1014
    %v1153 = vpop.f32.mrf.mxu0
    %v1154 = vadd.f32 0.0, %v1153
    %v1155 = vpop.f32.mrf.mxu0
    %1156 = vmatprep.mubr.f32.mxu0 0.0
    %1157 = vmatmul.mubr.f32.gmra.mxu0 %v1017
    %v1158 = vpop.f32.mrf.mxu0
    %v1159 = vadd.f32 0.0, %v1158
    %v1160 = vpop.f32.mrf.mxu0
    %1161 = vmatprep.mubr.f32.mxu0 0.0
    %1162 = vmatmul.mubr.f32.gmra.mxu0 %v1020
    %v1163 = vpop.f32.mrf.mxu0
    %v1164 = vadd.f32 0.0, %v1163
    %v1165 = vpop.f32.mrf.mxu0
    %1166 = vdwg.mxu0
    %v1168 = vsel %vm110, %v201, 0
    %1170 = vmatprep.subr.mxu0 0.0
    %1171 = vmatpush1.msra.mxu0 0.0
    %1172 = vmatprep.subr.mxu0 0.0
    %1173 = vmatpush1.msra.mxu0 0.0
    %1174 = vmatprep.subr.mxu0 0.0
    %1175 = vmatpush1.msra.mxu0 0.0
    %1176 = vmatprep.subr.mxu0 0.0
    %1177 = vmatpush1.msra.mxu0 0.0
    %1178 = vmatprep.subr.mxu0 0.0
    %1179 = vmatpush1.msra.mxu0 0.0
    %1180 = vmatprep.subr.mxu0 0.0
    %1181 = vmatpush1.msra.mxu0 0.0
    %1182 = vmatprep.subr.mxu0 0.0
    %1183 = vmatpush1.msra.mxu0 0.0
    %1184 = vmatprep.subr.mxu0 0.0
    %1185 = vmatpush1.msra.mxu0 0.0
    %1186 = vmatprep.subr.mxu0 0.0
    %1187 = vmatpush1.msra.mxu0 0.0
    %1188 = vmatprep.subr.mxu0 0.0
    %1189 = vmatpush1.msra.mxu0 0.0
    %1190 = vmatprep.subr.mxu0 0.0
    %1191 = vmatpush1.msra.mxu0 0.0
    %1192 = vmatprep.subr.mxu0 0.0
    %1193 = vmatpush1.msra.mxu0 0.0
    %1194 = vmatprep.subr.mxu0 0.0
    %1195 = vmatpush1.msra.mxu0 0.0
    %1196 = vmatprep.subr.mxu0 0.0
    %1197 = vmatpush1.msra.mxu0 0.0
    %1198 = vmatprep.subr.mxu0 0.0
    %1199 = vmatpush1.msra.mxu0 %v322
    %1200 = vmatprep.subr.mxu0 0.0
    %1201 = vmatpush1.msra.mxu0 %v317
    %1202 = vmatprep.subr.mxu0 0.0
    %1203 = vmatpush2.msra.mxu0 0.0
    %1204 = vmatprep.subr.mxu0 0.0
    %1205 = vmatpush2.msra.mxu0 0.0
    %1206 = vmatprep.subr.mxu0 0.0
    %1207 = vmatpush2.msra.mxu0 0.0
    %1208 = vmatprep.subr.mxu0 0.0
    %1209 = vmatpush2.msra.mxu0 0.0
    %1210 = vmatprep.subr.mxu0 0.0
    %1211 = vmatpush2.msra.mxu0 0.0
    %1212 = vmatprep.subr.mxu0 0.0
    %1213 = vmatpush2.msra.mxu0 0.0
    %1214 = vmatprep.subr.mxu0 0.0
    %1215 = vmatpush2.msra.mxu0 0.0
    %1216 = vmatprep.subr.mxu0 0.0
    %1217 = vmatpush2.msra.mxu0 0.0
    %1218 = vmatprep.subr.mxu0 0.0
    %1219 = vmatpush2.msra.mxu0 0.0
    %1220 = vmatprep.subr.mxu0 0.0
    %1221 = vmatpush2.msra.mxu0 0.0
    %1222 = vmatprep.subr.mxu0 0.0
    %1223 = vmatpush2.msra.mxu0 0.0
    %1224 = vmatprep.subr.mxu0 0.0
    %1225 = vmatpush2.msra.mxu0 0.0
    %1226 = vmatprep.subr.mxu0 0.0
    %1227 = vmatpush2.msra.mxu0 0.0
    %1228 = vmatprep.subr.mxu0 0.0
    %1229 = vmatpush2.msra.mxu0 0.0
    %1230 = vmatprep.subr.mxu0 0.0
    %1231 = vmatpush2.msra.mxu0 0.0
    %1232 = vmatprep.subr.mxu0 0.0
    %1233 = vmatpush2.msra.mxu0 0.0
    %1234 = vmatprep.mubr.f32.mxu0 0.0
    %1235 = vmatmul.mubr.f32.gmra.mxu0 %v1168
    %v1236 = vpop.f32.mrf.mxu0
    %v1237 = vadd.f32 0.0, %v1236
    %v1238 = vpop.f32.mrf.mxu0
    %1239 = vdwg.mxu0
    %1240 = vmatprep.subr.mxu0 0.0
    %1241 = vmatpush1.msra.mxu0 0.0
    %1242 = vmatprep.subr.mxu0 0.0
    %1243 = vmatpush1.msra.mxu0 0.0
    %1244 = vmatprep.subr.mxu0 0.0
    %1245 = vmatpush1.msra.mxu0 0.0
    %1246 = vmatprep.subr.mxu0 0.0
    %1247 = vmatpush1.msra.mxu0 0.0
    %1248 = vmatprep.subr.mxu0 0.0
    %1249 = vmatpush1.msra.mxu0 0.0
    %1250 = vmatprep.subr.mxu0 0.0
    %1251 = vmatpush1.msra.mxu0 0.0
    %1252 = vmatprep.subr.mxu0 0.0
    %1253 = vmatpush1.msra.mxu0 0.0
    %1254 = vmatprep.subr.mxu0 0.0
    %1255 = vmatpush1.msra.mxu0 0.0
    %1256 = vmatprep.subr.mxu0 0.0
    %1257 = vmatpush1.msra.mxu0 0.0
    %1258 = vmatprep.subr.mxu0 0.0
    %1259 = vmatpush1.msra.mxu0 0.0
    %1260 = vmatprep.subr.mxu0 0.0
    %1261 = vmatpush1.msra.mxu0 0.0
    %1262 = vmatprep.subr.mxu0 0.0
    %1263 = vmatpush1.msra.mxu0 0.0
    %1264 = vmatprep.subr.mxu0 0.0
    %1265 = vmatpush1.msra.mxu0 0.0
    %1266 = vmatprep.subr.mxu0 0.0
    %1267 = vmatpush1.msra.mxu0 0.0
    %1268 = vmatprep.subr.mxu0 0.0
    %1269 = vmatpush1.msra.mxu0 %v515
    %1270 = vmatprep.subr.mxu0 0.0
    %1271 = vmatpush1.msra.mxu0 %v510
    %1272 = vmatprep.subr.mxu0 0.0
    %1273 = vmatpush2.msra.mxu0 0.0
    %1274 = vmatprep.subr.mxu0 0.0
    %1275 = vmatpush2.msra.mxu0 0.0
    %1276 = vmatprep.subr.mxu0 0.0
    %1277 = vmatpush2.msra.mxu0 0.0
    %1278 = vmatprep.subr.mxu0 0.0
    %1279 = vmatpush2.msra.mxu0 0.0
    %1280 = vmatprep.subr.mxu0 0.0
    %1281 = vmatpush2.msra.mxu0 0.0
    %1282 = vmatprep.subr.mxu0 0.0
    %1283 = vmatpush2.msra.mxu0 0.0
    %1284 = vmatprep.subr.mxu0 0.0
    %1285 = vmatpush2.msra.mxu0 0.0
    %1286 = vmatprep.subr.mxu0 0.0
    %1287 = vmatpush2.msra.mxu0 0.0
    %1288 = vmatprep.subr.mxu0 0.0
    %1289 = vmatpush2.msra.mxu0 0.0
    %1290 = vmatprep.subr.mxu0 0.0
    %1291 = vmatpush2.msra.mxu0 0.0
    %1292 = vmatprep.subr.mxu0 0.0
    %1293 = vmatpush2.msra.mxu0 0.0
    %1294 = vmatprep.subr.mxu0 0.0
    %1295 = vmatpush2.msra.mxu0 0.0
    %1296 = vmatprep.subr.mxu0 0.0
    %1297 = vmatpush2.msra.mxu0 0.0
    %1298 = vmatprep.subr.mxu0 0.0
    %1299 = vmatpush2.msra.mxu0 0.0
    %1300 = vmatprep.subr.mxu0 0.0
    %1301 = vmatpush2.msra.mxu0 0.0
    %1302 = vmatprep.subr.mxu0 0.0
    %1303 = vmatpush2.msra.mxu0 0.0
    %1304 = vmatprep.mubr.f32.mxu0 0.0
    %1305 = vmatmul.mubr.f32.gmra.mxu0 %v1168
    %v1306 = vpop.f32.mrf.mxu0
    %v1307 = vadd.f32 0.0, %v1306
    %v1308 = vpop.f32.mrf.mxu0
    %1309 = vdwg.mxu0
    %1310 = vmatprep.subr.mxu0 0.0
    %1311 = vmatpush1.msra.mxu0 0.0
    %1312 = vmatprep.subr.mxu0 0.0
    %1313 = vmatpush1.msra.mxu0 0.0
    %1314 = vmatprep.subr.mxu0 0.0
    %1315 = vmatpush1.msra.mxu0 0.0
    %1316 = vmatprep.subr.mxu0 0.0
    %1317 = vmatpush1.msra.mxu0 0.0
    %1318 = vmatprep.subr.mxu0 0.0
    %1319 = vmatpush1.msra.mxu0 0.0
    %1320 = vmatprep.subr.mxu0 0.0
    %1321 = vmatpush1.msra.mxu0 0.0
    %1322 = vmatprep.subr.mxu0 0.0
    %1323 = vmatpush1.msra.mxu0 0.0
    %1324 = vmatprep.subr.mxu0 0.0
    %1325 = vmatpush1.msra.mxu0 0.0
    %1326 = vmatprep.subr.mxu0 0.0
    %1327 = vmatpush1.msra.mxu0 0.0
    %1328 = vmatprep.subr.mxu0 0.0
    %1329 = vmatpush1.msra.mxu0 0.0
    %1330 = vmatprep.subr.mxu0 0.0
    %1331 = vmatpush1.msra.mxu0 0.0
    %1332 = vmatprep.subr.mxu0 0.0
    %1333 = vmatpush1.msra.mxu0 0.0
    %1334 = vmatprep.subr.mxu0 0.0
    %1335 = vmatpush1.msra.mxu0 0.0
    %1336 = vmatprep.subr.mxu0 0.0
    %1337 = vmatpush1.msra.mxu0 0.0
    %1338 = vmatprep.subr.mxu0 0.0
    %1339 = vmatpush1.msra.mxu0 %v708
    %1340 = vmatprep.subr.mxu0 0.0
    %1341 = vmatpush1.msra.mxu0 %v703
    %1342 = vmatprep.subr.mxu0 0.0
    %1343 = vmatpush2.msra.mxu0 0.0
    %1344 = vmatprep.subr.mxu0 0.0
    %1345 = vmatpush2.msra.mxu0 0.0
    %1346 = vmatprep.subr.mxu0 0.0
    %1347 = vmatpush2.msra.mxu0 0.0
    %1348 = vmatprep.subr.mxu0 0.0
    %1349 = vmatpush2.msra.mxu0 0.0
    %1350 = vmatprep.subr.mxu0 0.0
    %1351 = vmatpush2.msra.mxu0 0.0
    %1352 = vmatprep.subr.mxu0 0.0
    %1353 = vmatpush2.msra.mxu0 0.0
    %1354 = vmatprep.subr.mxu0 0.0
    %1355 = vmatpush2.msra.mxu0 0.0
    %1356 = vmatprep.subr.mxu0 0.0
    %1357 = vmatpush2.msra.mxu0 0.0
    %1358 = vmatprep.subr.mxu0 0.0
    %1359 = vmatpush2.msra.mxu0 0.0
    %1360 = vmatprep.subr.mxu0 0.0
    %1361 = vmatpush2.msra.mxu0 0.0
    %1362 = vmatprep.subr.mxu0 0.0
    %1363 = vmatpush2.msra.mxu0 0.0
    %1364 = vmatprep.subr.mxu0 0.0
    %1365 = vmatpush2.msra.mxu0 0.0
    %1366 = vmatprep.subr.mxu0 0.0
    %1367 = vmatpush2.msra.mxu0 0.0
    %1368 = vmatprep.subr.mxu0 0.0
    %1369 = vmatpush2.msra.mxu0 0.0
    %1370 = vmatprep.subr.mxu0 0.0
    %1371 = vmatpush2.msra.mxu0 0.0
    %1372 = vmatprep.subr.mxu0 0.0
    %1373 = vmatpush2.msra.mxu0 0.0
    %1374 = vmatprep.mubr.f32.mxu0 0.0
    %1375 = vmatmul.mubr.f32.gmra.mxu0 %v1168
    %v1376 = vpop.f32.mrf.mxu0
    %v1377 = vadd.f32 0.0, %v1376
    %v1378 = vpop.f32.mrf.mxu0
    %1379 = vdwg.mxu0
    %1380 = vmatprep.subr.mxu0 0.0
    %1381 = vmatpush1.msra.mxu0 0.0
    %1382 = vmatprep.subr.mxu0 0.0
    %1383 = vmatpush1.msra.mxu0 0.0
    %1384 = vmatprep.subr.mxu0 0.0
    %1385 = vmatpush1.msra.mxu0 0.0
    %1386 = vmatprep.subr.mxu0 0.0
    %1387 = vmatpush1.msra.mxu0 0.0
    %1388 = vmatprep.subr.mxu0 0.0
    %1389 = vmatpush1.msra.mxu0 0.0
    %1390 = vmatprep.subr.mxu0 0.0
    %1391 = vmatpush1.msra.mxu0 0.0
    %1392 = vmatprep.subr.mxu0 0.0
    %1393 = vmatpush1.msra.mxu0 0.0
    %1394 = vmatprep.subr.mxu0 0.0
    %1395 = vmatpush1.msra.mxu0 0.0
    %1396 = vmatprep.subr.mxu0 0.0
    %1397 = vmatpush1.msra.mxu0 0.0
    %1398 = vmatprep.subr.mxu0 0.0
    %1399 = vmatpush1.msra.mxu0 0.0
    %1400 = vmatprep.subr.mxu0 0.0
    %1401 = vmatpush1.msra.mxu0 0.0
    %1402 = vmatprep.subr.mxu0 0.0
    %1403 = vmatpush1.msra.mxu0 0.0
    %1404 = vmatprep.subr.mxu0 0.0
    %1405 = vmatpush1.msra.mxu0 0.0
    %1406 = vmatprep.subr.mxu0 0.0
    %1407 = vmatpush1.msra.mxu0 0.0
    %1408 = vmatprep.subr.mxu0 0.0
    %1409 = vmatpush1.msra.mxu0 %v901
    %1410 = vmatprep.subr.mxu0 0.0
    %1411 = vmatpush1.msra.mxu0 %v896
    %1412 = vmatprep.subr.mxu0 0.0
    %1413 = vmatpush2.msra.mxu0 0.0
    %1414 = vmatprep.subr.mxu0 0.0
    %1415 = vmatpush2.msra.mxu0 0.0
    %1416 = vmatprep.subr.mxu0 0.0
    %1417 = vmatpush2.msra.mxu0 0.0
    %1418 = vmatprep.subr.mxu0 0.0
    %1419 = vmatpush2.msra.mxu0 0.0
    %1420 = vmatprep.subr.mxu0 0.0
    %1421 = vmatpush2.msra.mxu0 0.0
    %1422 = vmatprep.subr.mxu0 0.0
    %1423 = vmatpush2.msra.mxu0 0.0
    %1424 = vmatprep.subr.mxu0 0.0
    %1425 = vmatpush2.msra.mxu0 0.0
    %1426 = vmatprep.subr.mxu0 0.0
    %1427 = vmatpush2.msra.mxu0 0.0
    %1428 = vmatprep.subr.mxu0 0.0
    %1429 = vmatpush2.msra.mxu0 0.0
    %1430 = vmatprep.subr.mxu0 0.0
    %1431 = vmatpush2.msra.mxu0 0.0
    %1432 = vmatprep.subr.mxu0 0.0
    %1433 = vmatpush2.msra.mxu0 0.0
    %1434 = vmatprep.subr.mxu0 0.0
    %1435 = vmatpush2.msra.mxu0 0.0
    %1436 = vmatprep.subr.mxu0 0.0
    %1437 = vmatpush2.msra.mxu0 0.0
    %1438 = vmatprep.subr.mxu0 0.0
    %1439 = vmatpush2.msra.mxu0 0.0
    %1440 = vmatprep.subr.mxu0 0.0
    %1441 = vmatpush2.msra.mxu0 0.0
    %1442 = vmatprep.subr.mxu0 0.0
    %1443 = vmatpush2.msra.mxu0 0.0
    %1444 = vmatprep.mubr.f32.mxu0 0.0
    %1445 = vmatmul.mubr.f32.gmra.mxu0 %v1168
    %v1446 = vpop.f32.mrf.mxu0
    %v1447 = vadd.f32 0.0, %v1446
    %v1448 = vpop.f32.mrf.mxu0
    %1449 = vdwg.mxu0
    %1450 = vmatprep.subr.mxu0 0.0
    %1451 = vmatpush1.msra.mxu0 0.0
    %1452 = vmatprep.subr.mxu0 0.0
    %1453 = vmatpush1.msra.mxu0 0.0
    %1454 = vmatprep.subr.mxu0 0.0
    %1455 = vmatpush1.msra.mxu0 0.0
    %1456 = vmatprep.subr.mxu0 0.0
    %1457 = vmatpush1.msra.mxu0 0.0
    %1458 = vmatprep.subr.mxu0 0.0
    %1459 = vmatpush1.msra.mxu0 0.0
    %1460 = vmatprep.subr.mxu0 0.0
    %1461 = vmatpush1.msra.mxu0 0.0
    %1462 = vmatprep.subr.mxu0 0.0
    %1463 = vmatpush1.msra.mxu0 0.0
    %1464 = vmatprep.subr.mxu0 0.0
    %1465 = vmatpush1.msra.mxu0 0.0
    %1466 = vmatprep.subr.mxu0 0.0
    %1467 = vmatpush1.msra.mxu0 0.0
    %1468 = vmatprep.subr.mxu0 0.0
    %1469 = vmatpush1.msra.mxu0 0.0
    %1470 = vmatprep.subr.mxu0 0.0
    %1471 = vmatpush1.msra.mxu0 0.0
    %1472 = vmatprep.subr.mxu0 0.0
    %1473 = vmatpush1.msra.mxu0 0.0
    %1474 = vmatprep.subr.mxu0 0.0
    %1475 = vmatpush1.msra.mxu0 0.0
    %1476 = vmatprep.subr.mxu0 0.0
    %1477 = vmatpush1.msra.mxu0 0.0
    %1478 = vmatprep.subr.mxu0 0.0
    %1479 = vmatpush1.msra.mxu0 %v1094
    %1480 = vmatprep.subr.mxu0 0.0
    %1481 = vmatpush1.msra.mxu0 %v1089
    %1482 = vmatprep.subr.mxu0 0.0
    %1483 = vmatpush2.msra.mxu0 0.0
    %1484 = vmatprep.subr.mxu0 0.0
    %1485 = vmatpush2.msra.mxu0 0.0
    %1486 = vmatprep.subr.mxu0 0.0
    %1487 = vmatpush2.msra.mxu0 0.0
    %1488 = vmatprep.subr.mxu0 0.0
    %1489 = vmatpush2.msra.mxu0 0.0
    %1490 = vmatprep.subr.mxu0 0.0
    %1491 = vmatpush2.msra.mxu0 0.0
    %1492 = vmatprep.subr.mxu0 0.0
    %1493 = vmatpush2.msra.mxu0 0.0
    %1494 = vmatprep.subr.mxu0 0.0
    %1495 = vmatpush2.msra.mxu0 0.0
    %1496 = vmatprep.subr.mxu0 0.0
    %1497 = vmatpush2.msra.mxu0 0.0
    %1498 = vmatprep.subr.mxu0 0.0
    %1499 = vmatpush2.msra.mxu0 0.0
    %1500 = vmatprep.subr.mxu0 0.0
    %1501 = vmatpush2.msra.mxu0 0.0
    %1502 = vmatprep.subr.mxu0 0.0
    %1503 = vmatpush2.msra.mxu0 0.0
    %1504 = vmatprep.subr.mxu0 0.0
    %1505 = vmatpush2.msra.mxu0 0.0
    %1506 = vmatprep.subr.mxu0 0.0
    %1507 = vmatpush2.msra.mxu0 0.0
    %1508 = vmatprep.subr.mxu0 0.0
    %1509 = vmatpush2.msra.mxu0 0.0
    %1510 = vmatprep.subr.mxu0 0.0
    %1511 = vmatpush2.msra.mxu0 0.0
    %1512 = vmatprep.subr.mxu0 0.0
    %1513 = vmatpush2.msra.mxu0 0.0
    %1514 = vmatprep.mubr.f32.mxu0 0.0
    %1515 = vmatmul.mubr.f32.gmra.mxu0 %v1168
    %v1516 = vpop.f32.mrf.mxu0
    %v1517 = vadd.f32 0.0, %v1516
    %v1518 = vpop.f32.mrf.mxu0
    %1519 = vdwg.mxu0
    %v1520 = vmul.f32 %v1237, %v1237
    %v1521 = vmul.f32 %v1307, %v1307
    %v1522 = vmul.f32 %v1237, %v1307
    %v1523 = vsub.f32 %v1377, %v1520
    %v1524 = vsub.f32 %v1447, %v1521
    %v1525 = vsub.f32 %v1517, %v1522
    %v1526 = vmul.f32 %v1522, 2.0
    %v1527 = vadd.f32 %v1526, 0.0001
    %v1528 = vmul.f32 %v1525, 2.0
    %v1529 = vadd.f32 %v1528, 0.0009
    %v1530 = vmul.f32 %v1527, %v1529
    %v1531 = vadd.f32 %v1520, %v1521
    %v1532 = vadd.f32 %v1531, 0.0001
    %v1533 = vadd.f32 %v1523, %v1524
    %v1534 = vadd.f32 %v1533, 0.0009
    %v1535 = vmul.f32 %v1532, %v1534
    %v1536 = vrcp.pop %v1535
    %v1537 = vmul.f32 %v1530, %v1536
    %vm1538 = vcmask 46080
    %v1539 = vsel %vm1538, %v1537, 0.0
    %1540 = vadd.xlane.f32.xlu0 %v1539
    %v1541 = vpop.xlane.xlu0 %1540
    %v1542 = vrot.slane %v1541, 4
    %v1543 = vadd.f32 %v1541, %v1542
    %v1544 = vrot.slane %v1543, 2
    %v1545 = vadd.f32 %v1543, %v1544
    %v1546 = vrot.slane %v1545, 1
    %v1547 = vadd.f32 %v1545, %v1546
    %s1548 = vtos %v1547
    %s1549 = sadd.f32 %s1548, 0.0
    %1550 = vmatprep.subr.mxu0 0.0
    %1551 = vmatpush1.msra.mxu0 0.0
    %1552 = vmatprep.subr.mxu0 0.0
    %1553 = vmatpush1.msra.mxu0 0.0
    %1554 = vmatprep.subr.mxu0 0.0
    %1555 = vmatpush1.msra.mxu0 0.0
    %1556 = vmatprep.subr.mxu0 0.0
    %1557 = vmatpush1.msra.mxu0 0.0
    %1558 = vmatprep.subr.mxu0 0.0
    %1559 = vmatpush1.msra.mxu0 0.0
    %1560 = vmatprep.subr.mxu0 0.0
    %1561 = vmatpush1.msra.mxu0 0.0
    %1562 = vmatprep.subr.mxu0 0.0
    %1563 = vmatpush1.msra.mxu0 0.0
    %1564 = vmatprep.subr.mxu0 0.0
    %1565 = vmatpush1.msra.mxu0 0.0
    %1566 = vmatprep.subr.mxu0 0.0
    %1567 = vmatpush1.msra.mxu0 0.0
    %1568 = vmatprep.subr.mxu0 0.0
    %1569 = vmatpush1.msra.mxu0 0.0
    %1570 = vmatprep.subr.mxu0 0.0
    %1571 = vmatpush1.msra.mxu0 0.0
    %1572 = vmatprep.subr.mxu0 0.0
    %1573 = vmatpush1.msra.mxu0 0.0
    %1574 = vmatprep.subr.mxu0 0.0
    %1575 = vmatpush1.msra.mxu0 0.0
    %1576 = vmatprep.subr.mxu0 0.0
    %1577 = vmatpush1.msra.mxu0 0.0
    %1578 = vmatprep.subr.mxu0 0.0
    %1579 = vmatpush1.msra.mxu0 %v332
    %1580 = vmatprep.subr.mxu0 0.0
    %1581 = vmatpush1.msra.mxu0 %v327
    %1582 = vmatprep.subr.mxu0 0.0
    %1583 = vmatpush2.msra.mxu0 0.0
    %1584 = vmatprep.subr.mxu0 0.0
    %1585 = vmatpush2.msra.mxu0 0.0
    %1586 = vmatprep.subr.mxu0 0.0
    %1587 = vmatpush2.msra.mxu0 0.0
    %1588 = vmatprep.subr.mxu0 0.0
    %1589 = vmatpush2.msra.mxu0 0.0
    %1590 = vmatprep.subr.mxu0 0.0
    %1591 = vmatpush2.msra.mxu0 0.0
    %1592 = vmatprep.subr.mxu0 0.0
    %1593 = vmatpush2.msra.mxu0 0.0
    %1594 = vmatprep.subr.mxu0 0.0
    %1595 = vmatpush2.msra.mxu0 0.0
    %1596 = vmatprep.subr.mxu0 0.0
    %1597 = vmatpush2.msra.mxu0 0.0
    %1598 = vmatprep.subr.mxu0 0.0
    %1599 = vmatpush2.msra.mxu0 0.0
    %1600 = vmatprep.subr.mxu0 0.0
    %1601 = vmatpush2.msra.mxu0 0.0
    %1602 = vmatprep.subr.mxu0 0.0
    %1603 = vmatpush2.msra.mxu0 0.0
    %1604 = vmatprep.subr.mxu0 0.0
    %1605 = vmatpush2.msra.mxu0 0.0
    %1606 = vmatprep.subr.mxu0 0.0
    %1607 = vmatpush2.msra.mxu0 0.0
    %1608 = vmatprep.subr.mxu0 0.0
    %1609 = vmatpush2.msra.mxu0 0.0
    %1610 = vmatprep.subr.mxu0 0.0
    %1611 = vmatpush2.msra.mxu0 0.0
    %1612 = vmatprep.subr.mxu0 0.0
    %1613 = vmatpush2.msra.mxu0 0.0
    %1614 = vmatprep.mubr.f32.mxu0 0.0
    %1615 = vmatmul.mubr.f32.gmra.mxu0 %v1168
    %v1616 = vpop.f32.mrf.mxu0
    %v1617 = vadd.f32 0.0, %v1616
    %v1618 = vpop.f32.mrf.mxu0
    %1619 = vdwg.mxu0
    %1620 = vmatprep.subr.mxu0 0.0
    %1621 = vmatpush1.msra.mxu0 0.0
    %1622 = vmatprep.subr.mxu0 0.0
    %1623 = vmatpush1.msra.mxu0 0.0
    %1624 = vmatprep.subr.mxu0 0.0
    %1625 = vmatpush1.msra.mxu0 0.0
    %1626 = vmatprep.subr.mxu0 0.0
    %1627 = vmatpush1.msra.mxu0 0.0
    %1628 = vmatprep.subr.mxu0 0.0
    %1629 = vmatpush1.msra.mxu0 0.0
    %1630 = vmatprep.subr.mxu0 0.0
    %1631 = vmatpush1.msra.mxu0 0.0
    %1632 = vmatprep.subr.mxu0 0.0
    %1633 = vmatpush1.msra.mxu0 0.0
    %1634 = vmatprep.subr.mxu0 0.0
    %1635 = vmatpush1.msra.mxu0 0.0
    %1636 = vmatprep.subr.mxu0 0.0
    %1637 = vmatpush1.msra.mxu0 0.0
    %1638 = vmatprep.subr.mxu0 0.0
    %1639 = vmatpush1.msra.mxu0 0.0
    %1640 = vmatprep.subr.mxu0 0.0
    %1641 = vmatpush1.msra.mxu0 0.0
    %1642 = vmatprep.subr.mxu0 0.0
    %1643 = vmatpush1.msra.mxu0 0.0
    %1644 = vmatprep.subr.mxu0 0.0
    %1645 = vmatpush1.msra.mxu0 0.0
    %1646 = vmatprep.subr.mxu0 0.0
    %1647 = vmatpush1.msra.mxu0 0.0
    %1648 = vmatprep.subr.mxu0 0.0
    %1649 = vmatpush1.msra.mxu0 %v525
    %1650 = vmatprep.subr.mxu0 0.0
    %1651 = vmatpush1.msra.mxu0 %v520
    %1652 = vmatprep.subr.mxu0 0.0
    %1653 = vmatpush2.msra.mxu0 0.0
    %1654 = vmatprep.subr.mxu0 0.0
    %1655 = vmatpush2.msra.mxu0 0.0
    %1656 = vmatprep.subr.mxu0 0.0
    %1657 = vmatpush2.msra.mxu0 0.0
    %1658 = vmatprep.subr.mxu0 0.0
    %1659 = vmatpush2.msra.mxu0 0.0
    %1660 = vmatprep.subr.mxu0 0.0
    %1661 = vmatpush2.msra.mxu0 0.0
    %1662 = vmatprep.subr.mxu0 0.0
    %1663 = vmatpush2.msra.mxu0 0.0
    %1664 = vmatprep.subr.mxu0 0.0
    %1665 = vmatpush2.msra.mxu0 0.0
    %1666 = vmatprep.subr.mxu0 0.0
    %1667 = vmatpush2.msra.mxu0 0.0
    %1668 = vmatprep.subr.mxu0 0.0
    %1669 = vmatpush2.msra.mxu0 0.0
    %1670 = vmatprep.subr.mxu0 0.0
    %1671 = vmatpush2.msra.mxu0 0.0
    %1672 = vmatprep.subr.mxu0 0.0
    %1673 = vmatpush2.msra.mxu0 0.0
    %1674 = vmatprep.subr.mxu0 0.0
    %1675 = vmatpush2.msra.mxu0 0.0
    %1676 = vmatprep.subr.mxu0 0.0
    %1677 = vmatpush2.msra.mxu0 0.0
    %1678 = vmatprep.subr.mxu0 0.0
    %1679 = vmatpush2.msra.mxu0 0.0
    %1680 = vmatprep.subr.mxu0 0.0
    %1681 = vmatpush2.msra.mxu0 0.0
    %1682 = vmatprep.subr.mxu0 0.0
    %1683 = vmatpush2.msra.mxu0 0.0
    %1684 = vmatprep.mubr.f32.mxu0 0.0
    %1685 = vmatmul.mubr.f32.gmra.mxu0 %v1168
    %v1686 = vpop.f32.mrf.mxu0
    %v1687 = vadd.f32 0.0, %v1686
    %v1688 = vpop.f32.mrf.mxu0
    %1689 = vdwg.mxu0
    %1690 = vmatprep.subr.mxu0 0.0
    %1691 = vmatpush1.msra.mxu0 0.0
    %1692 = vmatprep.subr.mxu0 0.0
    %1693 = vmatpush1.msra.mxu0 0.0
    %1694 = vmatprep.subr.mxu0 0.0
    %1695 = vmatpush1.msra.mxu0 0.0
    %1696 = vmatprep.subr.mxu0 0.0
    %1697 = vmatpush1.msra.mxu0 0.0
    %1698 = vmatprep.subr.mxu0 0.0
    %1699 = vmatpush1.msra.mxu0 0.0
    %1700 = vmatprep.subr.mxu0 0.0
    %1701 = vmatpush1.msra.mxu0 0.0
    %1702 = vmatprep.subr.mxu0 0.0
    %1703 = vmatpush1.msra.mxu0 0.0
    %1704 = vmatprep.subr.mxu0 0.0
    %1705 = vmatpush1.msra.mxu0 0.0
    %1706 = vmatprep.subr.mxu0 0.0
    %1707 = vmatpush1.msra.mxu0 0.0
    %1708 = vmatprep.subr.mxu0 0.0
    %1709 = vmatpush1.msra.mxu0 0.0
    %1710 = vmatprep.subr.mxu0 0.0
    %1711 = vmatpush1.msra.mxu0 0.0
    %1712 = vmatprep.subr.mxu0 0.0
    %1713 = vmatpush1.msra.mxu0 0.0
    %1714 = vmatprep.subr.mxu0 0.0
    %1715 = vmatpush1.msra.mxu0 0.0
    %1716 = vmatprep.subr.mxu0 0.0
    %1717 = vmatpush1.msra.mxu0 0.0
    %1718 = vmatprep.subr.mxu0 0.0
    %1719 = vmatpush1.msra.mxu0 %v718
    %1720 = vmatprep.subr.mxu0 0.0
    %1721 = vmatpush1.msra.mxu0 %v713
    %1722 = vmatprep.subr.mxu0 0.0
    %1723 = vmatpush2.msra.mxu0 0.0
    %1724 = vmatprep.subr.mxu0 0.0
    %1725 = vmatpush2.msra.mxu0 0.0
    %1726 = vmatprep.subr.mxu0 0.0
    %1727 = vmatpush2.msra.mxu0 0.0
    %1728 = vmatprep.subr.mxu0 0.0
    %1729 = vmatpush2.msra.mxu0 0.0
    %1730 = vmatprep.subr.mxu0 0.0
    %1731 = vmatpush2.msra.mxu0 0.0
    %1732 = vmatprep.subr.mxu0 0.0
    %1733 = vmatpush2.msra.mxu0 0.0
    %1734 = vmatprep.subr.mxu0 0.0
    %1735 = vmatpush2.msra.mxu0 0.0
    %1736 = vmatprep.subr.mxu0 0.0
    %1737 = vmatpush2.msra.mxu0 0.0
    %1738 = vmatprep.subr.mxu0 0.0
    %1739 = vmatpush2.msra.mxu0 0.0
    %1740 = vmatprep.subr.mxu0 0.0
    %1741 = vmatpush2.msra.mxu0 0.0
    %1742 = vmatprep.subr.mxu0 0.0
    %1743 = vmatpush2.msra.mxu0 0.0
    %1744 = vmatprep.subr.mxu0 0.0
    %1745 = vmatpush2.msra.mxu0 0.0
    %1746 = vmatprep.subr.mxu0 0.0
    %1747 = vmatpush2.msra.mxu0 0.0
    %1748 = vmatprep.subr.mxu0 0.0
    %1749 = vmatpush2.msra.mxu0 0.0
    %1750 = vmatprep.subr.mxu0 0.0
    %1751 = vmatpush2.msra.mxu0 0.0
    %1752 = vmatprep.subr.mxu0 0.0
    %1753 = vmatpush2.msra.mxu0 0.0
    %1754 = vmatprep.mubr.f32.mxu0 0.0
    %1755 = vmatmul.mubr.f32.gmra.mxu0 %v1168
    %v1756 = vpop.f32.mrf.mxu0
    %v1757 = vadd.f32 0.0, %v1756
    %v1758 = vpop.f32.mrf.mxu0
    %1759 = vdwg.mxu0
    %1760 = vmatprep.subr.mxu0 0.0
    %1761 = vmatpush1.msra.mxu0 0.0
    %1762 = vmatprep.subr.mxu0 0.0
    %1763 = vmatpush1.msra.mxu0 0.0
    %1764 = vmatprep.subr.mxu0 0.0
    %1765 = vmatpush1.msra.mxu0 0.0
    %1766 = vmatprep.subr.mxu0 0.0
    %1767 = vmatpush1.msra.mxu0 0.0
    %1768 = vmatprep.subr.mxu0 0.0
    %1769 = vmatpush1.msra.mxu0 0.0
    %1770 = vmatprep.subr.mxu0 0.0
    %1771 = vmatpush1.msra.mxu0 0.0
    %1772 = vmatprep.subr.mxu0 0.0
    %1773 = vmatpush1.msra.mxu0 0.0
    %1774 = vmatprep.subr.mxu0 0.0
    %1775 = vmatpush1.msra.mxu0 0.0
    %1776 = vmatprep.subr.mxu0 0.0
    %1777 = vmatpush1.msra.mxu0 0.0
    %1778 = vmatprep.subr.mxu0 0.0
    %1779 = vmatpush1.msra.mxu0 0.0
    %1780 = vmatprep.subr.mxu0 0.0
    %1781 = vmatpush1.msra.mxu0 0.0
    %1782 = vmatprep.subr.mxu0 0.0
    %1783 = vmatpush1.msra.mxu0 0.0
    %1784 = vmatprep.subr.mxu0 0.0
    %1785 = vmatpush1.msra.mxu0 0.0
    %1786 = vmatprep.subr.mxu0 0.0
    %1787 = vmatpush1.msra.mxu0 0.0
    %1788 = vmatprep.subr.mxu0 0.0
    %1789 = vmatpush1.msra.mxu0 %v911
    %1790 = vmatprep.subr.mxu0 0.0
    %1791 = vmatpush1.msra.mxu0 %v906
    %1792 = vmatprep.subr.mxu0 0.0
    %1793 = vmatpush2.msra.mxu0 0.0
    %1794 = vmatprep.subr.mxu0 0.0
    %1795 = vmatpush2.msra.mxu0 0.0
    %1796 = vmatprep.subr.mxu0 0.0
    %1797 = vmatpush2.msra.mxu0 0.0
    %1798 = vmatprep.subr.mxu0 0.0
    %1799 = vmatpush2.msra.mxu0 0.0
    %1800 = vmatprep.subr.mxu0 0.0
    %1801 = vmatpush2.msra.mxu0 0.0
    %1802 = vmatprep.subr.mxu0 0.0
    %1803 = vmatpush2.msra.mxu0 0.0
    %1804 = vmatprep.subr.mxu0 0.0
    %1805 = vmatpush2.msra.mxu0 0.0
    %1806 = vmatprep.subr.mxu0 0.0
    %1807 = vmatpush2.msra.mxu0 0.0
    %1808 = vmatprep.subr.mxu0 0.0
    %1809 = vmatpush2.msra.mxu0 0.0
    %1810 = vmatprep.subr.mxu0 0.0
    %1811 = vmatpush2.msra.mxu0 0.0
    %1812 = vmatprep.subr.mxu0 0.0
    %1813 = vmatpush2.msra.mxu0 0.0
    %1814 = vmatprep.subr.mxu0 0.0
    %1815 = vmatpush2.msra.mxu0 0.0
    %1816 = vmatprep.subr.mxu0 0.0
    %1817 = vmatpush2.msra.mxu0 0.0
    %1818 = vmatprep.subr.mxu0 0.0
    %1819 = vmatpush2.msra.mxu0 0.0
    %1820 = vmatprep.subr.mxu0 0.0
    %1821 = vmatpush2.msra.mxu0 0.0
    %1822 = vmatprep.subr.mxu0 0.0
    %1823 = vmatpush2.msra.mxu0 0.0
    %1824 = vmatprep.mubr.f32.mxu0 0.0
    %1825 = vmatmul.mubr.f32.gmra.mxu0 %v1168
    %v1826 = vpop.f32.mrf.mxu0
    %v1827 = vadd.f32 0.0, %v1826
    %v1828 = vpop.f32.mrf.mxu0
    %1829 = vdwg.mxu0
    %1830 = vmatprep.subr.mxu0 0.0
    %1831 = vmatpush1.msra.mxu0 0.0
    %1832 = vmatprep.subr.mxu0 0.0
    %1833 = vmatpush1.msra.mxu0 0.0
    %1834 = vmatprep.subr.mxu0 0.0
    %1835 = vmatpush1.msra.mxu0 0.0
    %1836 = vmatprep.subr.mxu0 0.0
    %1837 = vmatpush1.msra.mxu0 0.0
    %1838 = vmatprep.subr.mxu0 0.0
    %1839 = vmatpush1.msra.mxu0 0.0
    %1840 = vmatprep.subr.mxu0 0.0
    %1841 = vmatpush1.msra.mxu0 0.0
    %1842 = vmatprep.subr.mxu0 0.0
    %1843 = vmatpush1.msra.mxu0 0.0
    %1844 = vmatprep.subr.mxu0 0.0
    %1845 = vmatpush1.msra.mxu0 0.0
    %1846 = vmatprep.subr.mxu0 0.0
    %1847 = vmatpush1.msra.mxu0 0.0
    %1848 = vmatprep.subr.mxu0 0.0
    %1849 = vmatpush1.msra.mxu0 0.0
    %1850 = vmatprep.subr.mxu0 0.0
    %1851 = vmatpush1.msra.mxu0 0.0
    %1852 = vmatprep.subr.mxu0 0.0
    %1853 = vmatpush1.msra.mxu0 0.0
    %1854 = vmatprep.subr.mxu0 0.0
    %1855 = vmatpush1.msra.mxu0 0.0
    %1856 = vmatprep.subr.mxu0 0.0
    %1857 = vmatpush1.msra.mxu0 0.0
    %1858 = vmatprep.subr.mxu0 0.0
    %1859 = vmatpush1.msra.mxu0 %v1104
    %1860 = vmatprep.subr.mxu0 0.0
    %1861 = vmatpush1.msra.mxu0 %v1099
    %1862 = vmatprep.subr.mxu0 0.0
    %1863 = vmatpush2.msra.mxu0 0.0
    %1864 = vmatprep.subr.mxu0 0.0
    %1865 = vmatpush2.msra.mxu0 0.0
    %1866 = vmatprep.subr.mxu0 0.0
    %1867 = vmatpush2.msra.mxu0 0.0
    %1868 = vmatprep.subr.mxu0 0.0
    %1869 = vmatpush2.msra.mxu0 0.0
    %1870 = vmatprep.subr.mxu0 0.0
    %1871 = vmatpush2.msra.mxu0 0.0
    %1872 = vmatprep.subr.mxu0 0.0
    %1873 = vmatpush2.msra.mxu0 0.0
    %1874 = vmatprep.subr.mxu0 0.0
    %1875 = vmatpush2.msra.mxu0 0.0
    %1876 = vmatprep.subr.mxu0 0.0
    %1877 = vmatpush2.msra.mxu0 0.0
    %1878 = vmatprep.subr.mxu0 0.0
    %1879 = vmatpush2.msra.mxu0 0.0
    %1880 = vmatprep.subr.mxu0 0.0
    %1881 = vmatpush2.msra.mxu0 0.0
    %1882 = vmatprep.subr.mxu0 0.0
    %1883 = vmatpush2.msra.mxu0 0.0
    %1884 = vmatprep.subr.mxu0 0.0
    %1885 = vmatpush2.msra.mxu0 0.0
    %1886 = vmatprep.subr.mxu0 0.0
    %1887 = vmatpush2.msra.mxu0 0.0
    %1888 = vmatprep.subr.mxu0 0.0
    %1889 = vmatpush2.msra.mxu0 0.0
    %1890 = vmatprep.subr.mxu0 0.0
    %1891 = vmatpush2.msra.mxu0 0.0
    %1892 = vmatprep.subr.mxu0 0.0
    %1893 = vmatpush2.msra.mxu0 0.0
    %1894 = vmatprep.mubr.f32.mxu0 0.0
    %1895 = vmatmul.mubr.f32.gmra.mxu0 %v1168
    %v1896 = vpop.f32.mrf.mxu0
    %v1897 = vadd.f32 0.0, %v1896
    %v1898 = vpop.f32.mrf.mxu0
    %1899 = vdwg.mxu0
    %v1900 = vmul.f32 %v1617, %v1617
    %v1901 = vmul.f32 %v1687, %v1687
    %v1902 = vmul.f32 %v1617, %v1687
    %v1903 = vsub.f32 %v1757, %v1900
    %v1904 = vsub.f32 %v1827, %v1901
    %v1905 = vsub.f32 %v1897, %v1902
    %v1906 = vmul.f32 %v1902, 2.0
    %v1907 = vadd.f32 %v1906, 0.0001
    %v1908 = vmul.f32 %v1905, 2.0
    %v1909 = vadd.f32 %v1908, 0.0009
    %v1910 = vmul.f32 %v1907, %v1909
    %v1911 = vadd.f32 %v1900, %v1901
    %v1912 = vadd.f32 %v1911, 0.0001
    %v1913 = vadd.f32 %v1903, %v1904
    %v1914 = vadd.f32 %v1913, 0.0009
    %v1915 = vmul.f32 %v1912, %v1914
    %v1916 = vrcp.pop %v1915
    %v1917 = vmul.f32 %v1910, %v1916
    %v1918 = vsel %vm1538, %v1917, 0.0
    %1919 = vadd.xlane.f32.xlu0 %v1918
    %v1920 = vpop.xlane.xlu0 %1919
    %v1921 = vrot.slane %v1920, 4
    %v1922 = vadd.f32 %v1920, %v1921
    %v1923 = vrot.slane %v1922, 2
    %v1924 = vadd.f32 %v1922, %v1923
    %v1925 = vrot.slane %v1924, 1
    %v1926 = vadd.f32 %v1924, %v1925
    %s1927 = vtos %v1926
    %s1928 = sadd.f32 %s1549, %s1927
    %1929 = vmatprep.subr.mxu0 0.0
    %1930 = vmatpush1.msra.mxu0 0.0
    %1931 = vmatprep.subr.mxu0 0.0
    %1932 = vmatpush1.msra.mxu0 0.0
    %1933 = vmatprep.subr.mxu0 0.0
    %1934 = vmatpush1.msra.mxu0 0.0
    %1935 = vmatprep.subr.mxu0 0.0
    %1936 = vmatpush1.msra.mxu0 0.0
    %1937 = vmatprep.subr.mxu0 0.0
    %1938 = vmatpush1.msra.mxu0 0.0
    %1939 = vmatprep.subr.mxu0 0.0
    %1940 = vmatpush1.msra.mxu0 0.0
    %1941 = vmatprep.subr.mxu0 0.0
    %1942 = vmatpush1.msra.mxu0 0.0
    %1943 = vmatprep.subr.mxu0 0.0
    %1944 = vmatpush1.msra.mxu0 0.0
    %1945 = vmatprep.subr.mxu0 0.0
    %1946 = vmatpush1.msra.mxu0 0.0
    %1947 = vmatprep.subr.mxu0 0.0
    %1948 = vmatpush1.msra.mxu0 0.0
    %1949 = vmatprep.subr.mxu0 0.0
    %1950 = vmatpush1.msra.mxu0 0.0
    %1951 = vmatprep.subr.mxu0 0.0
    %1952 = vmatpush1.msra.mxu0 0.0
    %1953 = vmatprep.subr.mxu0 0.0
    %1954 = vmatpush1.msra.mxu0 0.0
    %1955 = vmatprep.subr.mxu0 0.0
    %1956 = vmatpush1.msra.mxu0 0.0
    %1957 = vmatprep.subr.mxu0 0.0
    %1958 = vmatpush1.msra.mxu0 %v342
    %1959 = vmatprep.subr.mxu0 0.0
    %1960 = vmatpush1.msra.mxu0 %v337
    %1961 = vmatprep.subr.mxu0 0.0
    %1962 = vmatpush2.msra.mxu0 0.0
    %1963 = vmatprep.subr.mxu0 0.0
    %1964 = vmatpush2.msra.mxu0 0.0
    %1965 = vmatprep.subr.mxu0 0.0
    %1966 = vmatpush2.msra.mxu0 0.0
    %1967 = vmatprep.subr.mxu0 0.0
    %1968 = vmatpush2.msra.mxu0 0.0
    %1969 = vmatprep.subr.mxu0 0.0
    %1970 = vmatpush2.msra.mxu0 0.0
    %1971 = vmatprep.subr.mxu0 0.0
    %1972 = vmatpush2.msra.mxu0 0.0
    %1973 = vmatprep.subr.mxu0 0.0
    %1974 = vmatpush2.msra.mxu0 0.0
    %1975 = vmatprep.subr.mxu0 0.0
    %1976 = vmatpush2.msra.mxu0 0.0
    %1977 = vmatprep.subr.mxu0 0.0
    %1978 = vmatpush2.msra.mxu0 0.0
    %1979 = vmatprep.subr.mxu0 0.0
    %1980 = vmatpush2.msra.mxu0 0.0
    %1981 = vmatprep.subr.mxu0 0.0
    %1982 = vmatpush2.msra.mxu0 0.0
    %1983 = vmatprep.subr.mxu0 0.0
    %1984 = vmatpush2.msra.mxu0 0.0
    %1985 = vmatprep.subr.mxu0 0.0
    %1986 = vmatpush2.msra.mxu0 0.0
    %1987 = vmatprep.subr.mxu0 0.0
    %1988 = vmatpush2.msra.mxu0 0.0
    %1989 = vmatprep.subr.mxu0 0.0
    %1990 = vmatpush2.msra.mxu0 0.0
    %1991 = vmatprep.subr.mxu0 0.0
    %1992 = vmatpush2.msra.mxu0 0.0
    %1993 = vmatprep.mubr.f32.mxu0 0.0
    %1994 = vmatmul.mubr.f32.gmra.mxu0 %v1168
    %v1995 = vpop.f32.mrf.mxu0
    %v1996 = vadd.f32 0.0, %v1995
    %v1997 = vpop.f32.mrf.mxu0
    %1998 = vdwg.mxu0
    %1999 = vmatprep.subr.mxu0 0.0
    %2000 = vmatpush1.msra.mxu0 0.0
    %2001 = vmatprep.subr.mxu0 0.0
    %2002 = vmatpush1.msra.mxu0 0.0
    %2003 = vmatprep.subr.mxu0 0.0
    %2004 = vmatpush1.msra.mxu0 0.0
    %2005 = vmatprep.subr.mxu0 0.0
    %2006 = vmatpush1.msra.mxu0 0.0
    %2007 = vmatprep.subr.mxu0 0.0
    %2008 = vmatpush1.msra.mxu0 0.0
    %2009 = vmatprep.subr.mxu0 0.0
    %2010 = vmatpush1.msra.mxu0 0.0
    %2011 = vmatprep.subr.mxu0 0.0
    %2012 = vmatpush1.msra.mxu0 0.0
    %2013 = vmatprep.subr.mxu0 0.0
    %2014 = vmatpush1.msra.mxu0 0.0
    %2015 = vmatprep.subr.mxu0 0.0
    %2016 = vmatpush1.msra.mxu0 0.0
    %2017 = vmatprep.subr.mxu0 0.0
    %2018 = vmatpush1.msra.mxu0 0.0
    %2019 = vmatprep.subr.mxu0 0.0
    %2020 = vmatpush1.msra.mxu0 0.0
    %2021 = vmatprep.subr.mxu0 0.0
    %2022 = vmatpush1.msra.mxu0 0.0
    %2023 = vmatprep.subr.mxu0 0.0
    %2024 = vmatpush1.msra.mxu0 0.0
    %2025 = vmatprep.subr.mxu0 0.0
    %2026 = vmatpush1.msra.mxu0 0.0
    %2027 = vmatprep.subr.mxu0 0.0
    %2028 = vmatpush1.msra.mxu0 %v535
    %2029 = vmatprep.subr.mxu0 0.0
    %2030 = vmatpush1.msra.mxu0 %v530
    %2031 = vmatprep.subr.mxu0 0.0
    %2032 = vmatpush2.msra.mxu0 0.0
    %2033 = vmatprep.subr.mxu0 0.0
    %2034 = vmatpush2.msra.mxu0 0.0
    %2035 = vmatprep.subr.mxu0 0.0
    %2036 = vmatpush2.msra.mxu0 0.0
    %2037 = vmatprep.subr.mxu0 0.0
    %2038 = vmatpush2.msra.mxu0 0.0
    %2039 = vmatprep.subr.mxu0 0.0
    %2040 = vmatpush2.msra.mxu0 0.0
    %2041 = vmatprep.subr.mxu0 0.0
    %2042 = vmatpush2.msra.mxu0 0.0
    %2043 = vmatprep.subr.mxu0 0.0
    %2044 = vmatpush2.msra.mxu0 0.0
    %2045 = vmatprep.subr.mxu0 0.0
    %2046 = vmatpush2.msra.mxu0 0.0
    %2047 = vmatprep.subr.mxu0 0.0
    %2048 = vmatpush2.msra.mxu0 0.0
    %2049 = vmatprep.subr.mxu0 0.0
    %2050 = vmatpush2.msra.mxu0 0.0
    %2051 = vmatprep.subr.mxu0 0.0
    %2052 = vmatpush2.msra.mxu0 0.0
    %2053 = vmatprep.subr.mxu0 0.0
    %2054 = vmatpush2.msra.mxu0 0.0
    %2055 = vmatprep.subr.mxu0 0.0
    %2056 = vmatpush2.msra.mxu0 0.0
    %2057 = vmatprep.subr.mxu0 0.0
    %2058 = vmatpush2.msra.mxu0 0.0
    %2059 = vmatprep.subr.mxu0 0.0
    %2060 = vmatpush2.msra.mxu0 0.0
    %2061 = vmatprep.subr.mxu0 0.0
    %2062 = vmatpush2.msra.mxu0 0.0
    %2063 = vmatprep.mubr.f32.mxu0 0.0
    %2064 = vmatmul.mubr.f32.gmra.mxu0 %v1168
    %v2065 = vpop.f32.mrf.mxu0
    %v2066 = vadd.f32 0.0, %v2065
    %v2067 = vpop.f32.mrf.mxu0
    %2068 = vdwg.mxu0
    %2069 = vmatprep.subr.mxu0 0.0
    %2070 = vmatpush1.msra.mxu0 0.0
    %2071 = vmatprep.subr.mxu0 0.0
    %2072 = vmatpush1.msra.mxu0 0.0
    %2073 = vmatprep.subr.mxu0 0.0
    %2074 = vmatpush1.msra.mxu0 0.0
    %2075 = vmatprep.subr.mxu0 0.0
    %2076 = vmatpush1.msra.mxu0 0.0
    %2077 = vmatprep.subr.mxu0 0.0
    %2078 = vmatpush1.msra.mxu0 0.0
    %2079 = vmatprep.subr.mxu0 0.0
    %2080 = vmatpush1.msra.mxu0 0.0
    %2081 = vmatprep.subr.mxu0 0.0
    %2082 = vmatpush1.msra.mxu0 0.0
    %2083 = vmatprep.subr.mxu0 0.0
    %2084 = vmatpush1.msra.mxu0 0.0
    %2085 = vmatprep.subr.mxu0 0.0
    %2086 = vmatpush1.msra.mxu0 0.0
    %2087 = vmatprep.subr.mxu0 0.0
    %2088 = vmatpush1.msra.mxu0 0.0
    %2089 = vmatprep.subr.mxu0 0.0
    %2090 = vmatpush1.msra.mxu0 0.0
    %2091 = vmatprep.subr.mxu0 0.0
    %2092 = vmatpush1.msra.mxu0 0.0
    %2093 = vmatprep.subr.mxu0 0.0
    %2094 = vmatpush1.msra.mxu0 0.0
    %2095 = vmatprep.subr.mxu0 0.0
    %2096 = vmatpush1.msra.mxu0 0.0
    %2097 = vmatprep.subr.mxu0 0.0
    %2098 = vmatpush1.msra.mxu0 %v728
    %2099 = vmatprep.subr.mxu0 0.0
    %2100 = vmatpush1.msra.mxu0 %v723
    %2101 = vmatprep.subr.mxu0 0.0
    %2102 = vmatpush2.msra.mxu0 0.0
    %2103 = vmatprep.subr.mxu0 0.0
    %2104 = vmatpush2.msra.mxu0 0.0
    %2105 = vmatprep.subr.mxu0 0.0
    %2106 = vmatpush2.msra.mxu0 0.0
    %2107 = vmatprep.subr.mxu0 0.0
    %2108 = vmatpush2.msra.mxu0 0.0
    %2109 = vmatprep.subr.mxu0 0.0
    %2110 = vmatpush2.msra.mxu0 0.0
    %2111 = vmatprep.subr.mxu0 0.0
    %2112 = vmatpush2.msra.mxu0 0.0
    %2113 = vmatprep.subr.mxu0 0.0
    %2114 = vmatpush2.msra.mxu0 0.0
    %2115 = vmatprep.subr.mxu0 0.0
    %2116 = vmatpush2.msra.mxu0 0.0
    %2117 = vmatprep.subr.mxu0 0.0
    %2118 = vmatpush2.msra.mxu0 0.0
    %2119 = vmatprep.subr.mxu0 0.0
    %2120 = vmatpush2.msra.mxu0 0.0
    %2121 = vmatprep.subr.mxu0 0.0
    %2122 = vmatpush2.msra.mxu0 0.0
    %2123 = vmatprep.subr.mxu0 0.0
    %2124 = vmatpush2.msra.mxu0 0.0
    %2125 = vmatprep.subr.mxu0 0.0
    %2126 = vmatpush2.msra.mxu0 0.0
    %2127 = vmatprep.subr.mxu0 0.0
    %2128 = vmatpush2.msra.mxu0 0.0
    %2129 = vmatprep.subr.mxu0 0.0
    %2130 = vmatpush2.msra.mxu0 0.0
    %2131 = vmatprep.subr.mxu0 0.0
    %2132 = vmatpush2.msra.mxu0 0.0
    %2133 = vmatprep.mubr.f32.mxu0 0.0
    %2134 = vmatmul.mubr.f32.gmra.mxu0 %v1168
    %v2135 = vpop.f32.mrf.mxu0
    %v2136 = vadd.f32 0.0, %v2135
    %v2137 = vpop.f32.mrf.mxu0
    %2138 = vdwg.mxu0
    %2139 = vmatprep.subr.mxu0 0.0
    %2140 = vmatpush1.msra.mxu0 0.0
    %2141 = vmatprep.subr.mxu0 0.0
    %2142 = vmatpush1.msra.mxu0 0.0
    %2143 = vmatprep.subr.mxu0 0.0
    %2144 = vmatpush1.msra.mxu0 0.0
    %2145 = vmatprep.subr.mxu0 0.0
    %2146 = vmatpush1.msra.mxu0 0.0
    %2147 = vmatprep.subr.mxu0 0.0
    %2148 = vmatpush1.msra.mxu0 0.0
    %2149 = vmatprep.subr.mxu0 0.0
    %2150 = vmatpush1.msra.mxu0 0.0
    %2151 = vmatprep.subr.mxu0 0.0
    %2152 = vmatpush1.msra.mxu0 0.0
    %2153 = vmatprep.subr.mxu0 0.0
    %2154 = vmatpush1.msra.mxu0 0.0
    %2155 = vmatprep.subr.mxu0 0.0
    %2156 = vmatpush1.msra.mxu0 0.0
    %2157 = vmatprep.subr.mxu0 0.0
    %2158 = vmatpush1.msra.mxu0 0.0
    %2159 = vmatprep.subr.mxu0 0.0
    %2160 = vmatpush1.msra.mxu0 0.0
    %2161 = vmatprep.subr.mxu0 0.0
    %2162 = vmatpush1.msra.mxu0 0.0
    %2163 = vmatprep.subr.mxu0 0.0
    %2164 = vmatpush1.msra.mxu0 0.0
    %2165 = vmatprep.subr.mxu0 0.0
    %2166 = vmatpush1.msra.mxu0 0.0
    %2167 = vmatprep.subr.mxu0 0.0
    %2168 = vmatpush1.msra.mxu0 %v921
    %2169 = vmatprep.subr.mxu0 0.0
    %2170 = vmatpush1.msra.mxu0 %v916
    %2171 = vmatprep.subr.mxu0 0.0
    %2172 = vmatpush2.msra.mxu0 0.0
    %2173 = vmatprep.subr.mxu0 0.0
    %2174 = vmatpush2.msra.mxu0 0.0
    %2175 = vmatprep.subr.mxu0 0.0
    %2176 = vmatpush2.msra.mxu0 0.0
    %2177 = vmatprep.subr.mxu0 0.0
    %2178 = vmatpush2.msra.mxu0 0.0
    %2179 = vmatprep.subr.mxu0 0.0
    %2180 = vmatpush2.msra.mxu0 0.0
    %2181 = vmatprep.subr.mxu0 0.0
    %2182 = vmatpush2.msra.mxu0 0.0
    %2183 = vmatprep.subr.mxu0 0.0
    %2184 = vmatpush2.msra.mxu0 0.0
    %2185 = vmatprep.subr.mxu0 0.0
    %2186 = vmatpush2.msra.mxu0 0.0
    %2187 = vmatprep.subr.mxu0 0.0
    %2188 = vmatpush2.msra.mxu0 0.0
    %2189 = vmatprep.subr.mxu0 0.0
    %2190 = vmatpush2.msra.mxu0 0.0
    %2191 = vmatprep.subr.mxu0 0.0
    %2192 = vmatpush2.msra.mxu0 0.0
    %2193 = vmatprep.subr.mxu0 0.0
    %2194 = vmatpush2.msra.mxu0 0.0
    %2195 = vmatprep.subr.mxu0 0.0
    %2196 = vmatpush2.msra.mxu0 0.0
    %2197 = vmatprep.subr.mxu0 0.0
    %2198 = vmatpush2.msra.mxu0 0.0
    %2199 = vmatprep.subr.mxu0 0.0
    %2200 = vmatpush2.msra.mxu0 0.0
    %2201 = vmatprep.subr.mxu0 0.0
    %2202 = vmatpush2.msra.mxu0 0.0
    %2203 = vmatprep.mubr.f32.mxu0 0.0
    %2204 = vmatmul.mubr.f32.gmra.mxu0 %v1168
    %v2205 = vpop.f32.mrf.mxu0
    %v2206 = vadd.f32 0.0, %v2205
    %v2207 = vpop.f32.mrf.mxu0
    %2208 = vdwg.mxu0
    %2209 = vmatprep.subr.mxu0 0.0
    %2210 = vmatpush1.msra.mxu0 0.0
    %2211 = vmatprep.subr.mxu0 0.0
    %2212 = vmatpush1.msra.mxu0 0.0
    %2213 = vmatprep.subr.mxu0 0.0
    %2214 = vmatpush1.msra.mxu0 0.0
    %2215 = vmatprep.subr.mxu0 0.0
    %2216 = vmatpush1.msra.mxu0 0.0
    %2217 = vmatprep.subr.mxu0 0.0
    %2218 = vmatpush1.msra.mxu0 0.0
    %2219 = vmatprep.subr.mxu0 0.0
    %2220 = vmatpush1.msra.mxu0 0.0
    %2221 = vmatprep.subr.mxu0 0.0
    %2222 = vmatpush1.msra.mxu0 0.0
    %2223 = vmatprep.subr.mxu0 0.0
    %2224 = vmatpush1.msra.mxu0 0.0
    %2225 = vmatprep.subr.mxu0 0.0
    %2226 = vmatpush1.msra.mxu0 0.0
    %2227 = vmatprep.subr.mxu0 0.0
    %2228 = vmatpush1.msra.mxu0 0.0
    %2229 = vmatprep.subr.mxu0 0.0
    %2230 = vmatpush1.msra.mxu0 0.0
    %2231 = vmatprep.subr.mxu0 0.0
    %2232 = vmatpush1.msra.mxu0 0.0
    %2233 = vmatprep.subr.mxu0 0.0
    %2234 = vmatpush1.msra.mxu0 0.0
    %2235 = vmatprep.subr.mxu0 0.0
    %2236 = vmatpush1.msra.mxu0 0.0
    %2237 = vmatprep.subr.mxu0 0.0
    %2238 = vmatpush1.msra.mxu0 %v1114
    %2239 = vmatprep.subr.mxu0 0.0
    %2240 = vmatpush1.msra.mxu0 %v1109
    %2241 = vmatprep.subr.mxu0 0.0
    %2242 = vmatpush2.msra.mxu0 0.0
    %2243 = vmatprep.subr.mxu0 0.0
    %2244 = vmatpush2.msra.mxu0 0.0
    %2245 = vmatprep.subr.mxu0 0.0
    %2246 = vmatpush2.msra.mxu0 0.0
    %2247 = vmatprep.subr.mxu0 0.0
    %2248 = vmatpush2.msra.mxu0 0.0
    %2249 = vmatprep.subr.mxu0 0.0
    %2250 = vmatpush2.msra.mxu0 0.0
    %2251 = vmatprep.subr.mxu0 0.0
    %2252 = vmatpush2.msra.mxu0 0.0
    %2253 = vmatprep.subr.mxu0 0.0
    %2254 = vmatpush2.msra.mxu0 0.0
    %2255 = vmatprep.subr.mxu0 0.0
    %2256 = vmatpush2.msra.mxu0 0.0
    %2257 = vmatprep.subr.mxu0 0.0
    %2258 = vmatpush2.msra.mxu0 0.0
    %2259 = vmatprep.subr.mxu0 0.0
    %2260 = vmatpush2.msra.mxu0 0.0
    %2261 = vmatprep.subr.mxu0 0.0
    %2262 = vmatpush2.msra.mxu0 0.0
    %2263 = vmatprep.subr.mxu0 0.0
    %2264 = vmatpush2.msra.mxu0 0.0
    %2265 = vmatprep.subr.mxu0 0.0
    %2266 = vmatpush2.msra.mxu0 0.0
    %2267 = vmatprep.subr.mxu0 0.0
    %2268 = vmatpush2.msra.mxu0 0.0
    %2269 = vmatprep.subr.mxu0 0.0
    %2270 = vmatpush2.msra.mxu0 0.0
    %2271 = vmatprep.subr.mxu0 0.0
    %2272 = vmatpush2.msra.mxu0 0.0
    %2273 = vmatprep.mubr.f32.mxu0 0.0
    %2274 = vmatmul.mubr.f32.gmra.mxu0 %v1168
    %v2275 = vpop.f32.mrf.mxu0
    %v2276 = vadd.f32 0.0, %v2275
    %v2277 = vpop.f32.mrf.mxu0
    %2278 = vdwg.mxu0
    %v2279 = vmul.f32 %v1996, %v1996
    %v2280 = vmul.f32 %v2066, %v2066
    %v2281 = vmul.f32 %v1996, %v2066
    %v2282 = vsub.f32 %v2136, %v2279
    %v2283 = vsub.f32 %v2206, %v2280
    %v2284 = vsub.f32 %v2276, %v2281
    %v2285 = vmul.f32 %v2281, 2.0
    %v2286 = vadd.f32 %v2285, 0.0001
    %v2287 = vmul.f32 %v2284, 2.0
    %v2288 = vadd.f32 %v2287, 0.0009
    %v2289 = vmul.f32 %v2286, %v2288
    %v2290 = vadd.f32 %v2279, %v2280
    %v2291 = vadd.f32 %v2290, 0.0001
    %v2292 = vadd.f32 %v2282, %v2283
    %v2293 = vadd.f32 %v2292, 0.0009
    %v2294 = vmul.f32 %v2291, %v2293
    %v2295 = vrcp.pop %v2294
    %v2296 = vmul.f32 %v2289, %v2295
    %v2297 = vsel %vm1538, %v2296, 0.0
    %2298 = vadd.xlane.f32.xlu0 %v2297
    %v2299 = vpop.xlane.xlu0 %2298
    %v2300 = vrot.slane %v2299, 4
    %v2301 = vadd.f32 %v2299, %v2300
    %v2302 = vrot.slane %v2301, 2
    %v2303 = vadd.f32 %v2301, %v2302
    %v2304 = vrot.slane %v2303, 1
    %v2305 = vadd.f32 %v2303, %v2304
    %s2306 = vtos %v2305
    %s2307 = sadd.f32 %s1928, %s2306
    %2308 = vmatprep.subr.mxu0 0.0
    %2309 = vmatpush1.msra.mxu0 0.0
    %2310 = vmatprep.subr.mxu0 0.0
    %2311 = vmatpush1.msra.mxu0 0.0
    %2312 = vmatprep.subr.mxu0 0.0
    %2313 = vmatpush1.msra.mxu0 0.0
    %2314 = vmatprep.subr.mxu0 0.0
    %2315 = vmatpush1.msra.mxu0 0.0
    %2316 = vmatprep.subr.mxu0 0.0
    %2317 = vmatpush1.msra.mxu0 0.0
    %2318 = vmatprep.subr.mxu0 0.0
    %2319 = vmatpush1.msra.mxu0 0.0
    %2320 = vmatprep.subr.mxu0 0.0
    %2321 = vmatpush1.msra.mxu0 0.0
    %2322 = vmatprep.subr.mxu0 0.0
    %2323 = vmatpush1.msra.mxu0 0.0
    %2324 = vmatprep.subr.mxu0 0.0
    %2325 = vmatpush1.msra.mxu0 0.0
    %2326 = vmatprep.subr.mxu0 0.0
    %2327 = vmatpush1.msra.mxu0 0.0
    %2328 = vmatprep.subr.mxu0 0.0
    %2329 = vmatpush1.msra.mxu0 0.0
    %2330 = vmatprep.subr.mxu0 0.0
    %2331 = vmatpush1.msra.mxu0 0.0
    %2332 = vmatprep.subr.mxu0 0.0
    %2333 = vmatpush1.msra.mxu0 0.0
    %2334 = vmatprep.subr.mxu0 0.0
    %2335 = vmatpush1.msra.mxu0 0.0
    %2336 = vmatprep.subr.mxu0 0.0
    %2337 = vmatpush1.msra.mxu0 %v352
    %2338 = vmatprep.subr.mxu0 0.0
    %2339 = vmatpush1.msra.mxu0 %v347
    %2340 = vmatprep.subr.mxu0 0.0
    %2341 = vmatpush2.msra.mxu0 0.0
    %2342 = vmatprep.subr.mxu0 0.0
    %2343 = vmatpush2.msra.mxu0 0.0
    %2344 = vmatprep.subr.mxu0 0.0
    %2345 = vmatpush2.msra.mxu0 0.0
    %2346 = vmatprep.subr.mxu0 0.0
    %2347 = vmatpush2.msra.mxu0 0.0
    %2348 = vmatprep.subr.mxu0 0.0
    %2349 = vmatpush2.msra.mxu0 0.0
    %2350 = vmatprep.subr.mxu0 0.0
    %2351 = vmatpush2.msra.mxu0 0.0
    %2352 = vmatprep.subr.mxu0 0.0
    %2353 = vmatpush2.msra.mxu0 0.0
    %2354 = vmatprep.subr.mxu0 0.0
    %2355 = vmatpush2.msra.mxu0 0.0
    %2356 = vmatprep.subr.mxu0 0.0
    %2357 = vmatpush2.msra.mxu0 0.0
    %2358 = vmatprep.subr.mxu0 0.0
    %2359 = vmatpush2.msra.mxu0 0.0
    %2360 = vmatprep.subr.mxu0 0.0
    %2361 = vmatpush2.msra.mxu0 0.0
    %2362 = vmatprep.subr.mxu0 0.0
    %2363 = vmatpush2.msra.mxu0 0.0
    %2364 = vmatprep.subr.mxu0 0.0
    %2365 = vmatpush2.msra.mxu0 0.0
    %2366 = vmatprep.subr.mxu0 0.0
    %2367 = vmatpush2.msra.mxu0 0.0
    %2368 = vmatprep.subr.mxu0 0.0
    %2369 = vmatpush2.msra.mxu0 0.0
    %2370 = vmatprep.subr.mxu0 0.0
    %2371 = vmatpush2.msra.mxu0 0.0
    %2372 = vmatprep.mubr.f32.mxu0 0.0
    %2373 = vmatmul.mubr.f32.gmra.mxu0 %v1168
    %v2374 = vpop.f32.mrf.mxu0
    %v2375 = vadd.f32 0.0, %v2374
    %v2376 = vpop.f32.mrf.mxu0
    %2377 = vdwg.mxu0
    %2378 = vmatprep.subr.mxu0 0.0
    %2379 = vmatpush1.msra.mxu0 0.0
    %2380 = vmatprep.subr.mxu0 0.0
    %2381 = vmatpush1.msra.mxu0 0.0
    %2382 = vmatprep.subr.mxu0 0.0
    %2383 = vmatpush1.msra.mxu0 0.0
    %2384 = vmatprep.subr.mxu0 0.0
    %2385 = vmatpush1.msra.mxu0 0.0
    %2386 = vmatprep.subr.mxu0 0.0
    %2387 = vmatpush1.msra.mxu0 0.0
    %2388 = vmatprep.subr.mxu0 0.0
    %2389 = vmatpush1.msra.mxu0 0.0
    %2390 = vmatprep.subr.mxu0 0.0
    %2391 = vmatpush1.msra.mxu0 0.0
    %2392 = vmatprep.subr.mxu0 0.0
    %2393 = vmatpush1.msra.mxu0 0.0
    %2394 = vmatprep.subr.mxu0 0.0
    %2395 = vmatpush1.msra.mxu0 0.0
    %2396 = vmatprep.subr.mxu0 0.0
    %2397 = vmatpush1.msra.mxu0 0.0
    %2398 = vmatprep.subr.mxu0 0.0
    %2399 = vmatpush1.msra.mxu0 0.0
    %2400 = vmatprep.subr.mxu0 0.0
    %2401 = vmatpush1.msra.mxu0 0.0
    %2402 = vmatprep.subr.mxu0 0.0
    %2403 = vmatpush1.msra.mxu0 0.0
    %2404 = vmatprep.subr.mxu0 0.0
    %2405 = vmatpush1.msra.mxu0 0.0
    %2406 = vmatprep.subr.mxu0 0.0
    %2407 = vmatpush1.msra.mxu0 %v545
    %2408 = vmatprep.subr.mxu0 0.0
    %2409 = vmatpush1.msra.mxu0 %v540
    %2410 = vmatprep.subr.mxu0 0.0
    %2411 = vmatpush2.msra.mxu0 0.0
    %2412 = vmatprep.subr.mxu0 0.0
    %2413 = vmatpush2.msra.mxu0 0.0
    %2414 = vmatprep.subr.mxu0 0.0
    %2415 = vmatpush2.msra.mxu0 0.0
    %2416 = vmatprep.subr.mxu0 0.0
    %2417 = vmatpush2.msra.mxu0 0.0
    %2418 = vmatprep.subr.mxu0 0.0
    %2419 = vmatpush2.msra.mxu0 0.0
    %2420 = vmatprep.subr.mxu0 0.0
    %2421 = vmatpush2.msra.mxu0 0.0
    %2422 = vmatprep.subr.mxu0 0.0
    %2423 = vmatpush2.msra.mxu0 0.0
    %2424 = vmatprep.subr.mxu0 0.0
    %2425 = vmatpush2.msra.mxu0 0.0
    %2426 = vmatprep.subr.mxu0 0.0
    %2427 = vmatpush2.msra.mxu0 0.0
    %2428 = vmatprep.subr.mxu0 0.0
    %2429 = vmatpush2.msra.mxu0 0.0
    %2430 = vmatprep.subr.mxu0 0.0
    %2431 = vmatpush2.msra.mxu0 0.0
    %2432 = vmatprep.subr.mxu0 0.0
    %2433 = vmatpush2.msra.mxu0 0.0
    %2434 = vmatprep.subr.mxu0 0.0
    %2435 = vmatpush2.msra.mxu0 0.0
    %2436 = vmatprep.subr.mxu0 0.0
    %2437 = vmatpush2.msra.mxu0 0.0
    %2438 = vmatprep.subr.mxu0 0.0
    %2439 = vmatpush2.msra.mxu0 0.0
    %2440 = vmatprep.subr.mxu0 0.0
    %2441 = vmatpush2.msra.mxu0 0.0
    %2442 = vmatprep.mubr.f32.mxu0 0.0
    %2443 = vmatmul.mubr.f32.gmra.mxu0 %v1168
    %v2444 = vpop.f32.mrf.mxu0
    %v2445 = vadd.f32 0.0, %v2444
    %v2446 = vpop.f32.mrf.mxu0
    %2447 = vdwg.mxu0
    %2448 = vmatprep.subr.mxu0 0.0
    %2449 = vmatpush1.msra.mxu0 0.0
    %2450 = vmatprep.subr.mxu0 0.0
    %2451 = vmatpush1.msra.mxu0 0.0
    %2452 = vmatprep.subr.mxu0 0.0
    %2453 = vmatpush1.msra.mxu0 0.0
    %2454 = vmatprep.subr.mxu0 0.0
    %2455 = vmatpush1.msra.mxu0 0.0
    %2456 = vmatprep.subr.mxu0 0.0
    %2457 = vmatpush1.msra.mxu0 0.0
    %2458 = vmatprep.subr.mxu0 0.0
    %2459 = vmatpush1.msra.mxu0 0.0
    %2460 = vmatprep.subr.mxu0 0.0
    %2461 = vmatpush1.msra.mxu0 0.0
    %2462 = vmatprep.subr.mxu0 0.0
    %2463 = vmatpush1.msra.mxu0 0.0
    %2464 = vmatprep.subr.mxu0 0.0
    %2465 = vmatpush1.msra.mxu0 0.0
    %2466 = vmatprep.subr.mxu0 0.0
    %2467 = vmatpush1.msra.mxu0 0.0
    %2468 = vmatprep.subr.mxu0 0.0
    %2469 = vmatpush1.msra.mxu0 0.0
    %2470 = vmatprep.subr.mxu0 0.0
    %2471 = vmatpush1.msra.mxu0 0.0
    %2472 = vmatprep.subr.mxu0 0.0
    %2473 = vmatpush1.msra.mxu0 0.0
    %2474 = vmatprep.subr.mxu0 0.0
    %2475 = vmatpush1.msra.mxu0 0.0
    %2476 = vmatprep.subr.mxu0 0.0
    %2477 = vmatpush1.msra.mxu0 %v738
    %2478 = vmatprep.subr.mxu0 0.0
    %2479 = vmatpush1.msra.mxu0 %v733
    %2480 = vmatprep.subr.mxu0 0.0
    %2481 = vmatpush2.msra.mxu0 0.0
    %2482 = vmatprep.subr.mxu0 0.0
    %2483 = vmatpush2.msra.mxu0 0.0
    %2484 = vmatprep.subr.mxu0 0.0
    %2485 = vmatpush2.msra.mxu0 0.0
    %2486 = vmatprep.subr.mxu0 0.0
    %2487 = vmatpush2.msra.mxu0 0.0
    %2488 = vmatprep.subr.mxu0 0.0
    %2489 = vmatpush2.msra.mxu0 0.0
    %2490 = vmatprep.subr.mxu0 0.0
    %2491 = vmatpush2.msra.mxu0 0.0
    %2492 = vmatprep.subr.mxu0 0.0
    %2493 = vmatpush2.msra.mxu0 0.0
    %2494 = vmatprep.subr.mxu0 0.0
    %2495 = vmatpush2.msra.mxu0 0.0
    %2496 = vmatprep.subr.mxu0 0.0
    %2497 = vmatpush2.msra.mxu0 0.0
    %2498 = vmatprep.subr.mxu0 0.0
    %2499 = vmatpush2.msra.mxu0 0.0
    %2500 = vmatprep.subr.mxu0 0.0
    %2501 = vmatpush2.msra.mxu0 0.0
    %2502 = vmatprep.subr.mxu0 0.0
    %2503 = vmatpush2.msra.mxu0 0.0
    %2504 = vmatprep.subr.mxu0 0.0
    %2505 = vmatpush2.msra.mxu0 0.0
    %2506 = vmatprep.subr.mxu0 0.0
    %2507 = vmatpush2.msra.mxu0 0.0
    %2508 = vmatprep.subr.mxu0 0.0
    %2509 = vmatpush2.msra.mxu0 0.0
    %2510 = vmatprep.subr.mxu0 0.0
    %2511 = vmatpush2.msra.mxu0 0.0
    %2512 = vmatprep.mubr.f32.mxu0 0.0
    %2513 = vmatmul.mubr.f32.gmra.mxu0 %v1168
    %v2514 = vpop.f32.mrf.mxu0
    %v2515 = vadd.f32 0.0, %v2514
    %v2516 = vpop.f32.mrf.mxu0
    %2517 = vdwg.mxu0
    %2518 = vmatprep.subr.mxu0 0.0
    %2519 = vmatpush1.msra.mxu0 0.0
    %2520 = vmatprep.subr.mxu0 0.0
    %2521 = vmatpush1.msra.mxu0 0.0
    %2522 = vmatprep.subr.mxu0 0.0
    %2523 = vmatpush1.msra.mxu0 0.0
    %2524 = vmatprep.subr.mxu0 0.0
    %2525 = vmatpush1.msra.mxu0 0.0
    %2526 = vmatprep.subr.mxu0 0.0
    %2527 = vmatpush1.msra.mxu0 0.0
    %2528 = vmatprep.subr.mxu0 0.0
    %2529 = vmatpush1.msra.mxu0 0.0
    %2530 = vmatprep.subr.mxu0 0.0
    %2531 = vmatpush1.msra.mxu0 0.0
    %2532 = vmatprep.subr.mxu0 0.0
    %2533 = vmatpush1.msra.mxu0 0.0
    %2534 = vmatprep.subr.mxu0 0.0
    %2535 = vmatpush1.msra.mxu0 0.0
    %2536 = vmatprep.subr.mxu0 0.0
    %2537 = vmatpush1.msra.mxu0 0.0
    %2538 = vmatprep.subr.mxu0 0.0
    %2539 = vmatpush1.msra.mxu0 0.0
    %2540 = vmatprep.subr.mxu0 0.0
    %2541 = vmatpush1.msra.mxu0 0.0
    %2542 = vmatprep.subr.mxu0 0.0
    %2543 = vmatpush1.msra.mxu0 0.0
    %2544 = vmatprep.subr.mxu0 0.0
    %2545 = vmatpush1.msra.mxu0 0.0
    %2546 = vmatprep.subr.mxu0 0.0
    %2547 = vmatpush1.msra.mxu0 %v931
    %2548 = vmatprep.subr.mxu0 0.0
    %2549 = vmatpush1.msra.mxu0 %v926
    %2550 = vmatprep.subr.mxu0 0.0
    %2551 = vmatpush2.msra.mxu0 0.0
    %2552 = vmatprep.subr.mxu0 0.0
    %2553 = vmatpush2.msra.mxu0 0.0
    %2554 = vmatprep.subr.mxu0 0.0
    %2555 = vmatpush2.msra.mxu0 0.0
    %2556 = vmatprep.subr.mxu0 0.0
    %2557 = vmatpush2.msra.mxu0 0.0
    %2558 = vmatprep.subr.mxu0 0.0
    %2559 = vmatpush2.msra.mxu0 0.0
    %2560 = vmatprep.subr.mxu0 0.0
    %2561 = vmatpush2.msra.mxu0 0.0
    %2562 = vmatprep.subr.mxu0 0.0
    %2563 = vmatpush2.msra.mxu0 0.0
    %2564 = vmatprep.subr.mxu0 0.0
    %2565 = vmatpush2.msra.mxu0 0.0
    %2566 = vmatprep.subr.mxu0 0.0
    %2567 = vmatpush2.msra.mxu0 0.0
    %2568 = vmatprep.subr.mxu0 0.0
    %2569 = vmatpush2.msra.mxu0 0.0
    %2570 = vmatprep.subr.mxu0 0.0
    %2571 = vmatpush2.msra.mxu0 0.0
    %2572 = vmatprep.subr.mxu0 0.0
    %2573 = vmatpush2.msra.mxu0 0.0
    %2574 = vmatprep.subr.mxu0 0.0
    %2575 = vmatpush2.msra.mxu0 0.0
    %2576 = vmatprep.subr.mxu0 0.0
    %2577 = vmatpush2.msra.mxu0 0.0
    %2578 = vmatprep.subr.mxu0 0.0
    %2579 = vmatpush2.msra.mxu0 0.0
    %2580 = vmatprep.subr.mxu0 0.0
    %2581 = vmatpush2.msra.mxu0 0.0
    %2582 = vmatprep.mubr.f32.mxu0 0.0
    %2583 = vmatmul.mubr.f32.gmra.mxu0 %v1168
    %v2584 = vpop.f32.mrf.mxu0
    %v2585 = vadd.f32 0.0, %v2584
    %v2586 = vpop.f32.mrf.mxu0
    %2587 = vdwg.mxu0
    %2588 = vmatprep.subr.mxu0 0.0
    %2589 = vmatpush1.msra.mxu0 0.0
    %2590 = vmatprep.subr.mxu0 0.0
    %2591 = vmatpush1.msra.mxu0 0.0
    %2592 = vmatprep.subr.mxu0 0.0
    %2593 = vmatpush1.msra.mxu0 0.0
    %2594 = vmatprep.subr.mxu0 0.0
    %2595 = vmatpush1.msra.mxu0 0.0
    %2596 = vmatprep.subr.mxu0 0.0
    %2597 = vmatpush1.msra.mxu0 0.0
    %2598 = vmatprep.subr.mxu0 0.0
    %2599 = vmatpush1.msra.mxu0 0.0
    %2600 = vmatprep.subr.mxu0 0.0
    %2601 = vmatpush1.msra.mxu0 0.0
    %2602 = vmatprep.subr.mxu0 0.0
    %2603 = vmatpush1.msra.mxu0 0.0
    %2604 = vmatprep.subr.mxu0 0.0
    %2605 = vmatpush1.msra.mxu0 0.0
    %2606 = vmatprep.subr.mxu0 0.0
    %2607 = vmatpush1.msra.mxu0 0.0
    %2608 = vmatprep.subr.mxu0 0.0
    %2609 = vmatpush1.msra.mxu0 0.0
    %2610 = vmatprep.subr.mxu0 0.0
    %2611 = vmatpush1.msra.mxu0 0.0
    %2612 = vmatprep.subr.mxu0 0.0
    %2613 = vmatpush1.msra.mxu0 0.0
    %2614 = vmatprep.subr.mxu0 0.0
    %2615 = vmatpush1.msra.mxu0 0.0
    %2616 = vmatprep.subr.mxu0 0.0
    %2617 = vmatpush1.msra.mxu0 %v1124
    %2618 = vmatprep.subr.mxu0 0.0
    %2619 = vmatpush1.msra.mxu0 %v1119
    %2620 = vmatprep.subr.mxu0 0.0
    %2621 = vmatpush2.msra.mxu0 0.0
    %2622 = vmatprep.subr.mxu0 0.0
    %2623 = vmatpush2.msra.mxu0 0.0
    %2624 = vmatprep.subr.mxu0 0.0
    %2625 = vmatpush2.msra.mxu0 0.0
    %2626 = vmatprep.subr.mxu0 0.0
    %2627 = vmatpush2.msra.mxu0 0.0
    %2628 = vmatprep.subr.mxu0 0.0
    %2629 = vmatpush2.msra.mxu0 0.0
    %2630 = vmatprep.subr.mxu0 0.0
    %2631 = vmatpush2.msra.mxu0 0.0
    %2632 = vmatprep.subr.mxu0 0.0
    %2633 = vmatpush2.msra.mxu0 0.0
    %2634 = vmatprep.subr.mxu0 0.0
    %2635 = vmatpush2.msra.mxu0 0.0
    %2636 = vmatprep.subr.mxu0 0.0
    %2637 = vmatpush2.msra.mxu0 0.0
    %2638 = vmatprep.subr.mxu0 0.0
    %2639 = vmatpush2.msra.mxu0 0.0
    %2640 = vmatprep.subr.mxu0 0.0
    %2641 = vmatpush2.msra.mxu0 0.0
    %2642 = vmatprep.subr.mxu0 0.0
    %2643 = vmatpush2.msra.mxu0 0.0
    %2644 = vmatprep.subr.mxu0 0.0
    %2645 = vmatpush2.msra.mxu0 0.0
    %2646 = vmatprep.subr.mxu0 0.0
    %2647 = vmatpush2.msra.mxu0 0.0
    %2648 = vmatprep.subr.mxu0 0.0
    %2649 = vmatpush2.msra.mxu0 0.0
    %2650 = vmatprep.subr.mxu0 0.0
    %2651 = vmatpush2.msra.mxu0 0.0
    %2652 = vmatprep.mubr.f32.mxu0 0.0
    %2653 = vmatmul.mubr.f32.gmra.mxu0 %v1168
    %v2654 = vpop.f32.mrf.mxu0
    %v2655 = vadd.f32 0.0, %v2654
    %v2656 = vpop.f32.mrf.mxu0
    %2657 = vdwg.mxu0
    %v2658 = vmul.f32 %v2375, %v2375
    %v2659 = vmul.f32 %v2445, %v2445
    %v2660 = vmul.f32 %v2375, %v2445
    %v2661 = vsub.f32 %v2515, %v2658
    %v2662 = vsub.f32 %v2585, %v2659
    %v2663 = vsub.f32 %v2655, %v2660
    %v2664 = vmul.f32 %v2660, 2.0
    %v2665 = vadd.f32 %v2664, 0.0001
    %v2666 = vmul.f32 %v2663, 2.0
    %v2667 = vadd.f32 %v2666, 0.0009
    %v2668 = vmul.f32 %v2665, %v2667
    %v2669 = vadd.f32 %v2658, %v2659
    %v2670 = vadd.f32 %v2669, 0.0001
    %v2671 = vadd.f32 %v2661, %v2662
    %v2672 = vadd.f32 %v2671, 0.0009
    %v2673 = vmul.f32 %v2670, %v2672
    %v2674 = vrcp.pop %v2673
    %v2675 = vmul.f32 %v2668, %v2674
    %v2676 = vsel %vm1538, %v2675, 0.0
    %2677 = vadd.xlane.f32.xlu0 %v2676
    %v2678 = vpop.xlane.xlu0 %2677
    %v2679 = vrot.slane %v2678, 4
    %v2680 = vadd.f32 %v2678, %v2679
    %v2681 = vrot.slane %v2680, 2
    %v2682 = vadd.f32 %v2680, %v2681
    %v2683 = vrot.slane %v2682, 1
    %v2684 = vadd.f32 %v2682, %v2683
    %s2685 = vtos %v2684
    %s2686 = sadd.f32 %s2307, %s2685
    %2687 = vmatprep.subr.mxu0 0.0
    %2688 = vmatpush1.msra.mxu0 0.0
    %2689 = vmatprep.subr.mxu0 0.0
    %2690 = vmatpush1.msra.mxu0 0.0
    %2691 = vmatprep.subr.mxu0 0.0
    %2692 = vmatpush1.msra.mxu0 0.0
    %2693 = vmatprep.subr.mxu0 0.0
    %2694 = vmatpush1.msra.mxu0 0.0
    %2695 = vmatprep.subr.mxu0 0.0
    %2696 = vmatpush1.msra.mxu0 0.0
    %2697 = vmatprep.subr.mxu0 0.0
    %2698 = vmatpush1.msra.mxu0 0.0
    %2699 = vmatprep.subr.mxu0 0.0
    %2700 = vmatpush1.msra.mxu0 0.0
    %2701 = vmatprep.subr.mxu0 0.0
    %2702 = vmatpush1.msra.mxu0 0.0
    %2703 = vmatprep.subr.mxu0 0.0
    %2704 = vmatpush1.msra.mxu0 0.0
    %2705 = vmatprep.subr.mxu0 0.0
    %2706 = vmatpush1.msra.mxu0 0.0
    %2707 = vmatprep.subr.mxu0 0.0
    %2708 = vmatpush1.msra.mxu0 0.0
    %2709 = vmatprep.subr.mxu0 0.0
    %2710 = vmatpush1.msra.mxu0 0.0
    %2711 = vmatprep.subr.mxu0 0.0
    %2712 = vmatpush1.msra.mxu0 0.0
    %2713 = vmatprep.subr.mxu0 0.0
    %2714 = vmatpush1.msra.mxu0 0.0
    %2715 = vmatprep.subr.mxu0 0.0
    %2716 = vmatpush1.msra.mxu0 %v362
    %2717 = vmatprep.subr.mxu0 0.0
    %2718 = vmatpush1.msra.mxu0 %v357
    %2719 = vmatprep.subr.mxu0 0.0
    %2720 = vmatpush2.msra.mxu0 0.0
    %2721 = vmatprep.subr.mxu0 0.0
    %2722 = vmatpush2.msra.mxu0 0.0
    %2723 = vmatprep.subr.mxu0 0.0
    %2724 = vmatpush2.msra.mxu0 0.0
    %2725 = vmatprep.subr.mxu0 0.0
    %2726 = vmatpush2.msra.mxu0 0.0
    %2727 = vmatprep.subr.mxu0 0.0
    %2728 = vmatpush2.msra.mxu0 0.0
    %2729 = vmatprep.subr.mxu0 0.0
    %2730 = vmatpush2.msra.mxu0 0.0
    %2731 = vmatprep.subr.mxu0 0.0
    %2732 = vmatpush2.msra.mxu0 0.0
    %2733 = vmatprep.subr.mxu0 0.0
    %2734 = vmatpush2.msra.mxu0 0.0
    %2735 = vmatprep.subr.mxu0 0.0
    %2736 = vmatpush2.msra.mxu0 0.0
    %2737 = vmatprep.subr.mxu0 0.0
    %2738 = vmatpush2.msra.mxu0 0.0
    %2739 = vmatprep.subr.mxu0 0.0
    %2740 = vmatpush2.msra.mxu0 0.0
    %2741 = vmatprep.subr.mxu0 0.0
    %2742 = vmatpush2.msra.mxu0 0.0
    %2743 = vmatprep.subr.mxu0 0.0
    %2744 = vmatpush2.msra.mxu0 0.0
    %2745 = vmatprep.subr.mxu0 0.0
    %2746 = vmatpush2.msra.mxu0 0.0
    %2747 = vmatprep.subr.mxu0 0.0
    %2748 = vmatpush2.msra.mxu0 0.0
    %2749 = vmatprep.subr.mxu0 0.0
    %2750 = vmatpush2.msra.mxu0 0.0
    %2751 = vmatprep.mubr.f32.mxu0 0.0
    %2752 = vmatmul.mubr.f32.gmra.mxu0 %v1168
    %v2753 = vpop.f32.mrf.mxu0
    %v2754 = vadd.f32 0.0, %v2753
    %v2755 = vpop.f32.mrf.mxu0
    %2756 = vdwg.mxu0
    %2757 = vmatprep.subr.mxu0 0.0
    %2758 = vmatpush1.msra.mxu0 0.0
    %2759 = vmatprep.subr.mxu0 0.0
    %2760 = vmatpush1.msra.mxu0 0.0
    %2761 = vmatprep.subr.mxu0 0.0
    %2762 = vmatpush1.msra.mxu0 0.0
    %2763 = vmatprep.subr.mxu0 0.0
    %2764 = vmatpush1.msra.mxu0 0.0
    %2765 = vmatprep.subr.mxu0 0.0
    %2766 = vmatpush1.msra.mxu0 0.0
    %2767 = vmatprep.subr.mxu0 0.0
    %2768 = vmatpush1.msra.mxu0 0.0
    %2769 = vmatprep.subr.mxu0 0.0
    %2770 = vmatpush1.msra.mxu0 0.0
    %2771 = vmatprep.subr.mxu0 0.0
    %2772 = vmatpush1.msra.mxu0 0.0
    %2773 = vmatprep.subr.mxu0 0.0
    %2774 = vmatpush1.msra.mxu0 0.0
    %2775 = vmatprep.subr.mxu0 0.0
    %2776 = vmatpush1.msra.mxu0 0.0
    %2777 = vmatprep.subr.mxu0 0.0
    %2778 = vmatpush1.msra.mxu0 0.0
    %2779 = vmatprep.subr.mxu0 0.0
    %2780 = vmatpush1.msra.mxu0 0.0
    %2781 = vmatprep.subr.mxu0 0.0
    %2782 = vmatpush1.msra.mxu0 0.0
    %2783 = vmatprep.subr.mxu0 0.0
    %2784 = vmatpush1.msra.mxu0 0.0
    %2785 = vmatprep.subr.mxu0 0.0
    %2786 = vmatpush1.msra.mxu0 %v555
    %2787 = vmatprep.subr.mxu0 0.0
    %2788 = vmatpush1.msra.mxu0 %v550
    %2789 = vmatprep.subr.mxu0 0.0
    %2790 = vmatpush2.msra.mxu0 0.0
    %2791 = vmatprep.subr.mxu0 0.0
    %2792 = vmatpush2.msra.mxu0 0.0
    %2793 = vmatprep.subr.mxu0 0.0
    %2794 = vmatpush2.msra.mxu0 0.0
    %2795 = vmatprep.subr.mxu0 0.0
    %2796 = vmatpush2.msra.mxu0 0.0
    %2797 = vmatprep.subr.mxu0 0.0
    %2798 = vmatpush2.msra.mxu0 0.0
    %2799 = vmatprep.subr.mxu0 0.0
    %2800 = vmatpush2.msra.mxu0 0.0
    %2801 = vmatprep.subr.mxu0 0.0
    %2802 = vmatpush2.msra.mxu0 0.0
    %2803 = vmatprep.subr.mxu0 0.0
    %2804 = vmatpush2.msra.mxu0 0.0
    %2805 = vmatprep.subr.mxu0 0.0
    %2806 = vmatpush2.msra.mxu0 0.0
    %2807 = vmatprep.subr.mxu0 0.0
    %2808 = vmatpush2.msra.mxu0 0.0
    %2809 = vmatprep.subr.mxu0 0.0
    %2810 = vmatpush2.msra.mxu0 0.0
    %2811 = vmatprep.subr.mxu0 0.0
    %2812 = vmatpush2.msra.mxu0 0.0
    %2813 = vmatprep.subr.mxu0 0.0
    %2814 = vmatpush2.msra.mxu0 0.0
    %2815 = vmatprep.subr.mxu0 0.0
    %2816 = vmatpush2.msra.mxu0 0.0
    %2817 = vmatprep.subr.mxu0 0.0
    %2818 = vmatpush2.msra.mxu0 0.0
    %2819 = vmatprep.subr.mxu0 0.0
    %2820 = vmatpush2.msra.mxu0 0.0
    %2821 = vmatprep.mubr.f32.mxu0 0.0
    %2822 = vmatmul.mubr.f32.gmra.mxu0 %v1168
    %v2823 = vpop.f32.mrf.mxu0
    %v2824 = vadd.f32 0.0, %v2823
    %v2825 = vpop.f32.mrf.mxu0
    %2826 = vdwg.mxu0
    %2827 = vmatprep.subr.mxu0 0.0
    %2828 = vmatpush1.msra.mxu0 0.0
    %2829 = vmatprep.subr.mxu0 0.0
    %2830 = vmatpush1.msra.mxu0 0.0
    %2831 = vmatprep.subr.mxu0 0.0
    %2832 = vmatpush1.msra.mxu0 0.0
    %2833 = vmatprep.subr.mxu0 0.0
    %2834 = vmatpush1.msra.mxu0 0.0
    %2835 = vmatprep.subr.mxu0 0.0
    %2836 = vmatpush1.msra.mxu0 0.0
    %2837 = vmatprep.subr.mxu0 0.0
    %2838 = vmatpush1.msra.mxu0 0.0
    %2839 = vmatprep.subr.mxu0 0.0
    %2840 = vmatpush1.msra.mxu0 0.0
    %2841 = vmatprep.subr.mxu0 0.0
    %2842 = vmatpush1.msra.mxu0 0.0
    %2843 = vmatprep.subr.mxu0 0.0
    %2844 = vmatpush1.msra.mxu0 0.0
    %2845 = vmatprep.subr.mxu0 0.0
    %2846 = vmatpush1.msra.mxu0 0.0
    %2847 = vmatprep.subr.mxu0 0.0
    %2848 = vmatpush1.msra.mxu0 0.0
    %2849 = vmatprep.subr.mxu0 0.0
    %2850 = vmatpush1.msra.mxu0 0.0
    %2851 = vmatprep.subr.mxu0 0.0
    %2852 = vmatpush1.msra.mxu0 0.0
    %2853 = vmatprep.subr.mxu0 0.0
    %2854 = vmatpush1.msra.mxu0 0.0
    %2855 = vmatprep.subr.mxu0 0.0
    %2856 = vmatpush1.msra.mxu0 %v748
    %2857 = vmatprep.subr.mxu0 0.0
    %2858 = vmatpush1.msra.mxu0 %v743
    %2859 = vmatprep.subr.mxu0 0.0
    %2860 = vmatpush2.msra.mxu0 0.0
    %2861 = vmatprep.subr.mxu0 0.0
    %2862 = vmatpush2.msra.mxu0 0.0
    %2863 = vmatprep.subr.mxu0 0.0
    %2864 = vmatpush2.msra.mxu0 0.0
    %2865 = vmatprep.subr.mxu0 0.0
    %2866 = vmatpush2.msra.mxu0 0.0
    %2867 = vmatprep.subr.mxu0 0.0
    %2868 = vmatpush2.msra.mxu0 0.0
    %2869 = vmatprep.subr.mxu0 0.0
    %2870 = vmatpush2.msra.mxu0 0.0
    %2871 = vmatprep.subr.mxu0 0.0
    %2872 = vmatpush2.msra.mxu0 0.0
    %2873 = vmatprep.subr.mxu0 0.0
    %2874 = vmatpush2.msra.mxu0 0.0
    %2875 = vmatprep.subr.mxu0 0.0
    %2876 = vmatpush2.msra.mxu0 0.0
    %2877 = vmatprep.subr.mxu0 0.0
    %2878 = vmatpush2.msra.mxu0 0.0
    %2879 = vmatprep.subr.mxu0 0.0
    %2880 = vmatpush2.msra.mxu0 0.0
    %2881 = vmatprep.subr.mxu0 0.0
    %2882 = vmatpush2.msra.mxu0 0.0
    %2883 = vmatprep.subr.mxu0 0.0
    %2884 = vmatpush2.msra.mxu0 0.0
    %2885 = vmatprep.subr.mxu0 0.0
    %2886 = vmatpush2.msra.mxu0 0.0
    %2887 = vmatprep.subr.mxu0 0.0
    %2888 = vmatpush2.msra.mxu0 0.0
    %2889 = vmatprep.subr.mxu0 0.0
    %2890 = vmatpush2.msra.mxu0 0.0
    %2891 = vmatprep.mubr.f32.mxu0 0.0
    %2892 = vmatmul.mubr.f32.gmra.mxu0 %v1168
    %v2893 = vpop.f32.mrf.mxu0
    %v2894 = vadd.f32 0.0, %v2893
    %v2895 = vpop.f32.mrf.mxu0
    %2896 = vdwg.mxu0
    %2897 = vmatprep.subr.mxu0 0.0
    %2898 = vmatpush1.msra.mxu0 0.0
    %2899 = vmatprep.subr.mxu0 0.0
    %2900 = vmatpush1.msra.mxu0 0.0
    %2901 = vmatprep.subr.mxu0 0.0
    %2902 = vmatpush1.msra.mxu0 0.0
    %2903 = vmatprep.subr.mxu0 0.0
    %2904 = vmatpush1.msra.mxu0 0.0
    %2905 = vmatprep.subr.mxu0 0.0
    %2906 = vmatpush1.msra.mxu0 0.0
    %2907 = vmatprep.subr.mxu0 0.0
    %2908 = vmatpush1.msra.mxu0 0.0
    %2909 = vmatprep.subr.mxu0 0.0
    %2910 = vmatpush1.msra.mxu0 0.0
    %2911 = vmatprep.subr.mxu0 0.0
    %2912 = vmatpush1.msra.mxu0 0.0
    %2913 = vmatprep.subr.mxu0 0.0
    %2914 = vmatpush1.msra.mxu0 0.0
    %2915 = vmatprep.subr.mxu0 0.0
    %2916 = vmatpush1.msra.mxu0 0.0
    %2917 = vmatprep.subr.mxu0 0.0
    %2918 = vmatpush1.msra.mxu0 0.0
    %2919 = vmatprep.subr.mxu0 0.0
    %2920 = vmatpush1.msra.mxu0 0.0
    %2921 = vmatprep.subr.mxu0 0.0
    %2922 = vmatpush1.msra.mxu0 0.0
    %2923 = vmatprep.subr.mxu0 0.0
    %2924 = vmatpush1.msra.mxu0 0.0
    %2925 = vmatprep.subr.mxu0 0.0
    %2926 = vmatpush1.msra.mxu0 %v941
    %2927 = vmatprep.subr.mxu0 0.0
    %2928 = vmatpush1.msra.mxu0 %v936
    %2929 = vmatprep.subr.mxu0 0.0
    %2930 = vmatpush2.msra.mxu0 0.0
    %2931 = vmatprep.subr.mxu0 0.0
    %2932 = vmatpush2.msra.mxu0 0.0
    %2933 = vmatprep.subr.mxu0 0.0
    %2934 = vmatpush2.msra.mxu0 0.0
    %2935 = vmatprep.subr.mxu0 0.0
    %2936 = vmatpush2.msra.mxu0 0.0
    %2937 = vmatprep.subr.mxu0 0.0
    %2938 = vmatpush2.msra.mxu0 0.0
    %2939 = vmatprep.subr.mxu0 0.0
    %2940 = vmatpush2.msra.mxu0 0.0
    %2941 = vmatprep.subr.mxu0 0.0
    %2942 = vmatpush2.msra.mxu0 0.0
    %2943 = vmatprep.subr.mxu0 0.0
    %2944 = vmatpush2.msra.mxu0 0.0
    %2945 = vmatprep.subr.mxu0 0.0
    %2946 = vmatpush2.msra.mxu0 0.0
    %2947 = vmatprep.subr.mxu0 0.0
    %2948 = vmatpush2.msra.mxu0 0.0
    %2949 = vmatprep.subr.mxu0 0.0
    %2950 = vmatpush2.msra.mxu0 0.0
    %2951 = vmatprep.subr.mxu0 0.0
    %2952 = vmatpush2.msra.mxu0 0.0
    %2953 = vmatprep.subr.mxu0 0.0
    %2954 = vmatpush2.msra.mxu0 0.0
    %2955 = vmatprep.subr.mxu0 0.0
    %2956 = vmatpush2.msra.mxu0 0.0
    %2957 = vmatprep.subr.mxu0 0.0
    %2958 = vmatpush2.msra.mxu0 0.0
    %2959 = vmatprep.subr.mxu0 0.0
    %2960 = vmatpush2.msra.mxu0 0.0
    %2961 = vmatprep.mubr.f32.mxu0 0.0
    %2962 = vmatmul.mubr.f32.gmra.mxu0 %v1168
    %v2963 = vpop.f32.mrf.mxu0
    %v2964 = vadd.f32 0.0, %v2963
    %v2965 = vpop.f32.mrf.mxu0
    %2966 = vdwg.mxu0
    %2967 = vmatprep.subr.mxu0 0.0
    %2968 = vmatpush1.msra.mxu0 0.0
    %2969 = vmatprep.subr.mxu0 0.0
    %2970 = vmatpush1.msra.mxu0 0.0
    %2971 = vmatprep.subr.mxu0 0.0
    %2972 = vmatpush1.msra.mxu0 0.0
    %2973 = vmatprep.subr.mxu0 0.0
    %2974 = vmatpush1.msra.mxu0 0.0
    %2975 = vmatprep.subr.mxu0 0.0
    %2976 = vmatpush1.msra.mxu0 0.0
    %2977 = vmatprep.subr.mxu0 0.0
    %2978 = vmatpush1.msra.mxu0 0.0
    %2979 = vmatprep.subr.mxu0 0.0
    %2980 = vmatpush1.msra.mxu0 0.0
    %2981 = vmatprep.subr.mxu0 0.0
    %2982 = vmatpush1.msra.mxu0 0.0
    %2983 = vmatprep.subr.mxu0 0.0
    %2984 = vmatpush1.msra.mxu0 0.0
    %2985 = vmatprep.subr.mxu0 0.0
    %2986 = vmatpush1.msra.mxu0 0.0
    %2987 = vmatprep.subr.mxu0 0.0
    %2988 = vmatpush1.msra.mxu0 0.0
    %2989 = vmatprep.subr.mxu0 0.0
    %2990 = vmatpush1.msra.mxu0 0.0
    %2991 = vmatprep.subr.mxu0 0.0
    %2992 = vmatpush1.msra.mxu0 0.0
    %2993 = vmatprep.subr.mxu0 0.0
    %2994 = vmatpush1.msra.mxu0 0.0
    %2995 = vmatprep.subr.mxu0 0.0
    %2996 = vmatpush1.msra.mxu0 %v1134
    %2997 = vmatprep.subr.mxu0 0.0
    %2998 = vmatpush1.msra.mxu0 %v1129
    %2999 = vmatprep.subr.mxu0 0.0
    %3000 = vmatpush2.msra.mxu0 0.0
    %3001 = vmatprep.subr.mxu0 0.0
    %3002 = vmatpush2.msra.mxu0 0.0
    %3003 = vmatprep.subr.mxu0 0.0
    %3004 = vmatpush2.msra.mxu0 0.0
    %3005 = vmatprep.subr.mxu0 0.0
    %3006 = vmatpush2.msra.mxu0 0.0
    %3007 = vmatprep.subr.mxu0 0.0
    %3008 = vmatpush2.msra.mxu0 0.0
    %3009 = vmatprep.subr.mxu0 0.0
    %3010 = vmatpush2.msra.mxu0 0.0
    %3011 = vmatprep.subr.mxu0 0.0
    %3012 = vmatpush2.msra.mxu0 0.0
    %3013 = vmatprep.subr.mxu0 0.0
    %3014 = vmatpush2.msra.mxu0 0.0
    %3015 = vmatprep.subr.mxu0 0.0
    %3016 = vmatpush2.msra.mxu0 0.0
    %3017 = vmatprep.subr.mxu0 0.0
    %3018 = vmatpush2.msra.mxu0 0.0
    %3019 = vmatprep.subr.mxu0 0.0
    %3020 = vmatpush2.msra.mxu0 0.0
    %3021 = vmatprep.subr.mxu0 0.0
    %3022 = vmatpush2.msra.mxu0 0.0
    %3023 = vmatprep.subr.mxu0 0.0
    %3024 = vmatpush2.msra.mxu0 0.0
    %3025 = vmatprep.subr.mxu0 0.0
    %3026 = vmatpush2.msra.mxu0 0.0
    %3027 = vmatprep.subr.mxu0 0.0
    %3028 = vmatpush2.msra.mxu0 0.0
    %3029 = vmatprep.subr.mxu0 0.0
    %3030 = vmatpush2.msra.mxu0 0.0
    %3031 = vmatprep.mubr.f32.mxu0 0.0
    %3032 = vmatmul.mubr.f32.gmra.mxu0 %v1168
    %v3033 = vpop.f32.mrf.mxu0
    %v3034 = vadd.f32 0.0, %v3033
    %v3035 = vpop.f32.mrf.mxu0
    %3036 = vdwg.mxu0
    %v3037 = vmul.f32 %v2754, %v2754
    %v3038 = vmul.f32 %v2824, %v2824
    %v3039 = vmul.f32 %v2754, %v2824
    %v3040 = vsub.f32 %v2894, %v3037
    %v3041 = vsub.f32 %v2964, %v3038
    %v3042 = vsub.f32 %v3034, %v3039
    %v3043 = vmul.f32 %v3039, 2.0
    %v3044 = vadd.f32 %v3043, 0.0001
    %v3045 = vmul.f32 %v3042, 2.0
    %v3046 = vadd.f32 %v3045, 0.0009
    %v3047 = vmul.f32 %v3044, %v3046
    %v3048 = vadd.f32 %v3037, %v3038
    %v3049 = vadd.f32 %v3048, 0.0001
    %v3050 = vadd.f32 %v3040, %v3041
    %v3051 = vadd.f32 %v3050, 0.0009
    %v3052 = vmul.f32 %v3049, %v3051
    %v3053 = vrcp.pop %v3052
    %v3054 = vmul.f32 %v3047, %v3053
    %v3055 = vsel %vm1538, %v3054, 0.0
    %3056 = vadd.xlane.f32.xlu0 %v3055
    %v3057 = vpop.xlane.xlu0 %3056
    %v3058 = vrot.slane %v3057, 4
    %v3059 = vadd.f32 %v3057, %v3058
    %v3060 = vrot.slane %v3059, 2
    %v3061 = vadd.f32 %v3059, %v3060
    %v3062 = vrot.slane %v3061, 1
    %v3063 = vadd.f32 %v3061, %v3062
    %s3064 = vtos %v3063
    %s3065 = sadd.f32 %s2686, %s3064
    %3066 = vmatprep.subr.mxu0 0.0
    %3067 = vmatpush1.msra.mxu0 0.0
    %3068 = vmatprep.subr.mxu0 0.0
    %3069 = vmatpush1.msra.mxu0 0.0
    %3070 = vmatprep.subr.mxu0 0.0
    %3071 = vmatpush1.msra.mxu0 0.0
    %3072 = vmatprep.subr.mxu0 0.0
    %3073 = vmatpush1.msra.mxu0 0.0
    %3074 = vmatprep.subr.mxu0 0.0
    %3075 = vmatpush1.msra.mxu0 0.0
    %3076 = vmatprep.subr.mxu0 0.0
    %3077 = vmatpush1.msra.mxu0 0.0
    %3078 = vmatprep.subr.mxu0 0.0
    %3079 = vmatpush1.msra.mxu0 0.0
    %3080 = vmatprep.subr.mxu0 0.0
    %3081 = vmatpush1.msra.mxu0 0.0
    %3082 = vmatprep.subr.mxu0 0.0
    %3083 = vmatpush1.msra.mxu0 0.0
    %3084 = vmatprep.subr.mxu0 0.0
    %3085 = vmatpush1.msra.mxu0 0.0
    %3086 = vmatprep.subr.mxu0 0.0
    %3087 = vmatpush1.msra.mxu0 0.0
    %3088 = vmatprep.subr.mxu0 0.0
    %3089 = vmatpush1.msra.mxu0 0.0
    %3090 = vmatprep.subr.mxu0 0.0
    %3091 = vmatpush1.msra.mxu0 0.0
    %3092 = vmatprep.subr.mxu0 0.0
    %3093 = vmatpush1.msra.mxu0 0.0
    %3094 = vmatprep.subr.mxu0 0.0
    %3095 = vmatpush1.msra.mxu0 %v372
    %3096 = vmatprep.subr.mxu0 0.0
    %3097 = vmatpush1.msra.mxu0 %v367
    %3098 = vmatprep.subr.mxu0 0.0
    %3099 = vmatpush2.msra.mxu0 0.0
    %3100 = vmatprep.subr.mxu0 0.0
    %3101 = vmatpush2.msra.mxu0 0.0
    %3102 = vmatprep.subr.mxu0 0.0
    %3103 = vmatpush2.msra.mxu0 0.0
    %3104 = vmatprep.subr.mxu0 0.0
    %3105 = vmatpush2.msra.mxu0 0.0
    %3106 = vmatprep.subr.mxu0 0.0
    %3107 = vmatpush2.msra.mxu0 0.0
    %3108 = vmatprep.subr.mxu0 0.0
    %3109 = vmatpush2.msra.mxu0 0.0
    %3110 = vmatprep.subr.mxu0 0.0
    %3111 = vmatpush2.msra.mxu0 0.0
    %3112 = vmatprep.subr.mxu0 0.0
    %3113 = vmatpush2.msra.mxu0 0.0
    %3114 = vmatprep.subr.mxu0 0.0
    %3115 = vmatpush2.msra.mxu0 0.0
    %3116 = vmatprep.subr.mxu0 0.0
    %3117 = vmatpush2.msra.mxu0 0.0
    %3118 = vmatprep.subr.mxu0 0.0
    %3119 = vmatpush2.msra.mxu0 0.0
    %3120 = vmatprep.subr.mxu0 0.0
    %3121 = vmatpush2.msra.mxu0 0.0
    %3122 = vmatprep.subr.mxu0 0.0
    %3123 = vmatpush2.msra.mxu0 0.0
    %3124 = vmatprep.subr.mxu0 0.0
    %3125 = vmatpush2.msra.mxu0 0.0
    %3126 = vmatprep.subr.mxu0 0.0
    %3127 = vmatpush2.msra.mxu0 0.0
    %3128 = vmatprep.subr.mxu0 0.0
    %3129 = vmatpush2.msra.mxu0 0.0
    %3130 = vmatprep.mubr.f32.mxu0 0.0
    %3131 = vmatmul.mubr.f32.gmra.mxu0 %v1168
    %v3132 = vpop.f32.mrf.mxu0
    %v3133 = vadd.f32 0.0, %v3132
    %v3134 = vpop.f32.mrf.mxu0
    %3135 = vdwg.mxu0
    %3136 = vmatprep.subr.mxu0 0.0
    %3137 = vmatpush1.msra.mxu0 0.0
    %3138 = vmatprep.subr.mxu0 0.0
    %3139 = vmatpush1.msra.mxu0 0.0
    %3140 = vmatprep.subr.mxu0 0.0
    %3141 = vmatpush1.msra.mxu0 0.0
    %3142 = vmatprep.subr.mxu0 0.0
    %3143 = vmatpush1.msra.mxu0 0.0
    %3144 = vmatprep.subr.mxu0 0.0
    %3145 = vmatpush1.msra.mxu0 0.0
    %3146 = vmatprep.subr.mxu0 0.0
    %3147 = vmatpush1.msra.mxu0 0.0
    %3148 = vmatprep.subr.mxu0 0.0
    %3149 = vmatpush1.msra.mxu0 0.0
    %3150 = vmatprep.subr.mxu0 0.0
    %3151 = vmatpush1.msra.mxu0 0.0
    %3152 = vmatprep.subr.mxu0 0.0
    %3153 = vmatpush1.msra.mxu0 0.0
    %3154 = vmatprep.subr.mxu0 0.0
    %3155 = vmatpush1.msra.mxu0 0.0
    %3156 = vmatprep.subr.mxu0 0.0
    %3157 = vmatpush1.msra.mxu0 0.0
    %3158 = vmatprep.subr.mxu0 0.0
    %3159 = vmatpush1.msra.mxu0 0.0
    %3160 = vmatprep.subr.mxu0 0.0
    %3161 = vmatpush1.msra.mxu0 0.0
    %3162 = vmatprep.subr.mxu0 0.0
    %3163 = vmatpush1.msra.mxu0 0.0
    %3164 = vmatprep.subr.mxu0 0.0
    %3165 = vmatpush1.msra.mxu0 %v565
    %3166 = vmatprep.subr.mxu0 0.0
    %3167 = vmatpush1.msra.mxu0 %v560
    %3168 = vmatprep.subr.mxu0 0.0
    %3169 = vmatpush2.msra.mxu0 0.0
    %3170 = vmatprep.subr.mxu0 0.0
    %3171 = vmatpush2.msra.mxu0 0.0
    %3172 = vmatprep.subr.mxu0 0.0
    %3173 = vmatpush2.msra.mxu0 0.0
    %3174 = vmatprep.subr.mxu0 0.0
    %3175 = vmatpush2.msra.mxu0 0.0
    %3176 = vmatprep.subr.mxu0 0.0
    %3177 = vmatpush2.msra.mxu0 0.0
    %3178 = vmatprep.subr.mxu0 0.0
    %3179 = vmatpush2.msra.mxu0 0.0
    %3180 = vmatprep.subr.mxu0 0.0
    %3181 = vmatpush2.msra.mxu0 0.0
    %3182 = vmatprep.subr.mxu0 0.0
    %3183 = vmatpush2.msra.mxu0 0.0
    %3184 = vmatprep.subr.mxu0 0.0
    %3185 = vmatpush2.msra.mxu0 0.0
    %3186 = vmatprep.subr.mxu0 0.0
    %3187 = vmatpush2.msra.mxu0 0.0
    %3188 = vmatprep.subr.mxu0 0.0
    %3189 = vmatpush2.msra.mxu0 0.0
    %3190 = vmatprep.subr.mxu0 0.0
    %3191 = vmatpush2.msra.mxu0 0.0
    %3192 = vmatprep.subr.mxu0 0.0
    %3193 = vmatpush2.msra.mxu0 0.0
    %3194 = vmatprep.subr.mxu0 0.0
    %3195 = vmatpush2.msra.mxu0 0.0
    %3196 = vmatprep.subr.mxu0 0.0
    %3197 = vmatpush2.msra.mxu0 0.0
    %3198 = vmatprep.subr.mxu0 0.0
    %3199 = vmatpush2.msra.mxu0 0.0
    %3200 = vmatprep.mubr.f32.mxu0 0.0
    %3201 = vmatmul.mubr.f32.gmra.mxu0 %v1168
    %v3202 = vpop.f32.mrf.mxu0
    %v3203 = vadd.f32 0.0, %v3202
    %v3204 = vpop.f32.mrf.mxu0
    %3205 = vdwg.mxu0
    %3206 = vmatprep.subr.mxu0 0.0
    %3207 = vmatpush1.msra.mxu0 0.0
    %3208 = vmatprep.subr.mxu0 0.0
    %3209 = vmatpush1.msra.mxu0 0.0
    %3210 = vmatprep.subr.mxu0 0.0
    %3211 = vmatpush1.msra.mxu0 0.0
    %3212 = vmatprep.subr.mxu0 0.0
    %3213 = vmatpush1.msra.mxu0 0.0
    %3214 = vmatprep.subr.mxu0 0.0
    %3215 = vmatpush1.msra.mxu0 0.0
    %3216 = vmatprep.subr.mxu0 0.0
    %3217 = vmatpush1.msra.mxu0 0.0
    %3218 = vmatprep.subr.mxu0 0.0
    %3219 = vmatpush1.msra.mxu0 0.0
    %3220 = vmatprep.subr.mxu0 0.0
    %3221 = vmatpush1.msra.mxu0 0.0
    %3222 = vmatprep.subr.mxu0 0.0
    %3223 = vmatpush1.msra.mxu0 0.0
    %3224 = vmatprep.subr.mxu0 0.0
    %3225 = vmatpush1.msra.mxu0 0.0
    %3226 = vmatprep.subr.mxu0 0.0
    %3227 = vmatpush1.msra.mxu0 0.0
    %3228 = vmatprep.subr.mxu0 0.0
    %3229 = vmatpush1.msra.mxu0 0.0
    %3230 = vmatprep.subr.mxu0 0.0
    %3231 = vmatpush1.msra.mxu0 0.0
    %3232 = vmatprep.subr.mxu0 0.0
    %3233 = vmatpush1.msra.mxu0 0.0
    %3234 = vmatprep.subr.mxu0 0.0
    %3235 = vmatpush1.msra.mxu0 %v758
    %3236 = vmatprep.subr.mxu0 0.0
    %3237 = vmatpush1.msra.mxu0 %v753
    %3238 = vmatprep.subr.mxu0 0.0
    %3239 = vmatpush2.msra.mxu0 0.0
    %3240 = vmatprep.subr.mxu0 0.0
    %3241 = vmatpush2.msra.mxu0 0.0
    %3242 = vmatprep.subr.mxu0 0.0
    %3243 = vmatpush2.msra.mxu0 0.0
    %3244 = vmatprep.subr.mxu0 0.0
    %3245 = vmatpush2.msra.mxu0 0.0
    %3246 = vmatprep.subr.mxu0 0.0
    %3247 = vmatpush2.msra.mxu0 0.0
    %3248 = vmatprep.subr.mxu0 0.0
    %3249 = vmatpush2.msra.mxu0 0.0
    %3250 = vmatprep.subr.mxu0 0.0
    %3251 = vmatpush2.msra.mxu0 0.0
    %3252 = vmatprep.subr.mxu0 0.0
    %3253 = vmatpush2.msra.mxu0 0.0
    %3254 = vmatprep.subr.mxu0 0.0
    %3255 = vmatpush2.msra.mxu0 0.0
    %3256 = vmatprep.subr.mxu0 0.0
    %3257 = vmatpush2.msra.mxu0 0.0
    %3258 = vmatprep.subr.mxu0 0.0
    %3259 = vmatpush2.msra.mxu0 0.0
    %3260 = vmatprep.subr.mxu0 0.0
    %3261 = vmatpush2.msra.mxu0 0.0
    %3262 = vmatprep.subr.mxu0 0.0
    %3263 = vmatpush2.msra.mxu0 0.0
    %3264 = vmatprep.subr.mxu0 0.0
    %3265 = vmatpush2.msra.mxu0 0.0
    %3266 = vmatprep.subr.mxu0 0.0
    %3267 = vmatpush2.msra.mxu0 0.0
    %3268 = vmatprep.subr.mxu0 0.0
    %3269 = vmatpush2.msra.mxu0 0.0
    %3270 = vmatprep.mubr.f32.mxu0 0.0
    %3271 = vmatmul.mubr.f32.gmra.mxu0 %v1168
    %v3272 = vpop.f32.mrf.mxu0
    %v3273 = vadd.f32 0.0, %v3272
    %v3274 = vpop.f32.mrf.mxu0
    %3275 = vdwg.mxu0
    %3276 = vmatprep.subr.mxu0 0.0
    %3277 = vmatpush1.msra.mxu0 0.0
    %3278 = vmatprep.subr.mxu0 0.0
    %3279 = vmatpush1.msra.mxu0 0.0
    %3280 = vmatprep.subr.mxu0 0.0
    %3281 = vmatpush1.msra.mxu0 0.0
    %3282 = vmatprep.subr.mxu0 0.0
    %3283 = vmatpush1.msra.mxu0 0.0
    %3284 = vmatprep.subr.mxu0 0.0
    %3285 = vmatpush1.msra.mxu0 0.0
    %3286 = vmatprep.subr.mxu0 0.0
    %3287 = vmatpush1.msra.mxu0 0.0
    %3288 = vmatprep.subr.mxu0 0.0
    %3289 = vmatpush1.msra.mxu0 0.0
    %3290 = vmatprep.subr.mxu0 0.0
    %3291 = vmatpush1.msra.mxu0 0.0
    %3292 = vmatprep.subr.mxu0 0.0
    %3293 = vmatpush1.msra.mxu0 0.0
    %3294 = vmatprep.subr.mxu0 0.0
    %3295 = vmatpush1.msra.mxu0 0.0
    %3296 = vmatprep.subr.mxu0 0.0
    %3297 = vmatpush1.msra.mxu0 0.0
    %3298 = vmatprep.subr.mxu0 0.0
    %3299 = vmatpush1.msra.mxu0 0.0
    %3300 = vmatprep.subr.mxu0 0.0
    %3301 = vmatpush1.msra.mxu0 0.0
    %3302 = vmatprep.subr.mxu0 0.0
    %3303 = vmatpush1.msra.mxu0 0.0
    %3304 = vmatprep.subr.mxu0 0.0
    %3305 = vmatpush1.msra.mxu0 %v951
    %3306 = vmatprep.subr.mxu0 0.0
    %3307 = vmatpush1.msra.mxu0 %v946
    %3308 = vmatprep.subr.mxu0 0.0
    %3309 = vmatpush2.msra.mxu0 0.0
    %3310 = vmatprep.subr.mxu0 0.0
    %3311 = vmatpush2.msra.mxu0 0.0
    %3312 = vmatprep.subr.mxu0 0.0
    %3313 = vmatpush2.msra.mxu0 0.0
    %3314 = vmatprep.subr.mxu0 0.0
    %3315 = vmatpush2.msra.mxu0 0.0
    %3316 = vmatprep.subr.mxu0 0.0
    %3317 = vmatpush2.msra.mxu0 0.0
    %3318 = vmatprep.subr.mxu0 0.0
    %3319 = vmatpush2.msra.mxu0 0.0
    %3320 = vmatprep.subr.mxu0 0.0
    %3321 = vmatpush2.msra.mxu0 0.0
    %3322 = vmatprep.subr.mxu0 0.0
    %3323 = vmatpush2.msra.mxu0 0.0
    %3324 = vmatprep.subr.mxu0 0.0
    %3325 = vmatpush2.msra.mxu0 0.0
    %3326 = vmatprep.subr.mxu0 0.0
    %3327 = vmatpush2.msra.mxu0 0.0
    %3328 = vmatprep.subr.mxu0 0.0
    %3329 = vmatpush2.msra.mxu0 0.0
    %3330 = vmatprep.subr.mxu0 0.0
    %3331 = vmatpush2.msra.mxu0 0.0
    %3332 = vmatprep.subr.mxu0 0.0
    %3333 = vmatpush2.msra.mxu0 0.0
    %3334 = vmatprep.subr.mxu0 0.0
    %3335 = vmatpush2.msra.mxu0 0.0
    %3336 = vmatprep.subr.mxu0 0.0
    %3337 = vmatpush2.msra.mxu0 0.0
    %3338 = vmatprep.subr.mxu0 0.0
    %3339 = vmatpush2.msra.mxu0 0.0
    %3340 = vmatprep.mubr.f32.mxu0 0.0
    %3341 = vmatmul.mubr.f32.gmra.mxu0 %v1168
    %v3342 = vpop.f32.mrf.mxu0
    %v3343 = vadd.f32 0.0, %v3342
    %v3344 = vpop.f32.mrf.mxu0
    %3345 = vdwg.mxu0
    %3346 = vmatprep.subr.mxu0 0.0
    %3347 = vmatpush1.msra.mxu0 0.0
    %3348 = vmatprep.subr.mxu0 0.0
    %3349 = vmatpush1.msra.mxu0 0.0
    %3350 = vmatprep.subr.mxu0 0.0
    %3351 = vmatpush1.msra.mxu0 0.0
    %3352 = vmatprep.subr.mxu0 0.0
    %3353 = vmatpush1.msra.mxu0 0.0
    %3354 = vmatprep.subr.mxu0 0.0
    %3355 = vmatpush1.msra.mxu0 0.0
    %3356 = vmatprep.subr.mxu0 0.0
    %3357 = vmatpush1.msra.mxu0 0.0
    %3358 = vmatprep.subr.mxu0 0.0
    %3359 = vmatpush1.msra.mxu0 0.0
    %3360 = vmatprep.subr.mxu0 0.0
    %3361 = vmatpush1.msra.mxu0 0.0
    %3362 = vmatprep.subr.mxu0 0.0
    %3363 = vmatpush1.msra.mxu0 0.0
    %3364 = vmatprep.subr.mxu0 0.0
    %3365 = vmatpush1.msra.mxu0 0.0
    %3366 = vmatprep.subr.mxu0 0.0
    %3367 = vmatpush1.msra.mxu0 0.0
    %3368 = vmatprep.subr.mxu0 0.0
    %3369 = vmatpush1.msra.mxu0 0.0
    %3370 = vmatprep.subr.mxu0 0.0
    %3371 = vmatpush1.msra.mxu0 0.0
    %3372 = vmatprep.subr.mxu0 0.0
    %3373 = vmatpush1.msra.mxu0 0.0
    %3374 = vmatprep.subr.mxu0 0.0
    %3375 = vmatpush1.msra.mxu0 %v1144
    %3376 = vmatprep.subr.mxu0 0.0
    %3377 = vmatpush1.msra.mxu0 %v1139
    %3378 = vmatprep.subr.mxu0 0.0
    %3379 = vmatpush2.msra.mxu0 0.0
    %3380 = vmatprep.subr.mxu0 0.0
    %3381 = vmatpush2.msra.mxu0 0.0
    %3382 = vmatprep.subr.mxu0 0.0
    %3383 = vmatpush2.msra.mxu0 0.0
    %3384 = vmatprep.subr.mxu0 0.0
    %3385 = vmatpush2.msra.mxu0 0.0
    %3386 = vmatprep.subr.mxu0 0.0
    %3387 = vmatpush2.msra.mxu0 0.0
    %3388 = vmatprep.subr.mxu0 0.0
    %3389 = vmatpush2.msra.mxu0 0.0
    %3390 = vmatprep.subr.mxu0 0.0
    %3391 = vmatpush2.msra.mxu0 0.0
    %3392 = vmatprep.subr.mxu0 0.0
    %3393 = vmatpush2.msra.mxu0 0.0
    %3394 = vmatprep.subr.mxu0 0.0
    %3395 = vmatpush2.msra.mxu0 0.0
    %3396 = vmatprep.subr.mxu0 0.0
    %3397 = vmatpush2.msra.mxu0 0.0
    %3398 = vmatprep.subr.mxu0 0.0
    %3399 = vmatpush2.msra.mxu0 0.0
    %3400 = vmatprep.subr.mxu0 0.0
    %3401 = vmatpush2.msra.mxu0 0.0
    %3402 = vmatprep.subr.mxu0 0.0
    %3403 = vmatpush2.msra.mxu0 0.0
    %3404 = vmatprep.subr.mxu0 0.0
    %3405 = vmatpush2.msra.mxu0 0.0
    %3406 = vmatprep.subr.mxu0 0.0
    %3407 = vmatpush2.msra.mxu0 0.0
    %3408 = vmatprep.subr.mxu0 0.0
    %3409 = vmatpush2.msra.mxu0 0.0
    %3410 = vmatprep.mubr.f32.mxu0 0.0
    %3411 = vmatmul.mubr.f32.gmra.mxu0 %v1168
    %v3412 = vpop.f32.mrf.mxu0
    %v3413 = vadd.f32 0.0, %v3412
    %v3414 = vpop.f32.mrf.mxu0
    %3415 = vdwg.mxu0
    %v3416 = vmul.f32 %v3133, %v3133
    %v3417 = vmul.f32 %v3203, %v3203
    %v3418 = vmul.f32 %v3133, %v3203
    %v3419 = vsub.f32 %v3273, %v3416
    %v3420 = vsub.f32 %v3343, %v3417
    %v3421 = vsub.f32 %v3413, %v3418
    %v3422 = vmul.f32 %v3418, 2.0
    %v3423 = vadd.f32 %v3422, 0.0001
    %v3424 = vmul.f32 %v3421, 2.0
    %v3425 = vadd.f32 %v3424, 0.0009
    %v3426 = vmul.f32 %v3423, %v3425
    %v3427 = vadd.f32 %v3416, %v3417
    %v3428 = vadd.f32 %v3427, 0.0001
    %v3429 = vadd.f32 %v3419, %v3420
    %v3430 = vadd.f32 %v3429, 0.0009
    %v3431 = vmul.f32 %v3428, %v3430
    %v3432 = vrcp.pop %v3431
    %v3433 = vmul.f32 %v3426, %v3432
    %v3434 = vsel %vm1538, %v3433, 0.0
    %3435 = vadd.xlane.f32.xlu0 %v3434
    %v3436 = vpop.xlane.xlu0 %3435
    %v3437 = vrot.slane %v3436, 4
    %v3438 = vadd.f32 %v3436, %v3437
    %v3439 = vrot.slane %v3438, 2
    %v3440 = vadd.f32 %v3438, %v3439
    %v3441 = vrot.slane %v3440, 1
    %v3442 = vadd.f32 %v3440, %v3441
    %s3443 = vtos %v3442
    %s3444 = sadd.f32 %s3065, %s3443
    %3445 = vmatprep.subr.mxu0 0.0
    %3446 = vmatpush1.msra.mxu0 0.0
    %3447 = vmatprep.subr.mxu0 0.0
    %3448 = vmatpush1.msra.mxu0 0.0
    %3449 = vmatprep.subr.mxu0 0.0
    %3450 = vmatpush1.msra.mxu0 0.0
    %3451 = vmatprep.subr.mxu0 0.0
    %3452 = vmatpush1.msra.mxu0 0.0
    %3453 = vmatprep.subr.mxu0 0.0
    %3454 = vmatpush1.msra.mxu0 0.0
    %3455 = vmatprep.subr.mxu0 0.0
    %3456 = vmatpush1.msra.mxu0 0.0
    %3457 = vmatprep.subr.mxu0 0.0
    %3458 = vmatpush1.msra.mxu0 0.0
    %3459 = vmatprep.subr.mxu0 0.0
    %3460 = vmatpush1.msra.mxu0 0.0
    %3461 = vmatprep.subr.mxu0 0.0
    %3462 = vmatpush1.msra.mxu0 0.0
    %3463 = vmatprep.subr.mxu0 0.0
    %3464 = vmatpush1.msra.mxu0 0.0
    %3465 = vmatprep.subr.mxu0 0.0
    %3466 = vmatpush1.msra.mxu0 0.0
    %3467 = vmatprep.subr.mxu0 0.0
    %3468 = vmatpush1.msra.mxu0 0.0
    %3469 = vmatprep.subr.mxu0 0.0
    %3470 = vmatpush1.msra.mxu0 0.0
    %3471 = vmatprep.subr.mxu0 0.0
    %3472 = vmatpush1.msra.mxu0 0.0
    %3473 = vmatprep.subr.mxu0 0.0
    %3474 = vmatpush1.msra.mxu0 %v382
    %3475 = vmatprep.subr.mxu0 0.0
    %3476 = vmatpush1.msra.mxu0 %v377
    %3477 = vmatprep.subr.mxu0 0.0
    %3478 = vmatpush2.msra.mxu0 0.0
    %3479 = vmatprep.subr.mxu0 0.0
    %3480 = vmatpush2.msra.mxu0 0.0
    %3481 = vmatprep.subr.mxu0 0.0
    %3482 = vmatpush2.msra.mxu0 0.0
    %3483 = vmatprep.subr.mxu0 0.0
    %3484 = vmatpush2.msra.mxu0 0.0
    %3485 = vmatprep.subr.mxu0 0.0
    %3486 = vmatpush2.msra.mxu0 0.0
    %3487 = vmatprep.subr.mxu0 0.0
    %3488 = vmatpush2.msra.mxu0 0.0
    %3489 = vmatprep.subr.mxu0 0.0
    %3490 = vmatpush2.msra.mxu0 0.0
    %3491 = vmatprep.subr.mxu0 0.0
    %3492 = vmatpush2.msra.mxu0 0.0
    %3493 = vmatprep.subr.mxu0 0.0
    %3494 = vmatpush2.msra.mxu0 0.0
    %3495 = vmatprep.subr.mxu0 0.0
    %3496 = vmatpush2.msra.mxu0 0.0
    %3497 = vmatprep.subr.mxu0 0.0
    %3498 = vmatpush2.msra.mxu0 0.0
    %3499 = vmatprep.subr.mxu0 0.0
    %3500 = vmatpush2.msra.mxu0 0.0
    %3501 = vmatprep.subr.mxu0 0.0
    %3502 = vmatpush2.msra.mxu0 0.0
    %3503 = vmatprep.subr.mxu0 0.0
    %3504 = vmatpush2.msra.mxu0 0.0
    %3505 = vmatprep.subr.mxu0 0.0
    %3506 = vmatpush2.msra.mxu0 0.0
    %3507 = vmatprep.subr.mxu0 0.0
    %3508 = vmatpush2.msra.mxu0 0.0
    %3509 = vmatprep.mubr.f32.mxu0 0.0
    %3510 = vmatmul.mubr.f32.gmra.mxu0 %v1168
    %v3511 = vpop.f32.mrf.mxu0
    %v3512 = vadd.f32 0.0, %v3511
    %v3513 = vpop.f32.mrf.mxu0
    %3514 = vdwg.mxu0
    %3515 = vmatprep.subr.mxu0 0.0
    %3516 = vmatpush1.msra.mxu0 0.0
    %3517 = vmatprep.subr.mxu0 0.0
    %3518 = vmatpush1.msra.mxu0 0.0
    %3519 = vmatprep.subr.mxu0 0.0
    %3520 = vmatpush1.msra.mxu0 0.0
    %3521 = vmatprep.subr.mxu0 0.0
    %3522 = vmatpush1.msra.mxu0 0.0
    %3523 = vmatprep.subr.mxu0 0.0
    %3524 = vmatpush1.msra.mxu0 0.0
    %3525 = vmatprep.subr.mxu0 0.0
    %3526 = vmatpush1.msra.mxu0 0.0
    %3527 = vmatprep.subr.mxu0 0.0
    %3528 = vmatpush1.msra.mxu0 0.0
    %3529 = vmatprep.subr.mxu0 0.0
    %3530 = vmatpush1.msra.mxu0 0.0
    %3531 = vmatprep.subr.mxu0 0.0
    %3532 = vmatpush1.msra.mxu0 0.0
    %3533 = vmatprep.subr.mxu0 0.0
    %3534 = vmatpush1.msra.mxu0 0.0
    %3535 = vmatprep.subr.mxu0 0.0
    %3536 = vmatpush1.msra.mxu0 0.0
    %3537 = vmatprep.subr.mxu0 0.0
    %3538 = vmatpush1.msra.mxu0 0.0
    %3539 = vmatprep.subr.mxu0 0.0
    %3540 = vmatpush1.msra.mxu0 0.0
    %3541 = vmatprep.subr.mxu0 0.0
    %3542 = vmatpush1.msra.mxu0 0.0
    %3543 = vmatprep.subr.mxu0 0.0
    %3544 = vmatpush1.msra.mxu0 %v575
    %3545 = vmatprep.subr.mxu0 0.0
    %3546 = vmatpush1.msra.mxu0 %v570
    %3547 = vmatprep.subr.mxu0 0.0
    %3548 = vmatpush2.msra.mxu0 0.0
    %3549 = vmatprep.subr.mxu0 0.0
    %3550 = vmatpush2.msra.mxu0 0.0
    %3551 = vmatprep.subr.mxu0 0.0
    %3552 = vmatpush2.msra.mxu0 0.0
    %3553 = vmatprep.subr.mxu0 0.0
    %3554 = vmatpush2.msra.mxu0 0.0
    %3555 = vmatprep.subr.mxu0 0.0
    %3556 = vmatpush2.msra.mxu0 0.0
    %3557 = vmatprep.subr.mxu0 0.0
    %3558 = vmatpush2.msra.mxu0 0.0
    %3559 = vmatprep.subr.mxu0 0.0
    %3560 = vmatpush2.msra.mxu0 0.0
    %3561 = vmatprep.subr.mxu0 0.0
    %3562 = vmatpush2.msra.mxu0 0.0
    %3563 = vmatprep.subr.mxu0 0.0
    %3564 = vmatpush2.msra.mxu0 0.0
    %3565 = vmatprep.subr.mxu0 0.0
    %3566 = vmatpush2.msra.mxu0 0.0
    %3567 = vmatprep.subr.mxu0 0.0
    %3568 = vmatpush2.msra.mxu0 0.0
    %3569 = vmatprep.subr.mxu0 0.0
    %3570 = vmatpush2.msra.mxu0 0.0
    %3571 = vmatprep.subr.mxu0 0.0
    %3572 = vmatpush2.msra.mxu0 0.0
    %3573 = vmatprep.subr.mxu0 0.0
    %3574 = vmatpush2.msra.mxu0 0.0
    %3575 = vmatprep.subr.mxu0 0.0
    %3576 = vmatpush2.msra.mxu0 0.0
    %3577 = vmatprep.subr.mxu0 0.0
    %3578 = vmatpush2.msra.mxu0 0.0
    %3579 = vmatprep.mubr.f32.mxu0 0.0
    %3580 = vmatmul.mubr.f32.gmra.mxu0 %v1168
    %v3581 = vpop.f32.mrf.mxu0
    %v3582 = vadd.f32 0.0, %v3581
    %v3583 = vpop.f32.mrf.mxu0
    %3584 = vdwg.mxu0
    %3585 = vmatprep.subr.mxu0 0.0
    %3586 = vmatpush1.msra.mxu0 0.0
    %3587 = vmatprep.subr.mxu0 0.0
    %3588 = vmatpush1.msra.mxu0 0.0
    %3589 = vmatprep.subr.mxu0 0.0
    %3590 = vmatpush1.msra.mxu0 0.0
    %3591 = vmatprep.subr.mxu0 0.0
    %3592 = vmatpush1.msra.mxu0 0.0
    %3593 = vmatprep.subr.mxu0 0.0
    %3594 = vmatpush1.msra.mxu0 0.0
    %3595 = vmatprep.subr.mxu0 0.0
    %3596 = vmatpush1.msra.mxu0 0.0
    %3597 = vmatprep.subr.mxu0 0.0
    %3598 = vmatpush1.msra.mxu0 0.0
    %3599 = vmatprep.subr.mxu0 0.0
    %3600 = vmatpush1.msra.mxu0 0.0
    %3601 = vmatprep.subr.mxu0 0.0
    %3602 = vmatpush1.msra.mxu0 0.0
    %3603 = vmatprep.subr.mxu0 0.0
    %3604 = vmatpush1.msra.mxu0 0.0
    %3605 = vmatprep.subr.mxu0 0.0
    %3606 = vmatpush1.msra.mxu0 0.0
    %3607 = vmatprep.subr.mxu0 0.0
    %3608 = vmatpush1.msra.mxu0 0.0
    %3609 = vmatprep.subr.mxu0 0.0
    %3610 = vmatpush1.msra.mxu0 0.0
    %3611 = vmatprep.subr.mxu0 0.0
    %3612 = vmatpush1.msra.mxu0 0.0
    %3613 = vmatprep.subr.mxu0 0.0
    %3614 = vmatpush1.msra.mxu0 %v768
    %3615 = vmatprep.subr.mxu0 0.0
    %3616 = vmatpush1.msra.mxu0 %v763
    %3617 = vmatprep.subr.mxu0 0.0
    %3618 = vmatpush2.msra.mxu0 0.0
    %3619 = vmatprep.subr.mxu0 0.0
    %3620 = vmatpush2.msra.mxu0 0.0
    %3621 = vmatprep.subr.mxu0 0.0
    %3622 = vmatpush2.msra.mxu0 0.0
    %3623 = vmatprep.subr.mxu0 0.0
    %3624 = vmatpush2.msra.mxu0 0.0
    %3625 = vmatprep.subr.mxu0 0.0
    %3626 = vmatpush2.msra.mxu0 0.0
    %3627 = vmatprep.subr.mxu0 0.0
    %3628 = vmatpush2.msra.mxu0 0.0
    %3629 = vmatprep.subr.mxu0 0.0
    %3630 = vmatpush2.msra.mxu0 0.0
    %3631 = vmatprep.subr.mxu0 0.0
    %3632 = vmatpush2.msra.mxu0 0.0
    %3633 = vmatprep.subr.mxu0 0.0
    %3634 = vmatpush2.msra.mxu0 0.0
    %3635 = vmatprep.subr.mxu0 0.0
    %3636 = vmatpush2.msra.mxu0 0.0
    %3637 = vmatprep.subr.mxu0 0.0
    %3638 = vmatpush2.msra.mxu0 0.0
    %3639 = vmatprep.subr.mxu0 0.0
    %3640 = vmatpush2.msra.mxu0 0.0
    %3641 = vmatprep.subr.mxu0 0.0
    %3642 = vmatpush2.msra.mxu0 0.0
    %3643 = vmatprep.subr.mxu0 0.0
    %3644 = vmatpush2.msra.mxu0 0.0
    %3645 = vmatprep.subr.mxu0 0.0
    %3646 = vmatpush2.msra.mxu0 0.0
    %3647 = vmatprep.subr.mxu0 0.0
    %3648 = vmatpush2.msra.mxu0 0.0
    %3649 = vmatprep.mubr.f32.mxu0 0.0
    %3650 = vmatmul.mubr.f32.gmra.mxu0 %v1168
    %v3651 = vpop.f32.mrf.mxu0
    %v3652 = vadd.f32 0.0, %v3651
    %v3653 = vpop.f32.mrf.mxu0
    %3654 = vdwg.mxu0
    %3655 = vmatprep.subr.mxu0 0.0
    %3656 = vmatpush1.msra.mxu0 0.0
    %3657 = vmatprep.subr.mxu0 0.0
    %3658 = vmatpush1.msra.mxu0 0.0
    %3659 = vmatprep.subr.mxu0 0.0
    %3660 = vmatpush1.msra.mxu0 0.0
    %3661 = vmatprep.subr.mxu0 0.0
    %3662 = vmatpush1.msra.mxu0 0.0
    %3663 = vmatprep.subr.mxu0 0.0
    %3664 = vmatpush1.msra.mxu0 0.0
    %3665 = vmatprep.subr.mxu0 0.0
    %3666 = vmatpush1.msra.mxu0 0.0
    %3667 = vmatprep.subr.mxu0 0.0
    %3668 = vmatpush1.msra.mxu0 0.0
    %3669 = vmatprep.subr.mxu0 0.0
    %3670 = vmatpush1.msra.mxu0 0.0
    %3671 = vmatprep.subr.mxu0 0.0
    %3672 = vmatpush1.msra.mxu0 0.0
    %3673 = vmatprep.subr.mxu0 0.0
    %3674 = vmatpush1.msra.mxu0 0.0
    %3675 = vmatprep.subr.mxu0 0.0
    %3676 = vmatpush1.msra.mxu0 0.0
    %3677 = vmatprep.subr.mxu0 0.0
    %3678 = vmatpush1.msra.mxu0 0.0
    %3679 = vmatprep.subr.mxu0 0.0
    %3680 = vmatpush1.msra.mxu0 0.0
    %3681 = vmatprep.subr.mxu0 0.0
    %3682 = vmatpush1.msra.mxu0 0.0
    %3683 = vmatprep.subr.mxu0 0.0
    %3684 = vmatpush1.msra.mxu0 %v961
    %3685 = vmatprep.subr.mxu0 0.0
    %3686 = vmatpush1.msra.mxu0 %v956
    %3687 = vmatprep.subr.mxu0 0.0
    %3688 = vmatpush2.msra.mxu0 0.0
    %3689 = vmatprep.subr.mxu0 0.0
    %3690 = vmatpush2.msra.mxu0 0.0
    %3691 = vmatprep.subr.mxu0 0.0
    %3692 = vmatpush2.msra.mxu0 0.0
    %3693 = vmatprep.subr.mxu0 0.0
    %3694 = vmatpush2.msra.mxu0 0.0
    %3695 = vmatprep.subr.mxu0 0.0
    %3696 = vmatpush2.msra.mxu0 0.0
    %3697 = vmatprep.subr.mxu0 0.0
    %3698 = vmatpush2.msra.mxu0 0.0
    %3699 = vmatprep.subr.mxu0 0.0
    %3700 = vmatpush2.msra.mxu0 0.0
    %3701 = vmatprep.subr.mxu0 0.0
    %3702 = vmatpush2.msra.mxu0 0.0
    %3703 = vmatprep.subr.mxu0 0.0
    %3704 = vmatpush2.msra.mxu0 0.0
    %3705 = vmatprep.subr.mxu0 0.0
    %3706 = vmatpush2.msra.mxu0 0.0
    %3707 = vmatprep.subr.mxu0 0.0
    %3708 = vmatpush2.msra.mxu0 0.0
    %3709 = vmatprep.subr.mxu0 0.0
    %3710 = vmatpush2.msra.mxu0 0.0
    %3711 = vmatprep.subr.mxu0 0.0
    %3712 = vmatpush2.msra.mxu0 0.0
    %3713 = vmatprep.subr.mxu0 0.0
    %3714 = vmatpush2.msra.mxu0 0.0
    %3715 = vmatprep.subr.mxu0 0.0
    %3716 = vmatpush2.msra.mxu0 0.0
    %3717 = vmatprep.subr.mxu0 0.0
    %3718 = vmatpush2.msra.mxu0 0.0
    %3719 = vmatprep.mubr.f32.mxu0 0.0
    %3720 = vmatmul.mubr.f32.gmra.mxu0 %v1168
    %v3721 = vpop.f32.mrf.mxu0
    %v3722 = vadd.f32 0.0, %v3721
    %v3723 = vpop.f32.mrf.mxu0
    %3724 = vdwg.mxu0
    %3725 = vmatprep.subr.mxu0 0.0
    %3726 = vmatpush1.msra.mxu0 0.0
    %3727 = vmatprep.subr.mxu0 0.0
    %3728 = vmatpush1.msra.mxu0 0.0
    %3729 = vmatprep.subr.mxu0 0.0
    %3730 = vmatpush1.msra.mxu0 0.0
    %3731 = vmatprep.subr.mxu0 0.0
    %3732 = vmatpush1.msra.mxu0 0.0
    %3733 = vmatprep.subr.mxu0 0.0
    %3734 = vmatpush1.msra.mxu0 0.0
    %3735 = vmatprep.subr.mxu0 0.0
    %3736 = vmatpush1.msra.mxu0 0.0
    %3737 = vmatprep.subr.mxu0 0.0
    %3738 = vmatpush1.msra.mxu0 0.0
    %3739 = vmatprep.subr.mxu0 0.0
    %3740 = vmatpush1.msra.mxu0 0.0
    %3741 = vmatprep.subr.mxu0 0.0
    %3742 = vmatpush1.msra.mxu0 0.0
    %3743 = vmatprep.subr.mxu0 0.0
    %3744 = vmatpush1.msra.mxu0 0.0
    %3745 = vmatprep.subr.mxu0 0.0
    %3746 = vmatpush1.msra.mxu0 0.0
    %3747 = vmatprep.subr.mxu0 0.0
    %3748 = vmatpush1.msra.mxu0 0.0
    %3749 = vmatprep.subr.mxu0 0.0
    %3750 = vmatpush1.msra.mxu0 0.0
    %3751 = vmatprep.subr.mxu0 0.0
    %3752 = vmatpush1.msra.mxu0 0.0
    %3753 = vmatprep.subr.mxu0 0.0
    %3754 = vmatpush1.msra.mxu0 %v1154
    %3755 = vmatprep.subr.mxu0 0.0
    %3756 = vmatpush1.msra.mxu0 %v1149
    %3757 = vmatprep.subr.mxu0 0.0
    %3758 = vmatpush2.msra.mxu0 0.0
    %3759 = vmatprep.subr.mxu0 0.0
    %3760 = vmatpush2.msra.mxu0 0.0
    %3761 = vmatprep.subr.mxu0 0.0
    %3762 = vmatpush2.msra.mxu0 0.0
    %3763 = vmatprep.subr.mxu0 0.0
    %3764 = vmatpush2.msra.mxu0 0.0
    %3765 = vmatprep.subr.mxu0 0.0
    %3766 = vmatpush2.msra.mxu0 0.0
    %3767 = vmatprep.subr.mxu0 0.0
    %3768 = vmatpush2.msra.mxu0 0.0
    %3769 = vmatprep.subr.mxu0 0.0
    %3770 = vmatpush2.msra.mxu0 0.0
    %3771 = vmatprep.subr.mxu0 0.0
    %3772 = vmatpush2.msra.mxu0 0.0
    %3773 = vmatprep.subr.mxu0 0.0
    %3774 = vmatpush2.msra.mxu0 0.0
    %3775 = vmatprep.subr.mxu0 0.0
    %3776 = vmatpush2.msra.mxu0 0.0
    %3777 = vmatprep.subr.mxu0 0.0
    %3778 = vmatpush2.msra.mxu0 0.0
    %3779 = vmatprep.subr.mxu0 0.0
    %3780 = vmatpush2.msra.mxu0 0.0
    %3781 = vmatprep.subr.mxu0 0.0
    %3782 = vmatpush2.msra.mxu0 0.0
    %3783 = vmatprep.subr.mxu0 0.0
    %3784 = vmatpush2.msra.mxu0 0.0
    %3785 = vmatprep.subr.mxu0 0.0
    %3786 = vmatpush2.msra.mxu0 0.0
    %3787 = vmatprep.subr.mxu0 0.0
    %3788 = vmatpush2.msra.mxu0 0.0
    %3789 = vmatprep.mubr.f32.mxu0 0.0
    %3790 = vmatmul.mubr.f32.gmra.mxu0 %v1168
    %v3791 = vpop.f32.mrf.mxu0
    %v3792 = vadd.f32 0.0, %v3791
    %v3793 = vpop.f32.mrf.mxu0
    %3794 = vdwg.mxu0
    %v3795 = vmul.f32 %v3512, %v3512
    %v3796 = vmul.f32 %v3582, %v3582
    %v3797 = vmul.f32 %v3512, %v3582
    %v3798 = vsub.f32 %v3652, %v3795
    %v3799 = vsub.f32 %v3722, %v3796
    %v3800 = vsub.f32 %v3792, %v3797
    %v3801 = vmul.f32 %v3797, 2.0
    %v3802 = vadd.f32 %v3801, 0.0001
    %v3803 = vmul.f32 %v3800, 2.0
    %v3804 = vadd.f32 %v3803, 0.0009
    %v3805 = vmul.f32 %v3802, %v3804
    %v3806 = vadd.f32 %v3795, %v3796
    %v3807 = vadd.f32 %v3806, 0.0001
    %v3808 = vadd.f32 %v3798, %v3799
    %v3809 = vadd.f32 %v3808, 0.0009
    %v3810 = vmul.f32 %v3807, %v3809
    %v3811 = vrcp.pop %v3810
    %v3812 = vmul.f32 %v3805, %v3811
    %v3813 = vsel %vm1538, %v3812, 0.0
    %3814 = vadd.xlane.f32.xlu0 %v3813
    %v3815 = vpop.xlane.xlu0 %3814
    %v3816 = vrot.slane %v3815, 4
    %v3817 = vadd.f32 %v3815, %v3816
    %v3818 = vrot.slane %v3817, 2
    %v3819 = vadd.f32 %v3817, %v3818
    %v3820 = vrot.slane %v3819, 1
    %v3821 = vadd.f32 %v3819, %v3820
    %s3822 = vtos %v3821
    %s3823 = sadd.f32 %s3444, %s3822
    %3824 = vmatprep.subr.mxu0 0.0
    %3825 = vmatpush1.msra.mxu0 0.0
    %3826 = vmatprep.subr.mxu0 0.0
    %3827 = vmatpush1.msra.mxu0 0.0
    %3828 = vmatprep.subr.mxu0 0.0
    %3829 = vmatpush1.msra.mxu0 0.0
    %3830 = vmatprep.subr.mxu0 0.0
    %3831 = vmatpush1.msra.mxu0 0.0
    %3832 = vmatprep.subr.mxu0 0.0
    %3833 = vmatpush1.msra.mxu0 0.0
    %3834 = vmatprep.subr.mxu0 0.0
    %3835 = vmatpush1.msra.mxu0 0.0
    %3836 = vmatprep.subr.mxu0 0.0
    %3837 = vmatpush1.msra.mxu0 0.0
    %3838 = vmatprep.subr.mxu0 0.0
    %3839 = vmatpush1.msra.mxu0 0.0
    %3840 = vmatprep.subr.mxu0 0.0
    %3841 = vmatpush1.msra.mxu0 0.0
    %3842 = vmatprep.subr.mxu0 0.0
    %3843 = vmatpush1.msra.mxu0 0.0
    %3844 = vmatprep.subr.mxu0 0.0
    %3845 = vmatpush1.msra.mxu0 0.0
    %3846 = vmatprep.subr.mxu0 0.0
    %3847 = vmatpush1.msra.mxu0 0.0
    %3848 = vmatprep.subr.mxu0 0.0
    %3849 = vmatpush1.msra.mxu0 0.0
    %3850 = vmatprep.subr.mxu0 0.0
    %3851 = vmatpush1.msra.mxu0 0.0
    %3852 = vmatprep.subr.mxu0 0.0
    %3853 = vmatpush1.msra.mxu0 %v392
    %3854 = vmatprep.subr.mxu0 0.0
    %3855 = vmatpush1.msra.mxu0 %v387
    %3856 = vmatprep.subr.mxu0 0.0
    %3857 = vmatpush2.msra.mxu0 0.0
    %3858 = vmatprep.subr.mxu0 0.0
    %3859 = vmatpush2.msra.mxu0 0.0
    %3860 = vmatprep.subr.mxu0 0.0
    %3861 = vmatpush2.msra.mxu0 0.0
    %3862 = vmatprep.subr.mxu0 0.0
    %3863 = vmatpush2.msra.mxu0 0.0
    %3864 = vmatprep.subr.mxu0 0.0
    %3865 = vmatpush2.msra.mxu0 0.0
    %3866 = vmatprep.subr.mxu0 0.0
    %3867 = vmatpush2.msra.mxu0 0.0
    %3868 = vmatprep.subr.mxu0 0.0
    %3869 = vmatpush2.msra.mxu0 0.0
    %3870 = vmatprep.subr.mxu0 0.0
    %3871 = vmatpush2.msra.mxu0 0.0
    %3872 = vmatprep.subr.mxu0 0.0
    %3873 = vmatpush2.msra.mxu0 0.0
    %3874 = vmatprep.subr.mxu0 0.0
    %3875 = vmatpush2.msra.mxu0 0.0
    %3876 = vmatprep.subr.mxu0 0.0
    %3877 = vmatpush2.msra.mxu0 0.0
    %3878 = vmatprep.subr.mxu0 0.0
    %3879 = vmatpush2.msra.mxu0 0.0
    %3880 = vmatprep.subr.mxu0 0.0
    %3881 = vmatpush2.msra.mxu0 0.0
    %3882 = vmatprep.subr.mxu0 0.0
    %3883 = vmatpush2.msra.mxu0 0.0
    %3884 = vmatprep.subr.mxu0 0.0
    %3885 = vmatpush2.msra.mxu0 0.0
    %3886 = vmatprep.subr.mxu0 0.0
    %3887 = vmatpush2.msra.mxu0 0.0
    %3888 = vmatprep.mubr.f32.mxu0 0.0
    %3889 = vmatmul.mubr.f32.gmra.mxu0 %v1168
    %v3890 = vpop.f32.mrf.mxu0
    %v3891 = vadd.f32 0.0, %v3890
    %v3892 = vpop.f32.mrf.mxu0
    %3893 = vdwg.mxu0
    %3894 = vmatprep.subr.mxu0 0.0
    %3895 = vmatpush1.msra.mxu0 0.0
    %3896 = vmatprep.subr.mxu0 0.0
    %3897 = vmatpush1.msra.mxu0 0.0
    %3898 = vmatprep.subr.mxu0 0.0
    %3899 = vmatpush1.msra.mxu0 0.0
    %3900 = vmatprep.subr.mxu0 0.0
    %3901 = vmatpush1.msra.mxu0 0.0
    %3902 = vmatprep.subr.mxu0 0.0
    %3903 = vmatpush1.msra.mxu0 0.0
    %3904 = vmatprep.subr.mxu0 0.0
    %3905 = vmatpush1.msra.mxu0 0.0
    %3906 = vmatprep.subr.mxu0 0.0
    %3907 = vmatpush1.msra.mxu0 0.0
    %3908 = vmatprep.subr.mxu0 0.0
    %3909 = vmatpush1.msra.mxu0 0.0
    %3910 = vmatprep.subr.mxu0 0.0
    %3911 = vmatpush1.msra.mxu0 0.0
    %3912 = vmatprep.subr.mxu0 0.0
    %3913 = vmatpush1.msra.mxu0 0.0
    %3914 = vmatprep.subr.mxu0 0.0
    %3915 = vmatpush1.msra.mxu0 0.0
    %3916 = vmatprep.subr.mxu0 0.0
    %3917 = vmatpush1.msra.mxu0 0.0
    %3918 = vmatprep.subr.mxu0 0.0
    %3919 = vmatpush1.msra.mxu0 0.0
    %3920 = vmatprep.subr.mxu0 0.0
    %3921 = vmatpush1.msra.mxu0 0.0
    %3922 = vmatprep.subr.mxu0 0.0
    %3923 = vmatpush1.msra.mxu0 %v585
    %3924 = vmatprep.subr.mxu0 0.0
    %3925 = vmatpush1.msra.mxu0 %v580
    %3926 = vmatprep.subr.mxu0 0.0
    %3927 = vmatpush2.msra.mxu0 0.0
    %3928 = vmatprep.subr.mxu0 0.0
    %3929 = vmatpush2.msra.mxu0 0.0
    %3930 = vmatprep.subr.mxu0 0.0
    %3931 = vmatpush2.msra.mxu0 0.0
    %3932 = vmatprep.subr.mxu0 0.0
    %3933 = vmatpush2.msra.mxu0 0.0
    %3934 = vmatprep.subr.mxu0 0.0
    %3935 = vmatpush2.msra.mxu0 0.0
    %3936 = vmatprep.subr.mxu0 0.0
    %3937 = vmatpush2.msra.mxu0 0.0
    %3938 = vmatprep.subr.mxu0 0.0
    %3939 = vmatpush2.msra.mxu0 0.0
    %3940 = vmatprep.subr.mxu0 0.0
    %3941 = vmatpush2.msra.mxu0 0.0
    %3942 = vmatprep.subr.mxu0 0.0
    %3943 = vmatpush2.msra.mxu0 0.0
    %3944 = vmatprep.subr.mxu0 0.0
    %3945 = vmatpush2.msra.mxu0 0.0
    %3946 = vmatprep.subr.mxu0 0.0
    %3947 = vmatpush2.msra.mxu0 0.0
    %3948 = vmatprep.subr.mxu0 0.0
    %3949 = vmatpush2.msra.mxu0 0.0
    %3950 = vmatprep.subr.mxu0 0.0
    %3951 = vmatpush2.msra.mxu0 0.0
    %3952 = vmatprep.subr.mxu0 0.0
    %3953 = vmatpush2.msra.mxu0 0.0
    %3954 = vmatprep.subr.mxu0 0.0
    %3955 = vmatpush2.msra.mxu0 0.0
    %3956 = vmatprep.subr.mxu0 0.0
    %3957 = vmatpush2.msra.mxu0 0.0
    %3958 = vmatprep.mubr.f32.mxu0 0.0
    %3959 = vmatmul.mubr.f32.gmra.mxu0 %v1168
    %v3960 = vpop.f32.mrf.mxu0
    %v3961 = vadd.f32 0.0, %v3960
    %v3962 = vpop.f32.mrf.mxu0
    %3963 = vdwg.mxu0
    %3964 = vmatprep.subr.mxu0 0.0
    %3965 = vmatpush1.msra.mxu0 0.0
    %3966 = vmatprep.subr.mxu0 0.0
    %3967 = vmatpush1.msra.mxu0 0.0
    %3968 = vmatprep.subr.mxu0 0.0
    %3969 = vmatpush1.msra.mxu0 0.0
    %3970 = vmatprep.subr.mxu0 0.0
    %3971 = vmatpush1.msra.mxu0 0.0
    %3972 = vmatprep.subr.mxu0 0.0
    %3973 = vmatpush1.msra.mxu0 0.0
    %3974 = vmatprep.subr.mxu0 0.0
    %3975 = vmatpush1.msra.mxu0 0.0
    %3976 = vmatprep.subr.mxu0 0.0
    %3977 = vmatpush1.msra.mxu0 0.0
    %3978 = vmatprep.subr.mxu0 0.0
    %3979 = vmatpush1.msra.mxu0 0.0
    %3980 = vmatprep.subr.mxu0 0.0
    %3981 = vmatpush1.msra.mxu0 0.0
    %3982 = vmatprep.subr.mxu0 0.0
    %3983 = vmatpush1.msra.mxu0 0.0
    %3984 = vmatprep.subr.mxu0 0.0
    %3985 = vmatpush1.msra.mxu0 0.0
    %3986 = vmatprep.subr.mxu0 0.0
    %3987 = vmatpush1.msra.mxu0 0.0
    %3988 = vmatprep.subr.mxu0 0.0
    %3989 = vmatpush1.msra.mxu0 0.0
    %3990 = vmatprep.subr.mxu0 0.0
    %3991 = vmatpush1.msra.mxu0 0.0
    %3992 = vmatprep.subr.mxu0 0.0
    %3993 = vmatpush1.msra.mxu0 %v778
    %3994 = vmatprep.subr.mxu0 0.0
    %3995 = vmatpush1.msra.mxu0 %v773
    %3996 = vmatprep.subr.mxu0 0.0
    %3997 = vmatpush2.msra.mxu0 0.0
    %3998 = vmatprep.subr.mxu0 0.0
    %3999 = vmatpush2.msra.mxu0 0.0
    %4000 = vmatprep.subr.mxu0 0.0
    %4001 = vmatpush2.msra.mxu0 0.0
    %4002 = vmatprep.subr.mxu0 0.0
    %4003 = vmatpush2.msra.mxu0 0.0
    %4004 = vmatprep.subr.mxu0 0.0
    %4005 = vmatpush2.msra.mxu0 0.0
    %4006 = vmatprep.subr.mxu0 0.0
    %4007 = vmatpush2.msra.mxu0 0.0
    %4008 = vmatprep.subr.mxu0 0.0
    %4009 = vmatpush2.msra.mxu0 0.0
    %4010 = vmatprep.subr.mxu0 0.0
    %4011 = vmatpush2.msra.mxu0 0.0
    %4012 = vmatprep.subr.mxu0 0.0
    %4013 = vmatpush2.msra.mxu0 0.0
    %4014 = vmatprep.subr.mxu0 0.0
    %4015 = vmatpush2.msra.mxu0 0.0
    %4016 = vmatprep.subr.mxu0 0.0
    %4017 = vmatpush2.msra.mxu0 0.0
    %4018 = vmatprep.subr.mxu0 0.0
    %4019 = vmatpush2.msra.mxu0 0.0
    %4020 = vmatprep.subr.mxu0 0.0
    %4021 = vmatpush2.msra.mxu0 0.0
    %4022 = vmatprep.subr.mxu0 0.0
    %4023 = vmatpush2.msra.mxu0 0.0
    %4024 = vmatprep.subr.mxu0 0.0
    %4025 = vmatpush2.msra.mxu0 0.0
    %4026 = vmatprep.subr.mxu0 0.0
    %4027 = vmatpush2.msra.mxu0 0.0
    %4028 = vmatprep.mubr.f32.mxu0 0.0
    %4029 = vmatmul.mubr.f32.gmra.mxu0 %v1168
    %v4030 = vpop.f32.mrf.mxu0
    %v4031 = vadd.f32 0.0, %v4030
    %v4032 = vpop.f32.mrf.mxu0
    %4033 = vdwg.mxu0
    %4034 = vmatprep.subr.mxu0 0.0
    %4035 = vmatpush1.msra.mxu0 0.0
    %4036 = vmatprep.subr.mxu0 0.0
    %4037 = vmatpush1.msra.mxu0 0.0
    %4038 = vmatprep.subr.mxu0 0.0
    %4039 = vmatpush1.msra.mxu0 0.0
    %4040 = vmatprep.subr.mxu0 0.0
    %4041 = vmatpush1.msra.mxu0 0.0
    %4042 = vmatprep.subr.mxu0 0.0
    %4043 = vmatpush1.msra.mxu0 0.0
    %4044 = vmatprep.subr.mxu0 0.0
    %4045 = vmatpush1.msra.mxu0 0.0
    %4046 = vmatprep.subr.mxu0 0.0
    %4047 = vmatpush1.msra.mxu0 0.0
    %4048 = vmatprep.subr.mxu0 0.0
    %4049 = vmatpush1.msra.mxu0 0.0
    %4050 = vmatprep.subr.mxu0 0.0
    %4051 = vmatpush1.msra.mxu0 0.0
    %4052 = vmatprep.subr.mxu0 0.0
    %4053 = vmatpush1.msra.mxu0 0.0
    %4054 = vmatprep.subr.mxu0 0.0
    %4055 = vmatpush1.msra.mxu0 0.0
    %4056 = vmatprep.subr.mxu0 0.0
    %4057 = vmatpush1.msra.mxu0 0.0
    %4058 = vmatprep.subr.mxu0 0.0
    %4059 = vmatpush1.msra.mxu0 0.0
    %4060 = vmatprep.subr.mxu0 0.0
    %4061 = vmatpush1.msra.mxu0 0.0
    %4062 = vmatprep.subr.mxu0 0.0
    %4063 = vmatpush1.msra.mxu0 %v971
    %4064 = vmatprep.subr.mxu0 0.0
    %4065 = vmatpush1.msra.mxu0 %v966
    %4066 = vmatprep.subr.mxu0 0.0
    %4067 = vmatpush2.msra.mxu0 0.0
    %4068 = vmatprep.subr.mxu0 0.0
    %4069 = vmatpush2.msra.mxu0 0.0
    %4070 = vmatprep.subr.mxu0 0.0
    %4071 = vmatpush2.msra.mxu0 0.0
    %4072 = vmatprep.subr.mxu0 0.0
    %4073 = vmatpush2.msra.mxu0 0.0
    %4074 = vmatprep.subr.mxu0 0.0
    %4075 = vmatpush2.msra.mxu0 0.0
    %4076 = vmatprep.subr.mxu0 0.0
    %4077 = vmatpush2.msra.mxu0 0.0
    %4078 = vmatprep.subr.mxu0 0.0
    %4079 = vmatpush2.msra.mxu0 0.0
    %4080 = vmatprep.subr.mxu0 0.0
    %4081 = vmatpush2.msra.mxu0 0.0
    %4082 = vmatprep.subr.mxu0 0.0
    %4083 = vmatpush2.msra.mxu0 0.0
    %4084 = vmatprep.subr.mxu0 0.0
    %4085 = vmatpush2.msra.mxu0 0.0
    %4086 = vmatprep.subr.mxu0 0.0
    %4087 = vmatpush2.msra.mxu0 0.0
    %4088 = vmatprep.subr.mxu0 0.0
    %4089 = vmatpush2.msra.mxu0 0.0
    %4090 = vmatprep.subr.mxu0 0.0
    %4091 = vmatpush2.msra.mxu0 0.0
    %4092 = vmatprep.subr.mxu0 0.0
    %4093 = vmatpush2.msra.mxu0 0.0
    %4094 = vmatprep.subr.mxu0 0.0
    %4095 = vmatpush2.msra.mxu0 0.0
    %4096 = vmatprep.subr.mxu0 0.0
    %4097 = vmatpush2.msra.mxu0 0.0
    %4098 = vmatprep.mubr.f32.mxu0 0.0
    %4099 = vmatmul.mubr.f32.gmra.mxu0 %v1168
    %v4100 = vpop.f32.mrf.mxu0
    %v4101 = vadd.f32 0.0, %v4100
    %v4102 = vpop.f32.mrf.mxu0
    %4103 = vdwg.mxu0
    %4104 = vmatprep.subr.mxu0 0.0
    %4105 = vmatpush1.msra.mxu0 0.0
    %4106 = vmatprep.subr.mxu0 0.0
    %4107 = vmatpush1.msra.mxu0 0.0
    %4108 = vmatprep.subr.mxu0 0.0
    %4109 = vmatpush1.msra.mxu0 0.0
    %4110 = vmatprep.subr.mxu0 0.0
    %4111 = vmatpush1.msra.mxu0 0.0
    %4112 = vmatprep.subr.mxu0 0.0
    %4113 = vmatpush1.msra.mxu0 0.0
    %4114 = vmatprep.subr.mxu0 0.0
    %4115 = vmatpush1.msra.mxu0 0.0
    %4116 = vmatprep.subr.mxu0 0.0
    %4117 = vmatpush1.msra.mxu0 0.0
    %4118 = vmatprep.subr.mxu0 0.0
    %4119 = vmatpush1.msra.mxu0 0.0
    %4120 = vmatprep.subr.mxu0 0.0
    %4121 = vmatpush1.msra.mxu0 0.0
    %4122 = vmatprep.subr.mxu0 0.0
    %4123 = vmatpush1.msra.mxu0 0.0
    %4124 = vmatprep.subr.mxu0 0.0
    %4125 = vmatpush1.msra.mxu0 0.0
    %4126 = vmatprep.subr.mxu0 0.0
    %4127 = vmatpush1.msra.mxu0 0.0
    %4128 = vmatprep.subr.mxu0 0.0
    %4129 = vmatpush1.msra.mxu0 0.0
    %4130 = vmatprep.subr.mxu0 0.0
    %4131 = vmatpush1.msra.mxu0 0.0
    %4132 = vmatprep.subr.mxu0 0.0
    %4133 = vmatpush1.msra.mxu0 %v1164
    %4134 = vmatprep.subr.mxu0 0.0
    %4135 = vmatpush1.msra.mxu0 %v1159
    %4136 = vmatprep.subr.mxu0 0.0
    %4137 = vmatpush2.msra.mxu0 0.0
    %4138 = vmatprep.subr.mxu0 0.0
    %4139 = vmatpush2.msra.mxu0 0.0
    %4140 = vmatprep.subr.mxu0 0.0
    %4141 = vmatpush2.msra.mxu0 0.0
    %4142 = vmatprep.subr.mxu0 0.0
    %4143 = vmatpush2.msra.mxu0 0.0
    %4144 = vmatprep.subr.mxu0 0.0
    %4145 = vmatpush2.msra.mxu0 0.0
    %4146 = vmatprep.subr.mxu0 0.0
    %4147 = vmatpush2.msra.mxu0 0.0
    %4148 = vmatprep.subr.mxu0 0.0
    %4149 = vmatpush2.msra.mxu0 0.0
    %4150 = vmatprep.subr.mxu0 0.0
    %4151 = vmatpush2.msra.mxu0 0.0
    %4152 = vmatprep.subr.mxu0 0.0
    %4153 = vmatpush2.msra.mxu0 0.0
    %4154 = vmatprep.subr.mxu0 0.0
    %4155 = vmatpush2.msra.mxu0 0.0
    %4156 = vmatprep.subr.mxu0 0.0
    %4157 = vmatpush2.msra.mxu0 0.0
    %4158 = vmatprep.subr.mxu0 0.0
    %4159 = vmatpush2.msra.mxu0 0.0
    %4160 = vmatprep.subr.mxu0 0.0
    %4161 = vmatpush2.msra.mxu0 0.0
    %4162 = vmatprep.subr.mxu0 0.0
    %4163 = vmatpush2.msra.mxu0 0.0
    %4164 = vmatprep.subr.mxu0 0.0
    %4165 = vmatpush2.msra.mxu0 0.0
    %4166 = vmatprep.subr.mxu0 0.0
    %4167 = vmatpush2.msra.mxu0 0.0
    %4168 = vmatprep.mubr.f32.mxu0 0.0
    %4169 = vmatmul.mubr.f32.gmra.mxu0 %v1168
    %v4170 = vpop.f32.mrf.mxu0
    %v4171 = vadd.f32 0.0, %v4170
    %v4172 = vpop.f32.mrf.mxu0
    %4173 = vdwg.mxu0
    %v4174 = vmul.f32 %v3891, %v3891
    %v4175 = vmul.f32 %v3961, %v3961
    %v4176 = vmul.f32 %v3891, %v3961
    %v4177 = vsub.f32 %v4031, %v4174
    %v4178 = vsub.f32 %v4101, %v4175
    %v4179 = vsub.f32 %v4171, %v4176
    %v4180 = vmul.f32 %v4176, 2.0
    %v4181 = vadd.f32 %v4180, 0.0001
    %v4182 = vmul.f32 %v4179, 2.0
    %v4183 = vadd.f32 %v4182, 0.0009
    %v4184 = vmul.f32 %v4181, %v4183
    %v4185 = vadd.f32 %v4174, %v4175
    %v4186 = vadd.f32 %v4185, 0.0001
    %v4187 = vadd.f32 %v4177, %v4178
    %v4188 = vadd.f32 %v4187, 0.0009
    %v4189 = vmul.f32 %v4186, %v4188
    %v4190 = vrcp.pop %v4189
    %v4191 = vmul.f32 %v4184, %v4190
    %v4192 = vsel %vm1538, %v4191, 0.0
    %4193 = vadd.xlane.f32.xlu0 %v4192
    %v4194 = vpop.xlane.xlu0 %4193
    %v4195 = vrot.slane %v4194, 4
    %v4196 = vadd.f32 %v4194, %v4195
    %v4197 = vrot.slane %v4196, 2
    %v4198 = vadd.f32 %v4196, %v4197
    %v4199 = vrot.slane %v4198, 1
    %v4200 = vadd.f32 %v4198, %v4199
    %s4201 = vtos %v4200
    %s4202 = sadd.f32 %s3823, %s4201
    %s4203 = scalar_lea.smem [#allocation7], 0
    %4204 = sst [smem:[%s4203]] %s4202
    %s4205 = scalar_lea.smem [#allocation7], 1
    %4206 = sst [smem:[%s4205]] %s150
    // Predicated region
    $region26: #{tpu_custom_call.1} parent=1 // pred_check
      _
    $region27: #{tpu_custom_call.1} parent=1 // pred_check_branch
      %4208 = sbr.rel (0) target = $region29
    $region28: #{tpu_custom_call.1} parent=1 // pred_region
      %s4210 = ssub.s32 16, 16
      %4211 = vsyncadd [#allocation4], %s4210
      %4214 = dma.smem_to_hbm [#allocation7], 16, %s4, [#allocation4]
    $region29: #{tpu_custom_call.1} parent=1 // pred_fallthru
      _
    // Predicated region
    $region30: #{tpu_custom_call.1} parent=1 // pred_check
      _
    $region31: #{tpu_custom_call.1} parent=1 // pred_check_branch
      %4216 = sbr.rel (0) target = $region33
    $region32: #{tpu_custom_call.1} parent=1 // pred_region
      %4217 = dma.done [#allocation4], 16
    $region33: #{tpu_custom_call.1} parent=1 // pred_fallthru
      _
    %4218 = sfence
    %4219 = vsyncpa [#allocation3], 1
    %4220 = vsyncpa [#allocation6], 1
    %4221 = vsyncpa [#allocation4], 1

</llo_original>
